<compile_context>
chip_gen: v5e
topology: v5e:2x2
jax: 0.10.0
libtpu: 0.0.40
codegen_flags: <defaults>
</compile_context>

<pallas_src>
import functools

import jax
import jax.numpy as jnp
from jax import lax
from jax.experimental import pallas as pl
from jax.experimental.pallas import tpu as pltpu


def _round_up(v, m):
    return (v + m - 1) // m * m


_BAND_TARGET_ROWS = 512   # ~512-row bands: good HBM-roofline fraction, VMEM-safe on v7x


# --------------------------------------------------------------------------
# Pallas kernel: lane-pack the k*k conv taps (+ bias column) into one bf16
# matmul, then do the ConvLSTM gate math in f32.
#   z_ref : (1, 1, zb_rows, cz)   bf16 [x|h] band incl. halo, rows R = Y*wp + X
#   c_ref : (1, band_rows, hcq)   f32 previous cell state band
#   w_ref : (kp, 4*hcq)           bf16 fused [taps | bias | zero-pad] weights
# outputs:
#   h_out_ref, c_out_ref : (1, band_rows, hcq) f32
# Rows with (r % wp) >= W (and the hgt_p > H pad rows) are garbage and are
# discarded by the wrapper.
# --------------------------------------------------------------------------
def _convlstm_kernel(z_ref, c_ref, w_ref, h_out_ref, c_out_ref,
                     *, k, wp, band_rows, cz, hcq, kp):
    kkcz = k * k * cz

    # Upcast the bf16 activation band once (32-bit rows slice cleanly at any
    # sublane offset), lane-pack the k*k tap slices plus a ones column (bias
    # folded into the matmul), pad K to a lane-aligned kp, and cast to bf16
    # for a single MXU matmul with f32 accumulation.
    zf = z_ref[0, 0].astype(jnp.float32)                      # (zb_rows, cz)
    parts = []
    for dy in range(k):
        for dx in range(k):
            off = dy * wp + dx                                # static offset
            parts.append(zf[off:off + band_rows, :])
    parts.append(jnp.ones((band_rows, 1), jnp.float32))       # bias column
    if kp > kkcz + 1:
        parts.append(jnp.zeros((band_rows, kp - kkcz - 1), jnp.float32))
    lhs = jnp.concatenate(parts, axis=-1).astype(jnp.bfloat16)

    gates = jnp.dot(lhs, w_ref[...], preferred_element_type=jnp.float32)

    # Gate slices at multiples of hcq (hcq is a multiple of 32; 4*hcq of 128).
    i_t = jax.nn.sigmoid(gates[:, 0 * hcq:1 * hcq])
    f_t = jax.nn.sigmoid(gates[:, 1 * hcq:2 * hcq])
    g_t = jnp.tanh(gates[:, 2 * hcq:3 * hcq])
    o_t = jax.nn.sigmoid(gates[:, 3 * hcq:4 * hcq])

    c_prev = c_ref[0]
    c_t = f_t * c_prev + i_t * g_t
    h_t = o_t * jnp.tanh(c_t)

    h_out_ref[0] = h_t.astype(h_out_ref.dtype)
    c_out_ref[0] = c_t.astype(c_out_ref.dtype)


# --------------------------------------------------------------------------
# Weight fusion: stack [x;h] input channels, [i|f|g|o] gates (each padded to
# hcq output columns), flatten the k*k taps along the contraction dim, append
# the bias row and zero-pad K to kp.  Done once per call; in a recurrent loop
# hoist it out of the time loop.
# --------------------------------------------------------------------------
def _fuse_gate_weights(params, k, cin, hc, hcq, kp):
    cz = cin + hc
    gate_w, gate_b = [], []
    for gx, gh, gb in (("Wxi", "Whi", "bxi"), ("Wxf", "Whf", "bxf"),
                       ("Wxc", "Whc", "bxc"), ("Wxo", "Who", "bxo")):
        wx = jnp.transpose(params[gx], (2, 3, 1, 0))          # (k,k,cin,hc)
        wh = jnp.transpose(params[gh], (2, 3, 1, 0))          # (k,k,hc, hc)
        wg = jnp.concatenate([wx, wh], axis=2)                # (k,k,cz, hc)
        gate_w.append(jnp.pad(wg, ((0, 0), (0, 0), (0, 0), (0, hcq - hc))))
        gate_b.append(jnp.pad(params[gb], (0, hcq - hc)))
    w = jnp.concatenate(gate_w, axis=3).reshape(k * k * cz, 4 * hcq)
    b = jnp.concatenate(gate_b, axis=0).reshape(1, 4 * hcq)
    pad = jnp.zeros((kp - k * k * cz - 1, 4 * hcq), w.dtype)
    return jnp.concatenate([w, b, pad], axis=0).astype(jnp.bfloat16)


# --------------------------------------------------------------------------
# Wrapper: NCHW interface (PyTorch parity), banded flattened-rows internally.
# --------------------------------------------------------------------------
@functools.partial(jax.jit, static_argnames=("kernel_size",))
def conv_lstm_cell_forward(x_nchw, h_nchw, c_nchw, params, kernel_size):
    k = kernel_size
    p = (k - 1) // 2
    n, cin, hgt, wid = x_nchw.shape
    hc = h_nchw.shape[1]
    cz = cin + hc

    hcq = _round_up(hc, 32)                 # 4*hcq is a multiple of 128
    wp = _round_up(wid + 2 * p, 8)          # sublane-aligned padded width
    bh = max(1, min(hgt, _BAND_TARGET_ROWS // wp))   # image rows per band
    num_bands = -(-hgt // bh)
    hgt_p = num_bands * bh
    band_rows = bh * wp                     # rows per grid step (multiple of 8)
    mr = hgt_p * wp
    kp = _round_up(k * k * cz + 1, 128)     # packed contraction depth (+bias)
    zb_rows = band_rows + (k - 1) * wp + (k - 1)   # band rows incl. tap halo

    # NCHW -> NHWC at the interface boundary only.
    x = jnp.transpose(x_nchw, (0, 2, 3, 1))
    h = jnp.transpose(h_nchw, (0, 2, 3, 1))
    c = jnp.transpose(c_nchw, (0, 2, 3, 1))

    # Fused [x|h] activation, spatially padded, bf16, flattened to rows Y*wp+X.
    z = jnp.concatenate([x, h], axis=-1)                              # (n,H,W,cz)
    z = jnp.pad(z, ((0, 0), (p, p + hgt_p - hgt), (p, wp - wid - p), (0, 0)))
    z = z.astype(jnp.bfloat16).reshape(n, (hgt_p + k - 1) * wp, cz)
    z = jnp.pad(z, ((0, 0), (0, k - 1), (0, 0)))                      # tap tail halo

    # Per-band z slabs carrying their own halo rows -> plain Blocked BlockSpecs
    # (NOT an im2col: duplication is only the (k-1)-row halo per band).
    z_bands = jnp.stack(
        [lax.slice_in_dim(z, bi * band_rows, bi * band_rows + zb_rows, axis=1)
         for bi in range(num_bands)], axis=1)              # (n, nb, zb_rows, cz)

    # Previous cell state in the same row layout, channel-padded to hcq (f32).
    c_rows = jnp.pad(c, ((0, 0), (0, hgt_p - hgt), (0, wp - wid), (0, hcq - hc)))
    c_rows = c_rows.reshape(n, mr, hcq)

    w = _fuse_gate_weights(params, k, cin, hc, hcq, kp)     # (kp, 4*hcq) bf16

    # Footprint-derived VMEM limit (don't hand v7x a flat 48 MiB).
    vmem_bytes = (2 * zb_rows * cz * 2                 # z band, 2 bufs, bf16
                  + 2 * band_rows * hcq * 4            # c band, 2 bufs
                  + 4 * band_rows * hcq * 4            # h/c outs, 2 bufs each
                  + kp * 4 * hcq * 2                   # weights, single buffer
                  + band_rows * kp * 6                 # packed LHS f32 + bf16
                  + band_rows * 4 * hcq * 4            # gates (f32)
                  + 8 * band_rows * hcq * 4)           # elementwise temporaries
    vmem_limit = int(min(max(2 * vmem_bytes, 16 << 20), 64 << 20))

    flops = 2 * n * num_bands * band_rows * kp * 4 * hcq
    transcendentals = 5 * n * mr * hcq
    bytes_accessed = (z_bands.size * 2 + w.size * 2
                      + (c_rows.size + 2 * n * mr * hcq) * 4)

    kernel = functools.partial(_convlstm_kernel, k=k, wp=wp,
                               band_rows=band_rows, cz=cz, hcq=hcq, kp=kp)

    h_rows, c_out_rows = pl.pallas_call(
        kernel,
        out_shape=(
            jax.ShapeDtypeStruct((n, mr, hcq), jnp.float32),
            jax.ShapeDtypeStruct((n, mr, hcq), jnp.float32),
        ),
        grid_spec=pltpu.PrefetchScalarGridSpec(
            num_scalar_prefetch=0,
            grid=(n, num_bands),
            in_specs=[
                pl.BlockSpec((1, 1, zb_rows, cz), lambda b, r: (b, r, 0, 0)),
                pl.BlockSpec((1, band_rows, hcq), lambda b, r: (b, r, 0)),
                # Constant across grid steps -> single-buffered (v7x VMEM).
                pl.BlockSpec((kp, 4 * hcq), lambda b, r: (0, 0),
                             pipeline_mode=pl.Buffered(buffer_count=1)),
            ],
            out_specs=[
                pl.BlockSpec((1, band_rows, hcq), lambda b, r: (b, r, 0)),
                pl.BlockSpec((1, band_rows, hcq), lambda b, r: (b, r, 0)),
            ],
        ),
        compiler_params=pltpu.CompilerParams(
            dimension_semantics=("parallel", "parallel"),
            vmem_limit_bytes=vmem_limit),
        cost_estimate=pl.CostEstimate(
            flops=flops,
            transcendentals=transcendentals,
            bytes_accessed=bytes_accessed),
    )(z_bands, c_rows, w)

    def unflatten(rows):
        a = rows.reshape(n, hgt_p, wp, hcq)[:, :hgt, :wid, :hc]
        return jnp.transpose(a, (0, 3, 1, 2)).astype(x_nchw.dtype)   # NCHW

    return unflatten(h_rows), unflatten(c_out_rows)


# --------------------------------------------------------------------------
# Pure-JAX reference (lax.conv, NCHW, f32) for the correctness check.
# --------------------------------------------------------------------------
def _conv_nchw(x, w, pad):
    return lax.conv_general_dilated(
        x, w, window_strides=(1, 1), padding=[(pad, pad), (pad, pad)],
        dimension_numbers=("NCHW", "OIHW", "NCHW"))


def _reference_forward(x, h, c, params, kernel_size):
    pad = (kernel_size - 1) // 2
    def cx(nm, bnm):
        return _conv_nchw(x, params[nm], pad) + params[bnm][None, :, None, None]
    def ch(nm):
        return _conv_nchw(h, params[nm], pad)
    i_t = jax.nn.sigmoid(cx("Wxi", "bxi") + ch("Whi"))
    f_t = jax.nn.sigmoid(cx("Wxf", "bxf") + ch("Whf"))
    c_t = f_t * c + i_t * jnp.tanh(cx("Wxc", "bxc") + ch("Whc"))
    o_t = jax.nn.sigmoid(cx("Wxo", "bxo") + ch("Who"))
    h_t = o_t * jnp.tanh(c_t)
    return h_t, c_t


# --------------------------------------------------------------------------
def _init_params(key, input_channels, hidden_channels, kernel_size, scale=0.1):
    k = kernel_size
    names_x = ("Wxi", "Wxf", "Wxc", "Wxo")
    names_h = ("Whi", "Whf", "Whc", "Who")
    names_b = ("bxi", "bxf", "bxc", "bxo")
    keys = jax.random.split(key, 12)
    params = {}
    for idx, nm in enumerate(names_x):
        params[nm] = scale * jax.random.normal(
            keys[idx], (hidden_channels, input_channels, k, k), jnp.float32)
    for idx, nm in enumerate(names_h):
        params[nm] = scale * jax.random.normal(
            keys[4 + idx], (hidden_channels, hidden_channels, k, k), jnp.float32)
    for idx, nm in enumerate(names_b):
        params[nm] = scale * jax.random.normal(
            keys[8 + idx], (hidden_channels,), jnp.float32)
    return params


def _check(batch, cin, hc, spatial, ksize, seed, scale):
    key = jax.random.PRNGKey(seed)
    kparam, kx, kh, kc = jax.random.split(key, 4)
    params = _init_params(kparam, cin, hc, ksize, scale)
    x = jax.random.normal(kx, (batch, cin, spatial, spatial), jnp.float32)
    h = jax.random.normal(kh, (batch, hc, spatial, spatial), jnp.float32)
    c = jax.random.normal(kc, (batch, hc, spatial, spatial), jnp.float32)

    h_t, c_t = conv_lstm_cell_forward(x, h, c, params, ksize)
    jax.block_until_ready((h_t, c_t))

    h_ref, c_ref = _reference_forward(x, h, c, params, ksize)
    # bf16 MXU operands -> loosened tolerance vs the f32 reference.
    assert jnp.allclose(h_t, h_ref, atol=5e-2, rtol=5e-2), "h_t mismatch"
    assert jnp.allclose(c_t, c_ref, atol=5e-2, rtol=5e-2), "c_t mismatch"


if __name__ == "__main__":
    # Small case (single band, batch-parallel): batch=2, cin=4, hc=8, 16x16, k=3.
    _check(batch=2, cin=4, hc=8, spatial=16, ksize=3, seed=0, scale=0.1)
    # Multi-band case (exercises row-band tiling, wp/row padding, batch=1, k=5).
    _check(batch=1, cin=3, hc=32, spatial=33, ksize=5, seed=1, scale=0.05)
    print("KERNEL_OK")
</pallas_src>

<mosaic_0001>
module attributes {stable_mosaic.version = 11 : i64} {
  func.func @_convlstm_kernel(%arg0: i32, %arg1: i32, %arg2: memref<1x1x434x12xbf16, #tpu.memory_space<vmem>>, %arg3: memref<1x384x32xf32, #tpu.memory_space<vmem>>, %arg4: memref<128x128xbf16, #tpu.memory_space<vmem>>, %arg5: memref<1x384x32xf32, #tpu.memory_space<vmem>>, %arg6: memref<1x384x32xf32, #tpu.memory_space<vmem>>) attributes {dimension_semantics = [#tpu.dimension_semantics<parallel>, #tpu.dimension_semantics<parallel>], iteration_bounds = array<i64: 2, 1>, scalar_prefetch = 0 : i64, scratch_operands = 0 : i64, tpu.core_type = #tpu.core_type<tc>, window_params = [{transform_indices = @transform_0, window_bounds = array<i64: 1, 1, 434, 12>}, {transform_indices = @transform_1, window_bounds = array<i64: 1, 384, 32>}, {pipeline_mode = #tpu.pipeline_mode<synchronous>, transform_indices = @transform_2, window_bounds = array<i64: 128, 128>}, {transform_indices = @transform_3, window_bounds = array<i64: 1, 384, 32>}, {transform_indices = @transform_4, window_bounds = array<i64: 1, 384, 32>}]} {
    %c0 = arith.constant 0 : index
    %c0_0 = arith.constant 0 : index
    %c0_1 = arith.constant 0 : index
    %c0_2 = arith.constant 0 : index
    %0 = vector.load %arg2[%c0, %c0_0, %c0_1, %c0_2] : memref<1x1x434x12xbf16, #tpu.memory_space<vmem>>, vector<1x1x434x12xbf16>
    %1 = vector.shape_cast %0 : vector<1x1x434x12xbf16> to vector<434x12xbf16>
    %2 = arith.extf %1 : vector<434x12xbf16> to vector<434x12xf32>
    %3 = vector.extract_strided_slice %2 {offsets = [0, 0], sizes = [384, 12], strides = [1, 1]} : vector<434x12xf32> to vector<384x12xf32>
    %4 = vector.extract_strided_slice %2 {offsets = [1, 0], sizes = [384, 12], strides = [1, 1]} : vector<434x12xf32> to vector<384x12xf32>
    %5 = vector.extract_strided_slice %2 {offsets = [2, 0], sizes = [384, 12], strides = [1, 1]} : vector<434x12xf32> to vector<384x12xf32>
    %6 = vector.extract_strided_slice %2 {offsets = [24, 0], sizes = [384, 12], strides = [1, 1]} : vector<434x12xf32> to vector<384x12xf32>
    %7 = vector.extract_strided_slice %2 {offsets = [25, 0], sizes = [384, 12], strides = [1, 1]} : vector<434x12xf32> to vector<384x12xf32>
    %8 = vector.extract_strided_slice %2 {offsets = [26, 0], sizes = [384, 12], strides = [1, 1]} : vector<434x12xf32> to vector<384x12xf32>
    %9 = vector.extract_strided_slice %2 {offsets = [48, 0], sizes = [384, 12], strides = [1, 1]} : vector<434x12xf32> to vector<384x12xf32>
    %10 = vector.extract_strided_slice %2 {offsets = [49, 0], sizes = [384, 12], strides = [1, 1]} : vector<434x12xf32> to vector<384x12xf32>
    %11 = vector.extract_strided_slice %2 {offsets = [50, 0], sizes = [384, 12], strides = [1, 1]} : vector<434x12xf32> to vector<384x12xf32>
    %cst = arith.constant 1.000000e+00 : f32
    %12 = vector.broadcast %cst : f32 to vector<384x1xf32>
    %cst_3 = arith.constant 0.000000e+00 : f32
    %13 = vector.broadcast %cst_3 : f32 to vector<384x19xf32>
    %14 = tpu.concatenate %3, %4, %5, %6, %7, %8, %9, %10, %11, %12, %13 in 1 : vector<384x12xf32>, vector<384x12xf32>, vector<384x12xf32>, vector<384x12xf32>, vector<384x12xf32>, vector<384x12xf32>, vector<384x12xf32>, vector<384x12xf32>, vector<384x12xf32>, vector<384x1xf32>, vector<384x19xf32> -> vector<384x128xf32>
    %15 = arith.truncf %14 : vector<384x128xf32> to vector<384x128xbf16>
    %c0_4 = arith.constant 0 : index
    %c0_5 = arith.constant 0 : index
    %16 = vector.load %arg4[%c0_4, %c0_5] : memref<128x128xbf16, #tpu.memory_space<vmem>>, vector<128x128xbf16>
    %cst_6 = arith.constant dense<0.000000e+00> : vector<384x128xf32>
    %17 = tpu.matmul %15, %16, %cst_6 {dimension_numbers = #tpu.dot_dimension_numbers<[1], [0], [0], [1], [0, 0, 1, 1], [], []>} : vector<384x128xbf16>, vector<128x128xbf16>, vector<384x128xf32> -> vector<384x128xf32>
    %18 = vector.extract_strided_slice %17 {offsets = [0, 0], sizes = [384, 32], strides = [1, 1]} : vector<384x128xf32> to vector<384x32xf32>
    %19 = arith.negf %18 : vector<384x32xf32>
    %20 = math.exp %19 : vector<384x32xf32>
    %cst_7 = arith.constant 1.000000e+00 : f32
    %21 = vector.broadcast %cst_7 : f32 to vector<384x32xf32>
    %22 = arith.addf %21, %20 : vector<384x32xf32>
    %23 = arith.divf %21, %22 : vector<384x32xf32>
    %24 = vector.extract_strided_slice %17 {offsets = [0, 32], sizes = [384, 32], strides = [1, 1]} : vector<384x128xf32> to vector<384x32xf32>
    %25 = arith.negf %24 : vector<384x32xf32>
    %26 = math.exp %25 : vector<384x32xf32>
    %cst_8 = arith.constant 1.000000e+00 : f32
    %27 = vector.broadcast %cst_8 : f32 to vector<384x32xf32>
    %28 = arith.addf %27, %26 : vector<384x32xf32>
    %29 = arith.divf %27, %28 : vector<384x32xf32>
    %30 = vector.extract_strided_slice %17 {offsets = [0, 64], sizes = [384, 32], strides = [1, 1]} : vector<384x128xf32> to vector<384x32xf32>
    %31 = math.tanh %30 : vector<384x32xf32>
    %32 = vector.extract_strided_slice %17 {offsets = [0, 96], sizes = [384, 32], strides = [1, 1]} : vector<384x128xf32> to vector<384x32xf32>
    %33 = arith.negf %32 : vector<384x32xf32>
    %34 = math.exp %33 : vector<384x32xf32>
    %cst_9 = arith.constant 1.000000e+00 : f32
    %35 = vector.broadcast %cst_9 : f32 to vector<384x32xf32>
    %36 = arith.addf %35, %34 : vector<384x32xf32>
    %37 = arith.divf %35, %36 : vector<384x32xf32>
    %c0_10 = arith.constant 0 : index
    %c0_11 = arith.constant 0 : index
    %c0_12 = arith.constant 0 : index
    %38 = vector.load %arg3[%c0_10, %c0_11, %c0_12] : memref<1x384x32xf32, #tpu.memory_space<vmem>>, vector<1x384x32xf32>
    %39 = vector.shape_cast %38 : vector<1x384x32xf32> to vector<384x32xf32>
    %40 = arith.mulf %29, %39 : vector<384x32xf32>
    %41 = arith.mulf %23, %31 : vector<384x32xf32>
    %42 = arith.addf %40, %41 : vector<384x32xf32>
    %43 = math.tanh %42 : vector<384x32xf32>
    %44 = arith.mulf %37, %43 : vector<384x32xf32>
    %c0_13 = arith.constant 0 : index
    %c0_14 = arith.constant 0 : index
    %c0_15 = arith.constant 0 : index
    %45 = vector.load %arg5[%c0_13, %c0_14, %c0_15] : memref<1x384x32xf32, #tpu.memory_space<vmem>>, vector<1x384x32xf32>
    %46 = vector.shape_cast %45 : vector<1x384x32xf32> to vector<384x32xf32>
    %47 = vector.shape_cast %44 : vector<384x32xf32> to vector<1x384x32xf32>
    tpu.vector_store %arg5[%c0_13, %c0_14, %c0_15], %47 {strides = array<i32>} : memref<1x384x32xf32, #tpu.memory_space<vmem>>, vector<1x384x32xf32>,
    %c0_16 = arith.constant 0 : index
    %c0_17 = arith.constant 0 : index
    %c0_18 = arith.constant 0 : index
    %48 = vector.load %arg6[%c0_16, %c0_17, %c0_18] : memref<1x384x32xf32, #tpu.memory_space<vmem>>, vector<1x384x32xf32>
    %49 = vector.shape_cast %48 : vector<1x384x32xf32> to vector<384x32xf32>
    %50 = vector.shape_cast %42 : vector<384x32xf32> to vector<1x384x32xf32>
    tpu.vector_store %arg6[%c0_16, %c0_17, %c0_18], %50 {strides = array<i32>} : memref<1x384x32xf32, #tpu.memory_space<vmem>>, vector<1x384x32xf32>,
    return
  }
  func.func @transform_0(%arg0: i32, %arg1: i32) -> (i32, i32, i32, i32) {
    %c0_i32 = arith.constant 0 : i32
    %c0_i32_0 = arith.constant 0 : i32
    %c0_i32_1 = arith.constant 0 : i32
    return %arg0, %arg1, %c0_i32, %c0_i32_0 : i32, i32, i32, i32
  }
  func.func @transform_1(%arg0: i32, %arg1: i32) -> (i32, i32, i32) {
    %c0_i32 = arith.constant 0 : i32
    %c0_i32_0 = arith.constant 0 : i32
    return %arg0, %arg1, %c0_i32 : i32, i32, i32
  }
  func.func @transform_2(%arg0: i32, %arg1: i32) -> (i32, i32) {
    %c0_i32 = arith.constant 0 : i32
    %c0_i32_0 = arith.constant 0 : i32
    %c0_i32_1 = arith.constant 0 : i32
    return %c0_i32, %c0_i32_0 : i32, i32
  }
  func.func @transform_3(%arg0: i32, %arg1: i32) -> (i32, i32, i32) {
    %c0_i32 = arith.constant 0 : i32
    %c0_i32_0 = arith.constant 0 : i32
    return %arg0, %arg1, %c0_i32 : i32, i32, i32
  }
  func.func @transform_4(%arg0: i32, %arg1: i32) -> (i32, i32, i32) {
    %c0_i32 = arith.constant 0 : i32
    %c0_i32_0 = arith.constant 0 : i32
    return %arg0, %arg1, %c0_i32 : i32, i32, i32
  }
}

</mosaic_0001>

<llo_original>
// kernel: conv_lstm_cell_forward.1
$region0: #{conv_lstm_cell_forward.1}
  #allocation0 [shape = 'u32[]', space=smem, size = 0x4, offset = 0x4, fixed_abs, tag = 'smem constant byte address 0x4 - core index']
  #allocation1 [shape = 'u32[72,128]{1,0:T(1,128)}', space=vmem, size = 0x9000, scoped, tag = 'internal scratch']
  %s0 = inlined_call_operand.vmem [shape: bf16[2,1,434,12], index: 0, kind: input, shape index: {}]
  %s1 = inlined_call_operand.vmem [shape: f32[2,384,32], index: 1, kind: input, shape index: {}]
  %s2 = inlined_call_operand.vmem [shape: bf16[128,128], index: 2, kind: input, shape index: {}]
  %s3 = inlined_call_operand.vmem [shape: f32[2,384,32], index: 3, kind: output, shape index: {0}]
  %s4 = inlined_call_operand.vmem [shape: f32[2,384,32], index: 4, kind: output, shape index: {1}]
  %5 = xla_tuple %s3, %s4
  %s6 = sld [smem:[#allocation0]]
  $region53: #{conv_lstm_cell_forward.1} parent=0
    _
  %s8 = ssub.s32 1, %s6
  %s9 = scalar_select 0, %s8, %s6
  loop: start=0, step=1, limit=4
  $region2: #{conv_lstm_cell_forward.1} parent=0 // loop_pre_header
    _
  $region3: #{conv_lstm_cell_forward.1} parent=0 // loop_header
    %s11 = sphi 0, %s15
    %p12 = scmp.ge.s32.totalorder %s11, 4
    %s18 = sphi 0, %s30
    %s19 = sphi 0, %s26
    %s20 = sphi 0, %s18
    %s21 = sphi 0, %s19
    %s22 = sphi 0, %s20
    %s23 = sphi 0, %s21
    %s35 = sphi 0, %s37
    %s38 = sphi 0, %s35
    %s39 = sphi 0, %s38
    %s55 = sphi 0, %s39
    %s63 = sphi 0, %s65
    %s66 = sphi 0, %s63
    %s67 = sphi 0, %s66
    %s83 = sphi 0, %s67
    %s87 = sphi 0, %s87
    %s89 = sphi 0, %s87
    %s90 = sphi 0, %s89
    %s104 = sphi 0, %s90
    %s112 = sphi 0, %s114
    %s115 = sphi 0, %s112
    %s116 = sphi 0, %s115
    %s132 = sphi 0, %s116
    %s140 = sphi 0, %s142
    %s143 = sphi 0, %s140
    %s144 = sphi 0, %s143
    %s160 = sphi 0, %s144
  $region4: #{conv_lstm_cell_forward.1} parent=0 // loop_header_branch
    %14 = sbr.rel (%p12) target = $region8
  $region5: #{conv_lstm_cell_forward.1} parent=0 // loop_body
    %s16 = ssub.s32 %s11, 1
    %s17 = ssub.s32 %s11, 2
    %s24 = sadd.s32 1, %s19
    %p25 = scmp.ge.s32.totalorder %s24, 1
    %s26 = scalar_select %p25, 0, %s24
    %s27 = sadd.s32 1, %s18
    %s28 = scalar_select %p25, %s27, %s18
    %p29 = scmp.ge.s32.totalorder %s28, 2
    %s30 = scalar_select %p29, 0, %s28
    %s31 = ssub.s32 %s18, %s30
    %s32 = ssub.s32 %s19, %s26
    %s33 = sor.u32 %s31, %s32
    %p34 = scmp.eq.s32.totalorder %s33, 0
    %s36 = sadd.s32 %s35, 1
    %s37 = scalar_select %p34, %s35, %s36
    %p40 = pneg %p34
    %p41 = scmp.eq.s32.totalorder %s11, 1
    %p42 = por %p40, %p41
    %p43 = scmp.ne.s32.totalorder %s35, %s38
    %p44 = scmp.eq.s32.totalorder %s11, 0
    %p45 = por %p43, %p44
    %p46 = scmp.ne.s32.totalorder %s35, %s38
    %p47 = scmp.eq.s32.totalorder %s16, 1
    %p48 = por %p46, %p47
    %p49 = scmp.ne.s32.totalorder %s38, %s39
    %p50 = scmp.eq.s32.totalorder %s16, 0
    %p51 = por %p49, %p50
    %p52 = scmp.ne.s32.totalorder %s38, %s39
    %p53 = scmp.eq.s32.totalorder %s17, 1
    %p54 = por %p52, %p53
    %p56 = scmp.ne.s32.totalorder %s39, %s55
    %p57 = scmp.eq.s32.totalorder %s17, 0
    %p58 = por %p56, %p57
    %s59 = ssub.s32 %s18, %s30
    %s60 = ssub.s32 %s19, %s26
    %s61 = sor.u32 %s59, %s60
    %p62 = scmp.eq.s32.totalorder %s61, 0
    %s64 = sadd.s32 %s63, 1
    %s65 = scalar_select %p62, %s63, %s64
    %p68 = pneg %p62
    %p69 = scmp.eq.s32.totalorder %s11, 1
    %p70 = por %p68, %p69
    %p71 = scmp.ne.s32.totalorder %s63, %s66
    %p72 = scmp.eq.s32.totalorder %s11, 0
    %p73 = por %p71, %p72
    %p74 = scmp.ne.s32.totalorder %s63, %s66
    %p75 = scmp.eq.s32.totalorder %s16, 1
    %p76 = por %p74, %p75
    %p77 = scmp.ne.s32.totalorder %s66, %s67
    %p78 = scmp.eq.s32.totalorder %s16, 0
    %p79 = por %p77, %p78
    %p80 = scmp.ne.s32.totalorder %s66, %s67
    %p81 = scmp.eq.s32.totalorder %s17, 1
    %p82 = por %p80, %p81
    %p84 = scmp.ne.s32.totalorder %s67, %s83
    %p85 = scmp.eq.s32.totalorder %s17, 0
    %p86 = por %p84, %p85
    %s88 = sadd.s32 %s87, 1
    %p91 = scmp.eq.s32.totalorder %s11, 1
    %p92 = scmp.ne.s32.totalorder %s87, %s89
    %p93 = scmp.eq.s32.totalorder %s11, 0
    %p94 = por %p92, %p93
    %p95 = scmp.ne.s32.totalorder %s87, %s89
    %p96 = scmp.eq.s32.totalorder %s16, 1
    %p97 = por %p95, %p96
    %p98 = scmp.ne.s32.totalorder %s89, %s90
    %p99 = scmp.eq.s32.totalorder %s16, 0
    %p100 = por %p98, %p99
    %p101 = scmp.ne.s32.totalorder %s89, %s90
    %p102 = scmp.eq.s32.totalorder %s17, 1
    %p103 = por %p101, %p102
    %p105 = scmp.ne.s32.totalorder %s90, %s104
    %p106 = scmp.eq.s32.totalorder %s17, 0
    %p107 = por %p105, %p106
    %s108 = ssub.s32 %s18, %s30
    %s109 = ssub.s32 %s19, %s26
    %s110 = sor.u32 %s108, %s109
    %p111 = scmp.eq.s32.totalorder %s110, 0
    %s113 = sadd.s32 %s112, 1
    %s114 = scalar_select %p111, %s112, %s113
    %p117 = pneg %p111
    %p118 = scmp.eq.s32.totalorder %s11, 1
    %p119 = por %p117, %p118
    %p120 = scmp.ne.s32.totalorder %s112, %s115
    %p121 = scmp.eq.s32.totalorder %s11, 0
    %p122 = por %p120, %p121
    %p123 = scmp.ne.s32.totalorder %s112, %s115
    %p124 = scmp.eq.s32.totalorder %s16, 1
    %p125 = por %p123, %p124
    %p126 = scmp.ne.s32.totalorder %s115, %s116
    %p127 = scmp.eq.s32.totalorder %s16, 0
    %p128 = por %p126, %p127
    %p129 = scmp.ne.s32.totalorder %s115, %s116
    %p130 = scmp.eq.s32.totalorder %s17, 1
    %p131 = por %p129, %p130
    %p133 = scmp.ne.s32.totalorder %s116, %s132
    %p134 = scmp.eq.s32.totalorder %s17, 0
    %p135 = por %p133, %p134
    %s136 = ssub.s32 %s18, %s30
    %s137 = ssub.s32 %s19, %s26
    %s138 = sor.u32 %s136, %s137
    %p139 = scmp.eq.s32.totalorder %s138, 0
    %s141 = sadd.s32 %s140, 1
    %s142 = scalar_select %p139, %s140, %s141
    %p145 = pneg %p139
    %p146 = scmp.eq.s32.totalorder %s11, 1
    %p147 = por %p145, %p146
    %p148 = scmp.ne.s32.totalorder %s140, %s143
    %p149 = scmp.eq.s32.totalorder %s11, 0
    %p150 = por %p148, %p149
    %p151 = scmp.ne.s32.totalorder %s140, %s143
    %p152 = scmp.eq.s32.totalorder %s16, 1
    %p153 = por %p151, %p152
    %p154 = scmp.ne.s32.totalorder %s143, %s144
    %p155 = scmp.eq.s32.totalorder %s16, 0
    %p156 = por %p154, %p155
    %p157 = scmp.ne.s32.totalorder %s143, %s144
    %p158 = scmp.eq.s32.totalorder %s17, 1
    %p159 = por %p157, %p158
    %p161 = scmp.ne.s32.totalorder %s144, %s160
    %p162 = scmp.eq.s32.totalorder %s17, 0
    %p163 = por %p161, %p162
    %p164 = scmp.le.s32.totalorder 1, %s11
    %p165 = scmp.lt.s32.totalorder %s11, 3
    %p166 = pnand %p164, %p165
    %p167 = pneg %p166
    // Predicated region
    $region9: #{conv_lstm_cell_forward.1} parent=5 // pred_check
      _
    $region10: #{conv_lstm_cell_forward.1} parent=5 // pred_check_branch
      %169 = sbr.rel (%p166) target = $region12
    $region11: #{conv_lstm_cell_forward.1} parent=5 // pred_region
      %s170 = ssub.s32 %s11, 1
      // Predicated region
      $region13: #{conv_lstm_cell_forward.1} parent=11 // pred_check
        %p171 = pneg %p100
      $region14: #{conv_lstm_cell_forward.1} parent=11 // pred_check_branch
        %173 = sbr.rel (%p171) target = $region16
      $region15: #{conv_lstm_cell_forward.1} parent=11 // pred_region
        _
      $region16: #{conv_lstm_cell_forward.1} parent=11 // pred_fallthru
        _
    $region12: #{conv_lstm_cell_forward.1} parent=5 // pred_fallthru
      _
    %p174 = scmp.lt.s32.totalorder %s11, 2
    // Predicated region
    $region17: #{conv_lstm_cell_forward.1} parent=5 // pred_check
      %p175 = pneg %p174
    $region18: #{conv_lstm_cell_forward.1} parent=5 // pred_check_branch
      %177 = sbr.rel (%p175) target = $region20
    $region19: #{conv_lstm_cell_forward.1} parent=5 // pred_region
      // Predicated region
      $region21: #{conv_lstm_cell_forward.1} parent=19 // pred_check
        %p178 = pneg %p45
      $region22: #{conv_lstm_cell_forward.1} parent=19 // pred_check_branch
        %180 = sbr.rel (%p178) target = $region24
      $region23: #{conv_lstm_cell_forward.1} parent=19 // pred_region
        %p181 = scmp.lt.s32.totalorder %s18, 1
        %s182 = scalar_select %p181, %s18, 1
        %p183 = scmp.lt.s32.totalorder %s19, 0
        %s184 = scalar_select %p183, %s19, 0
        %s185 = smul.addr %s184, 55
        %s186 = smul.addr %s182, 55
        %s187 = sadd.s32 %s185, %s186
        %s188 = smul.addr %s187, 4
        %s189 = scalar_lea.vmem %s0, %s188
      $region24: #{conv_lstm_cell_forward.1} parent=19 // pred_fallthru
        _
      // Predicated region
      $region25: #{conv_lstm_cell_forward.1} parent=19 // pred_check
        %p190 = pneg %p73
      $region26: #{conv_lstm_cell_forward.1} parent=19 // pred_check_branch
        %192 = sbr.rel (%p190) target = $region28
      $region27: #{conv_lstm_cell_forward.1} parent=19 // pred_region
        %s193 = smul.u32 48, %s19
        %p194 = scmp.lt.s32.totalorder %s18, 1
        %s195 = scalar_select %p194, %s18, 1
        %p196 = scmp.lt.s32.totalorder %s193, 47
        %s197 = scalar_select %p196, %s193, 47
        %s198 = smul.addr %s195, 48
        %s199 = sadd.s32 %s197, %s198
        %s200 = smul.addr %s199, 8
        %s201 = scalar_lea.vmem %s1, %s200
        %s202 = smul.u32 48, %s19
      $region28: #{conv_lstm_cell_forward.1} parent=19 // pred_fallthru
        _
    $region20: #{conv_lstm_cell_forward.1} parent=5 // pred_fallthru
      _
    %p203 = scmp.le.s32.totalorder 1, %s11
    %p204 = scmp.lt.s32.totalorder %s11, 3
    %p205 = pnand %p203, %p204
    %p206 = pneg %p205
    // Predicated region
    $region29: #{conv_lstm_cell_forward.1} parent=5 // pred_check
      _
    $region30: #{conv_lstm_cell_forward.1} parent=5 // pred_check_branch
      %208 = sbr.rel (%p205) target = $region32
    $region31: #{conv_lstm_cell_forward.1} parent=5 // pred_region
      %s209 = ssub.s32 %s11, 1
      %p210 = scmp.lt.s32.totalorder %s20, 1
      %s211 = scalar_select %p210, %s20, 1
      %p212 = scmp.lt.s32.totalorder %s21, 0
      %s213 = scalar_select %p212, %s21, 0
      %s214 = smul.addr %s213, 55
      %s215 = smul.addr %s211, 55
      %s216 = sadd.s32 %s214, %s215
      %s217 = smul.addr %s216, 4
      %s218 = scalar_lea.vmem %s0, %s217
      %p219 = pneg %p51
      %p220 = pneg %p48
      %s221 = smul.u32 48, %s21
      %p222 = scmp.lt.s32.totalorder %s20, 1
      %s223 = scalar_select %p222, %s20, 1
      %p224 = scmp.lt.s32.totalorder %s221, 47
      %s225 = scalar_select %p224, %s221, 47
      %s226 = smul.addr %s223, 48
      %s227 = sadd.s32 %s225, %s226
      %s228 = smul.addr %s227, 8
      %s229 = scalar_lea.vmem %s1, %s228
      %p230 = pneg %p79
      %p231 = pneg %p76
      %p232 = pneg %p100
      %p233 = pneg %p97
      %p234 = pneg %p128
      %p235 = pneg %p125
      %s236 = smul.u32 48, %s21
      %p237 = scmp.lt.s32.totalorder %s20, 1
      %s238 = scalar_select %p237, %s20, 1
      %p239 = scmp.lt.s32.totalorder %s236, 47
      %s240 = scalar_select %p239, %s236, 47
      %s241 = smul.addr %s238, 48
      %s242 = sadd.s32 %s240, %s241
      %s243 = smul.addr %s242, 8
      %s244 = scalar_lea.vmem %s3, %s243
      %p245 = pneg %p156
      %p246 = pneg %p153
      %s247 = smul.u32 48, %s21
      %p248 = scmp.lt.s32.totalorder %s20, 1
      %s249 = scalar_select %p248, %s20, 1
      %p250 = scmp.lt.s32.totalorder %s247, 47
      %s251 = scalar_select %p250, %s247, 47
      %s252 = smul.addr %s249, 48
      %s253 = sadd.s32 %s251, %s252
      %s254 = smul.addr %s253, 8
      %s255 = scalar_lea.vmem %s4, %s254
      %p256 = scmp.lt.s32.totalorder %s20, 1
      %s257 = scalar_select %p256, %s20, 1
      %p258 = scmp.lt.s32.totalorder %s21, 0
      %s259 = scalar_select %p258, %s21, 0
      %s260 = smul.addr %s259, 55
      %s261 = smul.addr %s257, 55
      %s262 = sadd.s32 %s260, %s261
      %s263 = smul.addr %s262, 4
      %s264 = scalar_lea.vmem %s0, %s263
      %s265 = smul.u32 48, %s21
      %p266 = scmp.lt.s32.totalorder %s20, 1
      %s267 = scalar_select %p266, %s20, 1
      %p268 = scmp.lt.s32.totalorder %s265, 47
      %s269 = scalar_select %p268, %s265, 47
      %s270 = smul.addr %s267, 48
      %s271 = sadd.s32 %s269, %s270
      %s272 = smul.addr %s271, 8
      %s273 = scalar_lea.vmem %s1, %s272
      %s274 = smul.u32 48, %s21
      %s275 = smul.u32 48, %s21
      %p276 = scmp.lt.s32.totalorder %s20, 1
      %s277 = scalar_select %p276, %s20, 1
      %p278 = scmp.lt.s32.totalorder %s275, 47
      %s279 = scalar_select %p278, %s275, 47
      %s280 = smul.addr %s277, 48
      %s281 = sadd.s32 %s279, %s280
      %s282 = smul.addr %s281, 8
      %s283 = scalar_lea.vmem %s3, %s282
      %s284 = smul.u32 48, %s21
      %s285 = smul.u32 48, %s21
      %p286 = scmp.lt.s32.totalorder %s20, 1
      %s287 = scalar_select %p286, %s20, 1
      %p288 = scmp.lt.s32.totalorder %s285, 47
      %s289 = scalar_select %p288, %s285, 47
      %s290 = smul.addr %s287, 48
      %s291 = sadd.s32 %s289, %s290
      %s292 = smul.addr %s291, 8
      %s293 = scalar_lea.vmem %s4, %s292
      %s294 = smul.u32 48, %s21
      %v295 = vld [vmem:[%s264] sm:$0xf]
      %v296 = vld [vmem:[%s264 + $0x4] sm:$0xf]
      %v297 = vld [vmem:[%s264 + $0x8] sm:$0xf]
      %v298 = vld [vmem:[%s264 + $0xc] sm:$0xf]
      %v299 = vld [vmem:[%s264 + $0x10] sm:$0xf]
      %v300 = vld [vmem:[%s264 + $0x14] sm:$0xf]
      %v301 = vld [vmem:[%s264 + $0x18] sm:$0xf]
      %v302 = vld [vmem:[%s264 + $0x1c] sm:$0xf]
      %v303 = vld [vmem:[%s264 + $0x20] sm:$0xf]
      %v304 = vld [vmem:[%s264 + $0x24] sm:$0xf]
      %v305 = vld [vmem:[%s264 + $0x28] sm:$0xf]
      %v306 = vld [vmem:[%s264 + $0x2c] sm:$0xf]
      %v307 = vld [vmem:[%s264 + $0x30] sm:$0xf]
      %v308 = vld [vmem:[%s264 + $0x34] sm:$0xf]
      %v309 = vld [vmem:[%s264 + $0x38] sm:$0xf]
      %v310 = vld [vmem:[%s264 + $0x3c] sm:$0xf]
      %v311 = vld [vmem:[%s264 + $0x40] sm:$0xf]
      %v312 = vld [vmem:[%s264 + $0x44] sm:$0xf]
      %v313 = vld [vmem:[%s264 + $0x48] sm:$0xf]
      %v314 = vld [vmem:[%s264 + $0x4c] sm:$0xf]
      %v315 = vld [vmem:[%s264 + $0x50] sm:$0xf]
      %v316 = vld [vmem:[%s264 + $0x54] sm:$0xf]
      %v317 = vld [vmem:[%s264 + $0x58] sm:$0xf]
      %v318 = vld [vmem:[%s264 + $0x5c] sm:$0xf]
      %v319 = vld [vmem:[%s264 + $0x60] sm:$0xf]
      %v320 = vld [vmem:[%s264 + $0x64] sm:$0xf]
      %v321 = vld [vmem:[%s264 + $0x68] sm:$0xf]
      %v322 = vld [vmem:[%s264 + $0x6c] sm:$0xf]
      %v323 = vld [vmem:[%s264 + $0x70] sm:$0xf]
      %v324 = vld [vmem:[%s264 + $0x74] sm:$0xf]
      %v325 = vld [vmem:[%s264 + $0x78] sm:$0xf]
      %v326 = vld [vmem:[%s264 + $0x7c] sm:$0xf]
      %v327 = vld [vmem:[%s264 + $0x80] sm:$0xf]
      %v328 = vld [vmem:[%s264 + $0x84] sm:$0xf]
      %v329 = vld [vmem:[%s264 + $0x88] sm:$0xf]
      %v330 = vld [vmem:[%s264 + $0x8c] sm:$0xf]
      %v331 = vld [vmem:[%s264 + $0x90] sm:$0xf]
      %v332 = vld [vmem:[%s264 + $0x94] sm:$0xf]
      %v333 = vld [vmem:[%s264 + $0x98] sm:$0xf]
      %v334 = vld [vmem:[%s264 + $0x9c] sm:$0xf]
      %v335 = vld [vmem:[%s264 + $0xa0] sm:$0xf]
      %v336 = vld [vmem:[%s264 + $0xa4] sm:$0xf]
      %v337 = vld [vmem:[%s264 + $0xa8] sm:$0xf]
      %v338 = vld [vmem:[%s264 + $0xac] sm:$0xf]
      %v339 = vld [vmem:[%s264 + $0xb0] sm:$0xf]
      %v340 = vld [vmem:[%s264 + $0xb4] sm:$0xf]
      %v341 = vld [vmem:[%s264 + $0xb8] sm:$0xf]
      %v342 = vld [vmem:[%s264 + $0xbc] sm:$0xf]
      %v343 = vld [vmem:[%s264 + $0xc0] sm:$0xf]
      %v344 = vld [vmem:[%s264 + $0xc4] sm:$0xf]
      %v345 = vld [vmem:[%s264 + $0xc8] sm:$0xf]
      %v346 = vld [vmem:[%s264 + $0xcc] sm:$0xf]
      %v347 = vld [vmem:[%s264 + $0xd0] sm:$0xf]
      %v348 = vld [vmem:[%s264 + $0xd4] sm:$0xf]
      %v349 = vld [vmem:[%s264 + $0xd8] sm:$0x1]
      %v350 = vunpack.c.l.bf16 %v295
      %v351 = vunpack.c.l.bf16 %v296
      %v352 = vunpack.c.l.bf16 %v297
      %v353 = vunpack.c.l.bf16 %v298
      %v354 = vunpack.c.l.bf16 %v299
      %v355 = vunpack.c.l.bf16 %v300
      %v356 = vunpack.c.l.bf16 %v301
      %v357 = vunpack.c.l.bf16 %v302
      %v358 = vunpack.c.l.bf16 %v303
      %v359 = vunpack.c.l.bf16 %v304
      %v360 = vunpack.c.l.bf16 %v305
      %v361 = vunpack.c.l.bf16 %v306
      %v362 = vunpack.c.l.bf16 %v307
      %v363 = vunpack.c.l.bf16 %v308
      %v364 = vunpack.c.l.bf16 %v309
      %v365 = vunpack.c.l.bf16 %v310
      %v366 = vunpack.c.l.bf16 %v311
      %v367 = vunpack.c.l.bf16 %v312
      %v368 = vunpack.c.l.bf16 %v313
      %v369 = vunpack.c.l.bf16 %v314
      %v370 = vunpack.c.l.bf16 %v315
      %v371 = vunpack.c.l.bf16 %v316
      %v372 = vunpack.c.l.bf16 %v317
      %v373 = vunpack.c.l.bf16 %v318
      %v374 = vunpack.c.l.bf16 %v319
      %v375 = vunpack.c.l.bf16 %v320
      %v376 = vunpack.c.l.bf16 %v321
      %v377 = vunpack.c.l.bf16 %v322
      %v378 = vunpack.c.l.bf16 %v323
      %v379 = vunpack.c.l.bf16 %v324
      %v380 = vunpack.c.l.bf16 %v325
      %v381 = vunpack.c.l.bf16 %v326
      %v382 = vunpack.c.l.bf16 %v327
      %v383 = vunpack.c.l.bf16 %v328
      %v384 = vunpack.c.l.bf16 %v329
      %v385 = vunpack.c.l.bf16 %v330
      %v386 = vunpack.c.l.bf16 %v331
      %v387 = vunpack.c.l.bf16 %v332
      %v388 = vunpack.c.l.bf16 %v333
      %v389 = vunpack.c.l.bf16 %v334
      %v390 = vunpack.c.l.bf16 %v335
      %v391 = vunpack.c.l.bf16 %v336
      %v392 = vunpack.c.l.bf16 %v337
      %v393 = vunpack.c.l.bf16 %v338
      %v394 = vunpack.c.l.bf16 %v339
      %v395 = vunpack.c.l.bf16 %v340
      %v396 = vunpack.c.l.bf16 %v341
      %v397 = vunpack.c.l.bf16 %v342
      %v398 = vunpack.c.l.bf16 %v343
      %v399 = vunpack.c.l.bf16 %v344
      %v400 = vunpack.c.l.bf16 %v345
      %v401 = vunpack.c.l.bf16 %v346
      %v402 = vunpack.c.l.bf16 %v347
      %v403 = vunpack.c.l.bf16 %v348
      %v404 = vunpack.c.l.bf16 %v349
      %vm454 = vcmask 1046528
      %v455 = vrot.slane %v350, 1
      %v456 = vrot.slane %v351, 1
      %v457 = vsel %vm454, %v455, %v456
      %v458 = vrot.slane %v352, 1
      %v459 = vsel %vm454, %v456, %v458
      %v460 = vrot.slane %v353, 1
      %v461 = vsel %vm454, %v458, %v460
      %v462 = vrot.slane %v354, 1
      %v463 = vsel %vm454, %v460, %v462
      %v464 = vrot.slane %v355, 1
      %v465 = vsel %vm454, %v462, %v464
      %v466 = vrot.slane %v356, 1
      %v467 = vsel %vm454, %v464, %v466
      %v468 = vrot.slane %v357, 1
      %v469 = vsel %vm454, %v466, %v468
      %v470 = vrot.slane %v358, 1
      %v471 = vsel %vm454, %v468, %v470
      %v472 = vrot.slane %v359, 1
      %v473 = vsel %vm454, %v470, %v472
      %v474 = vrot.slane %v360, 1
      %v475 = vsel %vm454, %v472, %v474
      %v476 = vrot.slane %v361, 1
      %v477 = vsel %vm454, %v474, %v476
      %v478 = vrot.slane %v362, 1
      %v479 = vsel %vm454, %v476, %v478
      %v480 = vrot.slane %v363, 1
      %v481 = vsel %vm454, %v478, %v480
      %v482 = vrot.slane %v364, 1
      %v483 = vsel %vm454, %v480, %v482
      %v484 = vrot.slane %v365, 1
      %v485 = vsel %vm454, %v482, %v484
      %v486 = vrot.slane %v366, 1
      %v487 = vsel %vm454, %v484, %v486
      %v488 = vrot.slane %v367, 1
      %v489 = vsel %vm454, %v486, %v488
      %v490 = vrot.slane %v368, 1
      %v491 = vsel %vm454, %v488, %v490
      %v492 = vrot.slane %v369, 1
      %v493 = vsel %vm454, %v490, %v492
      %v494 = vrot.slane %v370, 1
      %v495 = vsel %vm454, %v492, %v494
      %v496 = vrot.slane %v371, 1
      %v497 = vsel %vm454, %v494, %v496
      %v498 = vrot.slane %v372, 1
      %v499 = vsel %vm454, %v496, %v498
      %v500 = vrot.slane %v373, 1
      %v501 = vsel %vm454, %v498, %v500
      %v502 = vrot.slane %v374, 1
      %v503 = vsel %vm454, %v500, %v502
      %v504 = vrot.slane %v375, 1
      %v505 = vsel %vm454, %v502, %v504
      %v506 = vrot.slane %v376, 1
      %v507 = vsel %vm454, %v504, %v506
      %v508 = vrot.slane %v377, 1
      %v509 = vsel %vm454, %v506, %v508
      %v510 = vrot.slane %v378, 1
      %v511 = vsel %vm454, %v508, %v510
      %v512 = vrot.slane %v379, 1
      %v513 = vsel %vm454, %v510, %v512
      %v514 = vrot.slane %v380, 1
      %v515 = vsel %vm454, %v512, %v514
      %v516 = vrot.slane %v381, 1
      %v517 = vsel %vm454, %v514, %v516
      %v518 = vrot.slane %v382, 1
      %v519 = vsel %vm454, %v516, %v518
      %v520 = vrot.slane %v383, 1
      %v521 = vsel %vm454, %v518, %v520
      %v522 = vrot.slane %v384, 1
      %v523 = vsel %vm454, %v520, %v522
      %v524 = vrot.slane %v385, 1
      %v525 = vsel %vm454, %v522, %v524
      %v526 = vrot.slane %v386, 1
      %v527 = vsel %vm454, %v524, %v526
      %v528 = vrot.slane %v387, 1
      %v529 = vsel %vm454, %v526, %v528
      %v530 = vrot.slane %v388, 1
      %v531 = vsel %vm454, %v528, %v530
      %v532 = vrot.slane %v389, 1
      %v533 = vsel %vm454, %v530, %v532
      %v534 = vrot.slane %v390, 1
      %v535 = vsel %vm454, %v532, %v534
      %v536 = vrot.slane %v391, 1
      %v537 = vsel %vm454, %v534, %v536
      %v538 = vrot.slane %v392, 1
      %v539 = vsel %vm454, %v536, %v538
      %v540 = vrot.slane %v393, 1
      %v541 = vsel %vm454, %v538, %v540
      %v542 = vrot.slane %v394, 1
      %v543 = vsel %vm454, %v540, %v542
      %v544 = vrot.slane %v395, 1
      %v545 = vsel %vm454, %v542, %v544
      %v546 = vrot.slane %v396, 1
      %v547 = vsel %vm454, %v544, %v546
      %v548 = vrot.slane %v397, 1
      %v549 = vsel %vm454, %v546, %v548
      %v550 = vrot.slane %v398, 1
      %v551 = vsel %vm454, %v548, %v550
      %552 = vrot.lane.b32.xlu0 %v457, 12
      %v553 = vpop.permute.xlu0 %552
      %554 = vrot.lane.b32.xlu0 %v459, 12
      %v555 = vpop.permute.xlu0 %554
      %556 = vrot.lane.b32.xlu0 %v461, 12
      %v557 = vpop.permute.xlu0 %556
      %558 = vrot.lane.b32.xlu0 %v463, 12
      %v559 = vpop.permute.xlu0 %558
      %560 = vrot.lane.b32.xlu0 %v465, 12
      %v561 = vpop.permute.xlu0 %560
      %562 = vrot.lane.b32.xlu0 %v467, 12
      %v563 = vpop.permute.xlu0 %562
      %564 = vrot.lane.b32.xlu0 %v469, 12
      %v565 = vpop.permute.xlu0 %564
      %566 = vrot.lane.b32.xlu0 %v471, 12
      %v567 = vpop.permute.xlu0 %566
      %568 = vrot.lane.b32.xlu0 %v473, 12
      %v569 = vpop.permute.xlu0 %568
      %570 = vrot.lane.b32.xlu0 %v475, 12
      %v571 = vpop.permute.xlu0 %570
      %572 = vrot.lane.b32.xlu0 %v477, 12
      %v573 = vpop.permute.xlu0 %572
      %574 = vrot.lane.b32.xlu0 %v479, 12
      %v575 = vpop.permute.xlu0 %574
      %576 = vrot.lane.b32.xlu0 %v481, 12
      %v577 = vpop.permute.xlu0 %576
      %578 = vrot.lane.b32.xlu0 %v483, 12
      %v579 = vpop.permute.xlu0 %578
      %580 = vrot.lane.b32.xlu0 %v485, 12
      %v581 = vpop.permute.xlu0 %580
      %582 = vrot.lane.b32.xlu0 %v487, 12
      %v583 = vpop.permute.xlu0 %582
      %584 = vrot.lane.b32.xlu0 %v489, 12
      %v585 = vpop.permute.xlu0 %584
      %586 = vrot.lane.b32.xlu0 %v491, 12
      %v587 = vpop.permute.xlu0 %586
      %588 = vrot.lane.b32.xlu0 %v493, 12
      %v589 = vpop.permute.xlu0 %588
      %590 = vrot.lane.b32.xlu0 %v495, 12
      %v591 = vpop.permute.xlu0 %590
      %592 = vrot.lane.b32.xlu0 %v497, 12
      %v593 = vpop.permute.xlu0 %592
      %594 = vrot.lane.b32.xlu0 %v499, 12
      %v595 = vpop.permute.xlu0 %594
      %596 = vrot.lane.b32.xlu0 %v501, 12
      %v597 = vpop.permute.xlu0 %596
      %598 = vrot.lane.b32.xlu0 %v503, 12
      %v599 = vpop.permute.xlu0 %598
      %600 = vrot.lane.b32.xlu0 %v505, 12
      %v601 = vpop.permute.xlu0 %600
      %602 = vrot.lane.b32.xlu0 %v507, 12
      %v603 = vpop.permute.xlu0 %602
      %604 = vrot.lane.b32.xlu0 %v509, 12
      %v605 = vpop.permute.xlu0 %604
      %606 = vrot.lane.b32.xlu0 %v511, 12
      %v607 = vpop.permute.xlu0 %606
      %608 = vrot.lane.b32.xlu0 %v513, 12
      %v609 = vpop.permute.xlu0 %608
      %610 = vrot.lane.b32.xlu0 %v515, 12
      %v611 = vpop.permute.xlu0 %610
      %612 = vrot.lane.b32.xlu0 %v517, 12
      %v613 = vpop.permute.xlu0 %612
      %614 = vrot.lane.b32.xlu0 %v519, 12
      %v615 = vpop.permute.xlu0 %614
      %616 = vrot.lane.b32.xlu0 %v521, 12
      %v617 = vpop.permute.xlu0 %616
      %618 = vrot.lane.b32.xlu0 %v523, 12
      %v619 = vpop.permute.xlu0 %618
      %620 = vrot.lane.b32.xlu0 %v525, 12
      %v621 = vpop.permute.xlu0 %620
      %622 = vrot.lane.b32.xlu0 %v527, 12
      %v623 = vpop.permute.xlu0 %622
      %624 = vrot.lane.b32.xlu0 %v529, 12
      %v625 = vpop.permute.xlu0 %624
      %626 = vrot.lane.b32.xlu0 %v531, 12
      %v627 = vpop.permute.xlu0 %626
      %628 = vrot.lane.b32.xlu0 %v533, 12
      %v629 = vpop.permute.xlu0 %628
      %630 = vrot.lane.b32.xlu0 %v535, 12
      %v631 = vpop.permute.xlu0 %630
      %632 = vrot.lane.b32.xlu0 %v537, 12
      %v633 = vpop.permute.xlu0 %632
      %634 = vrot.lane.b32.xlu0 %v539, 12
      %v635 = vpop.permute.xlu0 %634
      %636 = vrot.lane.b32.xlu0 %v541, 12
      %v637 = vpop.permute.xlu0 %636
      %638 = vrot.lane.b32.xlu0 %v543, 12
      %v639 = vpop.permute.xlu0 %638
      %640 = vrot.lane.b32.xlu0 %v545, 12
      %v641 = vpop.permute.xlu0 %640
      %642 = vrot.lane.b32.xlu0 %v547, 12
      %v643 = vpop.permute.xlu0 %642
      %644 = vrot.lane.b32.xlu0 %v549, 12
      %v645 = vpop.permute.xlu0 %644
      %646 = vrot.lane.b32.xlu0 %v551, 12
      %v647 = vpop.permute.xlu0 %646
      %vm696 = vcmask 1045504
      %v697 = vrot.slane %v350, 2
      %v698 = vrot.slane %v351, 2
      %v699 = vsel %vm696, %v697, %v698
      %v700 = vrot.slane %v352, 2
      %v701 = vsel %vm696, %v698, %v700
      %v702 = vrot.slane %v353, 2
      %v703 = vsel %vm696, %v700, %v702
      %v704 = vrot.slane %v354, 2
      %v705 = vsel %vm696, %v702, %v704
      %v706 = vrot.slane %v355, 2
      %v707 = vsel %vm696, %v704, %v706
      %v708 = vrot.slane %v356, 2
      %v709 = vsel %vm696, %v706, %v708
      %v710 = vrot.slane %v357, 2
      %v711 = vsel %vm696, %v708, %v710
      %v712 = vrot.slane %v358, 2
      %v713 = vsel %vm696, %v710, %v712
      %v714 = vrot.slane %v359, 2
      %v715 = vsel %vm696, %v712, %v714
      %v716 = vrot.slane %v360, 2
      %v717 = vsel %vm696, %v714, %v716
      %v718 = vrot.slane %v361, 2
      %v719 = vsel %vm696, %v716, %v718
      %v720 = vrot.slane %v362, 2
      %v721 = vsel %vm696, %v718, %v720
      %v722 = vrot.slane %v363, 2
      %v723 = vsel %vm696, %v720, %v722
      %v724 = vrot.slane %v364, 2
      %v725 = vsel %vm696, %v722, %v724
      %v726 = vrot.slane %v365, 2
      %v727 = vsel %vm696, %v724, %v726
      %v728 = vrot.slane %v366, 2
      %v729 = vsel %vm696, %v726, %v728
      %v730 = vrot.slane %v367, 2
      %v731 = vsel %vm696, %v728, %v730
      %v732 = vrot.slane %v368, 2
      %v733 = vsel %vm696, %v730, %v732
      %v734 = vrot.slane %v369, 2
      %v735 = vsel %vm696, %v732, %v734
      %v736 = vrot.slane %v370, 2
      %v737 = vsel %vm696, %v734, %v736
      %v738 = vrot.slane %v371, 2
      %v739 = vsel %vm696, %v736, %v738
      %v740 = vrot.slane %v372, 2
      %v741 = vsel %vm696, %v738, %v740
      %v742 = vrot.slane %v373, 2
      %v743 = vsel %vm696, %v740, %v742
      %v744 = vrot.slane %v374, 2
      %v745 = vsel %vm696, %v742, %v744
      %v746 = vrot.slane %v375, 2
      %v747 = vsel %vm696, %v744, %v746
      %v748 = vrot.slane %v376, 2
      %v749 = vsel %vm696, %v746, %v748
      %v750 = vrot.slane %v377, 2
      %v751 = vsel %vm696, %v748, %v750
      %v752 = vrot.slane %v378, 2
      %v753 = vsel %vm696, %v750, %v752
      %v754 = vrot.slane %v379, 2
      %v755 = vsel %vm696, %v752, %v754
      %v756 = vrot.slane %v380, 2
      %v757 = vsel %vm696, %v754, %v756
      %v758 = vrot.slane %v381, 2
      %v759 = vsel %vm696, %v756, %v758
      %v760 = vrot.slane %v382, 2
      %v761 = vsel %vm696, %v758, %v760
      %v762 = vrot.slane %v383, 2
      %v763 = vsel %vm696, %v760, %v762
      %v764 = vrot.slane %v384, 2
      %v765 = vsel %vm696, %v762, %v764
      %v766 = vrot.slane %v385, 2
      %v767 = vsel %vm696, %v764, %v766
      %v768 = vrot.slane %v386, 2
      %v769 = vsel %vm696, %v766, %v768
      %v770 = vrot.slane %v387, 2
      %v771 = vsel %vm696, %v768, %v770
      %v772 = vrot.slane %v388, 2
      %v773 = vsel %vm696, %v770, %v772
      %v774 = vrot.slane %v389, 2
      %v775 = vsel %vm696, %v772, %v774
      %v776 = vrot.slane %v390, 2
      %v777 = vsel %vm696, %v774, %v776
      %v778 = vrot.slane %v391, 2
      %v779 = vsel %vm696, %v776, %v778
      %v780 = vrot.slane %v392, 2
      %v781 = vsel %vm696, %v778, %v780
      %v782 = vrot.slane %v393, 2
      %v783 = vsel %vm696, %v780, %v782
      %v784 = vrot.slane %v394, 2
      %v785 = vsel %vm696, %v782, %v784
      %v786 = vrot.slane %v395, 2
      %v787 = vsel %vm696, %v784, %v786
      %v788 = vrot.slane %v396, 2
      %v789 = vsel %vm696, %v786, %v788
      %v790 = vrot.slane %v397, 2
      %v791 = vsel %vm696, %v788, %v790
      %v792 = vrot.slane %v398, 2
      %v793 = vsel %vm696, %v790, %v792
      %794 = vrot.lane.b32.xlu0 %v699, 24
      %v795 = vpop.permute.xlu0 %794
      %796 = vrot.lane.b32.xlu0 %v701, 24
      %v797 = vpop.permute.xlu0 %796
      %798 = vrot.lane.b32.xlu0 %v703, 24
      %v799 = vpop.permute.xlu0 %798
      %800 = vrot.lane.b32.xlu0 %v705, 24
      %v801 = vpop.permute.xlu0 %800
      %802 = vrot.lane.b32.xlu0 %v707, 24
      %v803 = vpop.permute.xlu0 %802
      %804 = vrot.lane.b32.xlu0 %v709, 24
      %v805 = vpop.permute.xlu0 %804
      %806 = vrot.lane.b32.xlu0 %v711, 24
      %v807 = vpop.permute.xlu0 %806
      %808 = vrot.lane.b32.xlu0 %v713, 24
      %v809 = vpop.permute.xlu0 %808
      %810 = vrot.lane.b32.xlu0 %v715, 24
      %v811 = vpop.permute.xlu0 %810
      %812 = vrot.lane.b32.xlu0 %v717, 24
      %v813 = vpop.permute.xlu0 %812
      %814 = vrot.lane.b32.xlu0 %v719, 24
      %v815 = vpop.permute.xlu0 %814
      %816 = vrot.lane.b32.xlu0 %v721, 24
      %v817 = vpop.permute.xlu0 %816
      %818 = vrot.lane.b32.xlu0 %v723, 24
      %v819 = vpop.permute.xlu0 %818
      %820 = vrot.lane.b32.xlu0 %v725, 24
      %v821 = vpop.permute.xlu0 %820
      %822 = vrot.lane.b32.xlu0 %v727, 24
      %v823 = vpop.permute.xlu0 %822
      %824 = vrot.lane.b32.xlu0 %v729, 24
      %v825 = vpop.permute.xlu0 %824
      %826 = vrot.lane.b32.xlu0 %v731, 24
      %v827 = vpop.permute.xlu0 %826
      %828 = vrot.lane.b32.xlu0 %v733, 24
      %v829 = vpop.permute.xlu0 %828
      %830 = vrot.lane.b32.xlu0 %v735, 24
      %v831 = vpop.permute.xlu0 %830
      %832 = vrot.lane.b32.xlu0 %v737, 24
      %v833 = vpop.permute.xlu0 %832
      %834 = vrot.lane.b32.xlu0 %v739, 24
      %v835 = vpop.permute.xlu0 %834
      %836 = vrot.lane.b32.xlu0 %v741, 24
      %v837 = vpop.permute.xlu0 %836
      %838 = vrot.lane.b32.xlu0 %v743, 24
      %v839 = vpop.permute.xlu0 %838
      %840 = vrot.lane.b32.xlu0 %v745, 24
      %v841 = vpop.permute.xlu0 %840
      %842 = vrot.lane.b32.xlu0 %v747, 24
      %v843 = vpop.permute.xlu0 %842
      %844 = vrot.lane.b32.xlu0 %v749, 24
      %v845 = vpop.permute.xlu0 %844
      %846 = vrot.lane.b32.xlu0 %v751, 24
      %v847 = vpop.permute.xlu0 %846
      %848 = vrot.lane.b32.xlu0 %v753, 24
      %v849 = vpop.permute.xlu0 %848
      %850 = vrot.lane.b32.xlu0 %v755, 24
      %v851 = vpop.permute.xlu0 %850
      %852 = vrot.lane.b32.xlu0 %v757, 24
      %v853 = vpop.permute.xlu0 %852
      %854 = vrot.lane.b32.xlu0 %v759, 24
      %v855 = vpop.permute.xlu0 %854
      %856 = vrot.lane.b32.xlu0 %v761, 24
      %v857 = vpop.permute.xlu0 %856
      %858 = vrot.lane.b32.xlu0 %v763, 24
      %v859 = vpop.permute.xlu0 %858
      %860 = vrot.lane.b32.xlu0 %v765, 24
      %v861 = vpop.permute.xlu0 %860
      %862 = vrot.lane.b32.xlu0 %v767, 24
      %v863 = vpop.permute.xlu0 %862
      %864 = vrot.lane.b32.xlu0 %v769, 24
      %v865 = vpop.permute.xlu0 %864
      %866 = vrot.lane.b32.xlu0 %v771, 24
      %v867 = vpop.permute.xlu0 %866
      %868 = vrot.lane.b32.xlu0 %v773, 24
      %v869 = vpop.permute.xlu0 %868
      %870 = vrot.lane.b32.xlu0 %v775, 24
      %v871 = vpop.permute.xlu0 %870
      %872 = vrot.lane.b32.xlu0 %v777, 24
      %v873 = vpop.permute.xlu0 %872
      %874 = vrot.lane.b32.xlu0 %v779, 24
      %v875 = vpop.permute.xlu0 %874
      %876 = vrot.lane.b32.xlu0 %v781, 24
      %v877 = vpop.permute.xlu0 %876
      %878 = vrot.lane.b32.xlu0 %v783, 24
      %v879 = vpop.permute.xlu0 %878
      %880 = vrot.lane.b32.xlu0 %v785, 24
      %v881 = vpop.permute.xlu0 %880
      %882 = vrot.lane.b32.xlu0 %v787, 24
      %v883 = vpop.permute.xlu0 %882
      %884 = vrot.lane.b32.xlu0 %v789, 24
      %v885 = vpop.permute.xlu0 %884
      %886 = vrot.lane.b32.xlu0 %v791, 24
      %v887 = vpop.permute.xlu0 %886
      %888 = vrot.lane.b32.xlu0 %v793, 24
      %v889 = vpop.permute.xlu0 %888
      %940 = vrot.lane.b32.xlu0 %v353, 36
      %v941 = vpop.permute.xlu0 %940
      %942 = vrot.lane.b32.xlu0 %v354, 36
      %v943 = vpop.permute.xlu0 %942
      %944 = vrot.lane.b32.xlu0 %v355, 36
      %v945 = vpop.permute.xlu0 %944
      %946 = vrot.lane.b32.xlu0 %v356, 36
      %v947 = vpop.permute.xlu0 %946
      %948 = vrot.lane.b32.xlu0 %v357, 36
      %v949 = vpop.permute.xlu0 %948
      %950 = vrot.lane.b32.xlu0 %v358, 36
      %v951 = vpop.permute.xlu0 %950
      %952 = vrot.lane.b32.xlu0 %v359, 36
      %v953 = vpop.permute.xlu0 %952
      %954 = vrot.lane.b32.xlu0 %v360, 36
      %v955 = vpop.permute.xlu0 %954
      %956 = vrot.lane.b32.xlu0 %v361, 36
      %v957 = vpop.permute.xlu0 %956
      %958 = vrot.lane.b32.xlu0 %v362, 36
      %v959 = vpop.permute.xlu0 %958
      %960 = vrot.lane.b32.xlu0 %v363, 36
      %v961 = vpop.permute.xlu0 %960
      %962 = vrot.lane.b32.xlu0 %v364, 36
      %v963 = vpop.permute.xlu0 %962
      %964 = vrot.lane.b32.xlu0 %v365, 36
      %v965 = vpop.permute.xlu0 %964
      %966 = vrot.lane.b32.xlu0 %v366, 36
      %v967 = vpop.permute.xlu0 %966
      %968 = vrot.lane.b32.xlu0 %v367, 36
      %v969 = vpop.permute.xlu0 %968
      %970 = vrot.lane.b32.xlu0 %v368, 36
      %v971 = vpop.permute.xlu0 %970
      %972 = vrot.lane.b32.xlu0 %v369, 36
      %v973 = vpop.permute.xlu0 %972
      %974 = vrot.lane.b32.xlu0 %v370, 36
      %v975 = vpop.permute.xlu0 %974
      %976 = vrot.lane.b32.xlu0 %v371, 36
      %v977 = vpop.permute.xlu0 %976
      %978 = vrot.lane.b32.xlu0 %v372, 36
      %v979 = vpop.permute.xlu0 %978
      %980 = vrot.lane.b32.xlu0 %v373, 36
      %v981 = vpop.permute.xlu0 %980
      %982 = vrot.lane.b32.xlu0 %v374, 36
      %v983 = vpop.permute.xlu0 %982
      %984 = vrot.lane.b32.xlu0 %v375, 36
      %v985 = vpop.permute.xlu0 %984
      %986 = vrot.lane.b32.xlu0 %v376, 36
      %v987 = vpop.permute.xlu0 %986
      %988 = vrot.lane.b32.xlu0 %v377, 36
      %v989 = vpop.permute.xlu0 %988
      %990 = vrot.lane.b32.xlu0 %v378, 36
      %v991 = vpop.permute.xlu0 %990
      %992 = vrot.lane.b32.xlu0 %v379, 36
      %v993 = vpop.permute.xlu0 %992
      %994 = vrot.lane.b32.xlu0 %v380, 36
      %v995 = vpop.permute.xlu0 %994
      %996 = vrot.lane.b32.xlu0 %v381, 36
      %v997 = vpop.permute.xlu0 %996
      %998 = vrot.lane.b32.xlu0 %v382, 36
      %v999 = vpop.permute.xlu0 %998
      %1000 = vrot.lane.b32.xlu0 %v383, 36
      %v1001 = vpop.permute.xlu0 %1000
      %1002 = vrot.lane.b32.xlu0 %v384, 36
      %v1003 = vpop.permute.xlu0 %1002
      %1004 = vrot.lane.b32.xlu0 %v385, 36
      %v1005 = vpop.permute.xlu0 %1004
      %1006 = vrot.lane.b32.xlu0 %v386, 36
      %v1007 = vpop.permute.xlu0 %1006
      %1008 = vrot.lane.b32.xlu0 %v387, 36
      %v1009 = vpop.permute.xlu0 %1008
      %1010 = vrot.lane.b32.xlu0 %v388, 36
      %v1011 = vpop.permute.xlu0 %1010
      %1012 = vrot.lane.b32.xlu0 %v389, 36
      %v1013 = vpop.permute.xlu0 %1012
      %1014 = vrot.lane.b32.xlu0 %v390, 36
      %v1015 = vpop.permute.xlu0 %1014
      %1016 = vrot.lane.b32.xlu0 %v391, 36
      %v1017 = vpop.permute.xlu0 %1016
      %1018 = vrot.lane.b32.xlu0 %v392, 36
      %v1019 = vpop.permute.xlu0 %1018
      %1020 = vrot.lane.b32.xlu0 %v393, 36
      %v1021 = vpop.permute.xlu0 %1020
      %1022 = vrot.lane.b32.xlu0 %v394, 36
      %v1023 = vpop.permute.xlu0 %1022
      %1024 = vrot.lane.b32.xlu0 %v395, 36
      %v1025 = vpop.permute.xlu0 %1024
      %1026 = vrot.lane.b32.xlu0 %v396, 36
      %v1027 = vpop.permute.xlu0 %1026
      %1028 = vrot.lane.b32.xlu0 %v397, 36
      %v1029 = vpop.permute.xlu0 %1028
      %1030 = vrot.lane.b32.xlu0 %v398, 36
      %v1031 = vpop.permute.xlu0 %1030
      %1032 = vrot.lane.b32.xlu0 %v399, 36
      %v1033 = vpop.permute.xlu0 %1032
      %1034 = vrot.lane.b32.xlu0 %v400, 36
      %v1035 = vpop.permute.xlu0 %1034
      %v1085 = vrot.slane %v399, 1
      %v1086 = vsel %vm454, %v550, %v1085
      %v1087 = vrot.slane %v400, 1
      %v1088 = vsel %vm454, %v1085, %v1087
      %v1089 = vrot.slane %v401, 1
      %v1090 = vsel %vm454, %v1087, %v1089
      %1091 = vrot.lane.b32.xlu0 %v463, 48
      %v1092 = vpop.permute.xlu0 %1091
      %1093 = vrot.lane.b32.xlu0 %v465, 48
      %v1094 = vpop.permute.xlu0 %1093
      %1095 = vrot.lane.b32.xlu0 %v467, 48
      %v1096 = vpop.permute.xlu0 %1095
      %1097 = vrot.lane.b32.xlu0 %v469, 48
      %v1098 = vpop.permute.xlu0 %1097
      %1099 = vrot.lane.b32.xlu0 %v471, 48
      %v1100 = vpop.permute.xlu0 %1099
      %1101 = vrot.lane.b32.xlu0 %v473, 48
      %v1102 = vpop.permute.xlu0 %1101
      %1103 = vrot.lane.b32.xlu0 %v475, 48
      %v1104 = vpop.permute.xlu0 %1103
      %1105 = vrot.lane.b32.xlu0 %v477, 48
      %v1106 = vpop.permute.xlu0 %1105
      %1107 = vrot.lane.b32.xlu0 %v479, 48
      %v1108 = vpop.permute.xlu0 %1107
      %1109 = vrot.lane.b32.xlu0 %v481, 48
      %v1110 = vpop.permute.xlu0 %1109
      %1111 = vrot.lane.b32.xlu0 %v483, 48
      %v1112 = vpop.permute.xlu0 %1111
      %1113 = vrot.lane.b32.xlu0 %v485, 48
      %v1114 = vpop.permute.xlu0 %1113
      %1115 = vrot.lane.b32.xlu0 %v487, 48
      %v1116 = vpop.permute.xlu0 %1115
      %1117 = vrot.lane.b32.xlu0 %v489, 48
      %v1118 = vpop.permute.xlu0 %1117
      %1119 = vrot.lane.b32.xlu0 %v491, 48
      %v1120 = vpop.permute.xlu0 %1119
      %1121 = vrot.lane.b32.xlu0 %v493, 48
      %v1122 = vpop.permute.xlu0 %1121
      %1123 = vrot.lane.b32.xlu0 %v495, 48
      %v1124 = vpop.permute.xlu0 %1123
      %1125 = vrot.lane.b32.xlu0 %v497, 48
      %v1126 = vpop.permute.xlu0 %1125
      %1127 = vrot.lane.b32.xlu0 %v499, 48
      %v1128 = vpop.permute.xlu0 %1127
      %1129 = vrot.lane.b32.xlu0 %v501, 48
      %v1130 = vpop.permute.xlu0 %1129
      %1131 = vrot.lane.b32.xlu0 %v503, 48
      %v1132 = vpop.permute.xlu0 %1131
      %1133 = vrot.lane.b32.xlu0 %v505, 48
      %v1134 = vpop.permute.xlu0 %1133
      %1135 = vrot.lane.b32.xlu0 %v507, 48
      %v1136 = vpop.permute.xlu0 %1135
      %1137 = vrot.lane.b32.xlu0 %v509, 48
      %v1138 = vpop.permute.xlu0 %1137
      %1139 = vrot.lane.b32.xlu0 %v511, 48
      %v1140 = vpop.permute.xlu0 %1139
      %1141 = vrot.lane.b32.xlu0 %v513, 48
      %v1142 = vpop.permute.xlu0 %1141
      %1143 = vrot.lane.b32.xlu0 %v515, 48
      %v1144 = vpop.permute.xlu0 %1143
      %1145 = vrot.lane.b32.xlu0 %v517, 48
      %v1146 = vpop.permute.xlu0 %1145
      %1147 = vrot.lane.b32.xlu0 %v519, 48
      %v1148 = vpop.permute.xlu0 %1147
      %1149 = vrot.lane.b32.xlu0 %v521, 48
      %v1150 = vpop.permute.xlu0 %1149
      %1151 = vrot.lane.b32.xlu0 %v523, 48
      %v1152 = vpop.permute.xlu0 %1151
      %1153 = vrot.lane.b32.xlu0 %v525, 48
      %v1154 = vpop.permute.xlu0 %1153
      %1155 = vrot.lane.b32.xlu0 %v527, 48
      %v1156 = vpop.permute.xlu0 %1155
      %1157 = vrot.lane.b32.xlu0 %v529, 48
      %v1158 = vpop.permute.xlu0 %1157
      %1159 = vrot.lane.b32.xlu0 %v531, 48
      %v1160 = vpop.permute.xlu0 %1159
      %1161 = vrot.lane.b32.xlu0 %v533, 48
      %v1162 = vpop.permute.xlu0 %1161
      %1163 = vrot.lane.b32.xlu0 %v535, 48
      %v1164 = vpop.permute.xlu0 %1163
      %1165 = vrot.lane.b32.xlu0 %v537, 48
      %v1166 = vpop.permute.xlu0 %1165
      %1167 = vrot.lane.b32.xlu0 %v539, 48
      %v1168 = vpop.permute.xlu0 %1167
      %1169 = vrot.lane.b32.xlu0 %v541, 48
      %v1170 = vpop.permute.xlu0 %1169
      %1171 = vrot.lane.b32.xlu0 %v543, 48
      %v1172 = vpop.permute.xlu0 %1171
      %1173 = vrot.lane.b32.xlu0 %v545, 48
      %v1174 = vpop.permute.xlu0 %1173
      %1175 = vrot.lane.b32.xlu0 %v547, 48
      %v1176 = vpop.permute.xlu0 %1175
      %1177 = vrot.lane.b32.xlu0 %v549, 48
      %v1178 = vpop.permute.xlu0 %1177
      %1179 = vrot.lane.b32.xlu0 %v551, 48
      %v1180 = vpop.permute.xlu0 %1179
      %1181 = vrot.lane.b32.xlu0 %v1086, 48
      %v1182 = vpop.permute.xlu0 %1181
      %1183 = vrot.lane.b32.xlu0 %v1088, 48
      %v1184 = vpop.permute.xlu0 %1183
      %1185 = vrot.lane.b32.xlu0 %v1090, 48
      %v1186 = vpop.permute.xlu0 %1185
      %v1235 = vrot.slane %v399, 2
      %v1236 = vsel %vm696, %v792, %v1235
      %v1237 = vrot.slane %v400, 2
      %v1238 = vsel %vm696, %v1235, %v1237
      %v1239 = vrot.slane %v401, 2
      %v1240 = vsel %vm696, %v1237, %v1239
      %1241 = vrot.lane.b32.xlu0 %v705, 60
      %v1242 = vpop.permute.xlu0 %1241
      %1243 = vrot.lane.b32.xlu0 %v707, 60
      %v1244 = vpop.permute.xlu0 %1243
      %1245 = vrot.lane.b32.xlu0 %v709, 60
      %v1246 = vpop.permute.xlu0 %1245
      %1247 = vrot.lane.b32.xlu0 %v711, 60
      %v1248 = vpop.permute.xlu0 %1247
      %1249 = vrot.lane.b32.xlu0 %v713, 60
      %v1250 = vpop.permute.xlu0 %1249
      %1251 = vrot.lane.b32.xlu0 %v715, 60
      %v1252 = vpop.permute.xlu0 %1251
      %1253 = vrot.lane.b32.xlu0 %v717, 60
      %v1254 = vpop.permute.xlu0 %1253
      %1255 = vrot.lane.b32.xlu0 %v719, 60
      %v1256 = vpop.permute.xlu0 %1255
      %1257 = vrot.lane.b32.xlu0 %v721, 60
      %v1258 = vpop.permute.xlu0 %1257
      %1259 = vrot.lane.b32.xlu0 %v723, 60
      %v1260 = vpop.permute.xlu0 %1259
      %1261 = vrot.lane.b32.xlu0 %v725, 60
      %v1262 = vpop.permute.xlu0 %1261
      %1263 = vrot.lane.b32.xlu0 %v727, 60
      %v1264 = vpop.permute.xlu0 %1263
      %1265 = vrot.lane.b32.xlu0 %v729, 60
      %v1266 = vpop.permute.xlu0 %1265
      %1267 = vrot.lane.b32.xlu0 %v731, 60
      %v1268 = vpop.permute.xlu0 %1267
      %1269 = vrot.lane.b32.xlu0 %v733, 60
      %v1270 = vpop.permute.xlu0 %1269
      %1271 = vrot.lane.b32.xlu0 %v735, 60
      %v1272 = vpop.permute.xlu0 %1271
      %1273 = vrot.lane.b32.xlu0 %v737, 60
      %v1274 = vpop.permute.xlu0 %1273
      %1275 = vrot.lane.b32.xlu0 %v739, 60
      %v1276 = vpop.permute.xlu0 %1275
      %1277 = vrot.lane.b32.xlu0 %v741, 60
      %v1278 = vpop.permute.xlu0 %1277
      %1279 = vrot.lane.b32.xlu0 %v743, 60
      %v1280 = vpop.permute.xlu0 %1279
      %1281 = vrot.lane.b32.xlu0 %v745, 60
      %v1282 = vpop.permute.xlu0 %1281
      %1283 = vrot.lane.b32.xlu0 %v747, 60
      %v1284 = vpop.permute.xlu0 %1283
      %1285 = vrot.lane.b32.xlu0 %v749, 60
      %v1286 = vpop.permute.xlu0 %1285
      %1287 = vrot.lane.b32.xlu0 %v751, 60
      %v1288 = vpop.permute.xlu0 %1287
      %1289 = vrot.lane.b32.xlu0 %v753, 60
      %v1290 = vpop.permute.xlu0 %1289
      %1291 = vrot.lane.b32.xlu0 %v755, 60
      %v1292 = vpop.permute.xlu0 %1291
      %1293 = vrot.lane.b32.xlu0 %v757, 60
      %v1294 = vpop.permute.xlu0 %1293
      %1295 = vrot.lane.b32.xlu0 %v759, 60
      %v1296 = vpop.permute.xlu0 %1295
      %1297 = vrot.lane.b32.xlu0 %v761, 60
      %v1298 = vpop.permute.xlu0 %1297
      %1299 = vrot.lane.b32.xlu0 %v763, 60
      %v1300 = vpop.permute.xlu0 %1299
      %1301 = vrot.lane.b32.xlu0 %v765, 60
      %v1302 = vpop.permute.xlu0 %1301
      %1303 = vrot.lane.b32.xlu0 %v767, 60
      %v1304 = vpop.permute.xlu0 %1303
      %1305 = vrot.lane.b32.xlu0 %v769, 60
      %v1306 = vpop.permute.xlu0 %1305
      %1307 = vrot.lane.b32.xlu0 %v771, 60
      %v1308 = vpop.permute.xlu0 %1307
      %1309 = vrot.lane.b32.xlu0 %v773, 60
      %v1310 = vpop.permute.xlu0 %1309
      %1311 = vrot.lane.b32.xlu0 %v775, 60
      %v1312 = vpop.permute.xlu0 %1311
      %1313 = vrot.lane.b32.xlu0 %v777, 60
      %v1314 = vpop.permute.xlu0 %1313
      %1315 = vrot.lane.b32.xlu0 %v779, 60
      %v1316 = vpop.permute.xlu0 %1315
      %1317 = vrot.lane.b32.xlu0 %v781, 60
      %v1318 = vpop.permute.xlu0 %1317
      %1319 = vrot.lane.b32.xlu0 %v783, 60
      %v1320 = vpop.permute.xlu0 %1319
      %1321 = vrot.lane.b32.xlu0 %v785, 60
      %v1322 = vpop.permute.xlu0 %1321
      %1323 = vrot.lane.b32.xlu0 %v787, 60
      %v1324 = vpop.permute.xlu0 %1323
      %1325 = vrot.lane.b32.xlu0 %v789, 60
      %v1326 = vpop.permute.xlu0 %1325
      %1327 = vrot.lane.b32.xlu0 %v791, 60
      %v1328 = vpop.permute.xlu0 %1327
      %1329 = vrot.lane.b32.xlu0 %v793, 60
      %v1330 = vpop.permute.xlu0 %1329
      %1331 = vrot.lane.b32.xlu0 %v1236, 60
      %v1332 = vpop.permute.xlu0 %1331
      %1333 = vrot.lane.b32.xlu0 %v1238, 60
      %v1334 = vpop.permute.xlu0 %1333
      %1335 = vrot.lane.b32.xlu0 %v1240, 60
      %v1336 = vpop.permute.xlu0 %1335
      %1387 = vrot.lane.b32.xlu0 %v356, 72
      %v1388 = vpop.permute.xlu0 %1387
      %1389 = vrot.lane.b32.xlu0 %v357, 72
      %v1390 = vpop.permute.xlu0 %1389
      %1391 = vrot.lane.b32.xlu0 %v358, 72
      %v1392 = vpop.permute.xlu0 %1391
      %1393 = vrot.lane.b32.xlu0 %v359, 72
      %v1394 = vpop.permute.xlu0 %1393
      %1395 = vrot.lane.b32.xlu0 %v360, 72
      %v1396 = vpop.permute.xlu0 %1395
      %1397 = vrot.lane.b32.xlu0 %v361, 72
      %v1398 = vpop.permute.xlu0 %1397
      %1399 = vrot.lane.b32.xlu0 %v362, 72
      %v1400 = vpop.permute.xlu0 %1399
      %1401 = vrot.lane.b32.xlu0 %v363, 72
      %v1402 = vpop.permute.xlu0 %1401
      %1403 = vrot.lane.b32.xlu0 %v364, 72
      %v1404 = vpop.permute.xlu0 %1403
      %1405 = vrot.lane.b32.xlu0 %v365, 72
      %v1406 = vpop.permute.xlu0 %1405
      %1407 = vrot.lane.b32.xlu0 %v366, 72
      %v1408 = vpop.permute.xlu0 %1407
      %1409 = vrot.lane.b32.xlu0 %v367, 72
      %v1410 = vpop.permute.xlu0 %1409
      %1411 = vrot.lane.b32.xlu0 %v368, 72
      %v1412 = vpop.permute.xlu0 %1411
      %1413 = vrot.lane.b32.xlu0 %v369, 72
      %v1414 = vpop.permute.xlu0 %1413
      %1415 = vrot.lane.b32.xlu0 %v370, 72
      %v1416 = vpop.permute.xlu0 %1415
      %1417 = vrot.lane.b32.xlu0 %v371, 72
      %v1418 = vpop.permute.xlu0 %1417
      %1419 = vrot.lane.b32.xlu0 %v372, 72
      %v1420 = vpop.permute.xlu0 %1419
      %1421 = vrot.lane.b32.xlu0 %v373, 72
      %v1422 = vpop.permute.xlu0 %1421
      %1423 = vrot.lane.b32.xlu0 %v374, 72
      %v1424 = vpop.permute.xlu0 %1423
      %1425 = vrot.lane.b32.xlu0 %v375, 72
      %v1426 = vpop.permute.xlu0 %1425
      %1427 = vrot.lane.b32.xlu0 %v376, 72
      %v1428 = vpop.permute.xlu0 %1427
      %1429 = vrot.lane.b32.xlu0 %v377, 72
      %v1430 = vpop.permute.xlu0 %1429
      %1431 = vrot.lane.b32.xlu0 %v378, 72
      %v1432 = vpop.permute.xlu0 %1431
      %1433 = vrot.lane.b32.xlu0 %v379, 72
      %v1434 = vpop.permute.xlu0 %1433
      %1435 = vrot.lane.b32.xlu0 %v380, 72
      %v1436 = vpop.permute.xlu0 %1435
      %1437 = vrot.lane.b32.xlu0 %v381, 72
      %v1438 = vpop.permute.xlu0 %1437
      %1439 = vrot.lane.b32.xlu0 %v382, 72
      %v1440 = vpop.permute.xlu0 %1439
      %1441 = vrot.lane.b32.xlu0 %v383, 72
      %v1442 = vpop.permute.xlu0 %1441
      %1443 = vrot.lane.b32.xlu0 %v384, 72
      %v1444 = vpop.permute.xlu0 %1443
      %1445 = vrot.lane.b32.xlu0 %v385, 72
      %v1446 = vpop.permute.xlu0 %1445
      %1447 = vrot.lane.b32.xlu0 %v386, 72
      %v1448 = vpop.permute.xlu0 %1447
      %1449 = vrot.lane.b32.xlu0 %v387, 72
      %v1450 = vpop.permute.xlu0 %1449
      %1451 = vrot.lane.b32.xlu0 %v388, 72
      %v1452 = vpop.permute.xlu0 %1451
      %1453 = vrot.lane.b32.xlu0 %v389, 72
      %v1454 = vpop.permute.xlu0 %1453
      %1455 = vrot.lane.b32.xlu0 %v390, 72
      %v1456 = vpop.permute.xlu0 %1455
      %1457 = vrot.lane.b32.xlu0 %v391, 72
      %v1458 = vpop.permute.xlu0 %1457
      %1459 = vrot.lane.b32.xlu0 %v392, 72
      %v1460 = vpop.permute.xlu0 %1459
      %1461 = vrot.lane.b32.xlu0 %v393, 72
      %v1462 = vpop.permute.xlu0 %1461
      %1463 = vrot.lane.b32.xlu0 %v394, 72
      %v1464 = vpop.permute.xlu0 %1463
      %1465 = vrot.lane.b32.xlu0 %v395, 72
      %v1466 = vpop.permute.xlu0 %1465
      %1467 = vrot.lane.b32.xlu0 %v396, 72
      %v1468 = vpop.permute.xlu0 %1467
      %1469 = vrot.lane.b32.xlu0 %v397, 72
      %v1470 = vpop.permute.xlu0 %1469
      %1471 = vrot.lane.b32.xlu0 %v398, 72
      %v1472 = vpop.permute.xlu0 %1471
      %1473 = vrot.lane.b32.xlu0 %v399, 72
      %v1474 = vpop.permute.xlu0 %1473
      %1475 = vrot.lane.b32.xlu0 %v400, 72
      %v1476 = vpop.permute.xlu0 %1475
      %1477 = vrot.lane.b32.xlu0 %v401, 72
      %v1478 = vpop.permute.xlu0 %1477
      %1479 = vrot.lane.b32.xlu0 %v402, 72
      %v1480 = vpop.permute.xlu0 %1479
      %1481 = vrot.lane.b32.xlu0 %v403, 72
      %v1482 = vpop.permute.xlu0 %1481
      %v1532 = vrot.slane %v402, 1
      %v1533 = vsel %vm454, %v1089, %v1532
      %v1534 = vrot.slane %v403, 1
      %v1535 = vsel %vm454, %v1532, %v1534
      %v1536 = vrot.slane %v404, 1
      %v1537 = vsel %vm454, %v1534, %v1536
      %1538 = vrot.lane.b32.xlu0 %v469, 84
      %v1539 = vpop.permute.xlu0 %1538
      %1540 = vrot.lane.b32.xlu0 %v471, 84
      %v1541 = vpop.permute.xlu0 %1540
      %1542 = vrot.lane.b32.xlu0 %v473, 84
      %v1543 = vpop.permute.xlu0 %1542
      %1544 = vrot.lane.b32.xlu0 %v475, 84
      %v1545 = vpop.permute.xlu0 %1544
      %1546 = vrot.lane.b32.xlu0 %v477, 84
      %v1547 = vpop.permute.xlu0 %1546
      %1548 = vrot.lane.b32.xlu0 %v479, 84
      %v1549 = vpop.permute.xlu0 %1548
      %1550 = vrot.lane.b32.xlu0 %v481, 84
      %v1551 = vpop.permute.xlu0 %1550
      %1552 = vrot.lane.b32.xlu0 %v483, 84
      %v1553 = vpop.permute.xlu0 %1552
      %1554 = vrot.lane.b32.xlu0 %v485, 84
      %v1555 = vpop.permute.xlu0 %1554
      %1556 = vrot.lane.b32.xlu0 %v487, 84
      %v1557 = vpop.permute.xlu0 %1556
      %1558 = vrot.lane.b32.xlu0 %v489, 84
      %v1559 = vpop.permute.xlu0 %1558
      %1560 = vrot.lane.b32.xlu0 %v491, 84
      %v1561 = vpop.permute.xlu0 %1560
      %1562 = vrot.lane.b32.xlu0 %v493, 84
      %v1563 = vpop.permute.xlu0 %1562
      %1564 = vrot.lane.b32.xlu0 %v495, 84
      %v1565 = vpop.permute.xlu0 %1564
      %1566 = vrot.lane.b32.xlu0 %v497, 84
      %v1567 = vpop.permute.xlu0 %1566
      %1568 = vrot.lane.b32.xlu0 %v499, 84
      %v1569 = vpop.permute.xlu0 %1568
      %1570 = vrot.lane.b32.xlu0 %v501, 84
      %v1571 = vpop.permute.xlu0 %1570
      %1572 = vrot.lane.b32.xlu0 %v503, 84
      %v1573 = vpop.permute.xlu0 %1572
      %1574 = vrot.lane.b32.xlu0 %v505, 84
      %v1575 = vpop.permute.xlu0 %1574
      %1576 = vrot.lane.b32.xlu0 %v507, 84
      %v1577 = vpop.permute.xlu0 %1576
      %1578 = vrot.lane.b32.xlu0 %v509, 84
      %v1579 = vpop.permute.xlu0 %1578
      %1580 = vrot.lane.b32.xlu0 %v511, 84
      %v1581 = vpop.permute.xlu0 %1580
      %1582 = vrot.lane.b32.xlu0 %v513, 84
      %v1583 = vpop.permute.xlu0 %1582
      %1584 = vrot.lane.b32.xlu0 %v515, 84
      %v1585 = vpop.permute.xlu0 %1584
      %1586 = vrot.lane.b32.xlu0 %v517, 84
      %v1587 = vpop.permute.xlu0 %1586
      %1588 = vrot.lane.b32.xlu0 %v519, 84
      %v1589 = vpop.permute.xlu0 %1588
      %1590 = vrot.lane.b32.xlu0 %v521, 84
      %v1591 = vpop.permute.xlu0 %1590
      %1592 = vrot.lane.b32.xlu0 %v523, 84
      %v1593 = vpop.permute.xlu0 %1592
      %1594 = vrot.lane.b32.xlu0 %v525, 84
      %v1595 = vpop.permute.xlu0 %1594
      %1596 = vrot.lane.b32.xlu0 %v527, 84
      %v1597 = vpop.permute.xlu0 %1596
      %1598 = vrot.lane.b32.xlu0 %v529, 84
      %v1599 = vpop.permute.xlu0 %1598
      %1600 = vrot.lane.b32.xlu0 %v531, 84
      %v1601 = vpop.permute.xlu0 %1600
      %1602 = vrot.lane.b32.xlu0 %v533, 84
      %v1603 = vpop.permute.xlu0 %1602
      %1604 = vrot.lane.b32.xlu0 %v535, 84
      %v1605 = vpop.permute.xlu0 %1604
      %1606 = vrot.lane.b32.xlu0 %v537, 84
      %v1607 = vpop.permute.xlu0 %1606
      %1608 = vrot.lane.b32.xlu0 %v539, 84
      %v1609 = vpop.permute.xlu0 %1608
      %1610 = vrot.lane.b32.xlu0 %v541, 84
      %v1611 = vpop.permute.xlu0 %1610
      %1612 = vrot.lane.b32.xlu0 %v543, 84
      %v1613 = vpop.permute.xlu0 %1612
      %1614 = vrot.lane.b32.xlu0 %v545, 84
      %v1615 = vpop.permute.xlu0 %1614
      %1616 = vrot.lane.b32.xlu0 %v547, 84
      %v1617 = vpop.permute.xlu0 %1616
      %1618 = vrot.lane.b32.xlu0 %v549, 84
      %v1619 = vpop.permute.xlu0 %1618
      %1620 = vrot.lane.b32.xlu0 %v551, 84
      %v1621 = vpop.permute.xlu0 %1620
      %1622 = vrot.lane.b32.xlu0 %v1086, 84
      %v1623 = vpop.permute.xlu0 %1622
      %1624 = vrot.lane.b32.xlu0 %v1088, 84
      %v1625 = vpop.permute.xlu0 %1624
      %1626 = vrot.lane.b32.xlu0 %v1090, 84
      %v1627 = vpop.permute.xlu0 %1626
      %1628 = vrot.lane.b32.xlu0 %v1533, 84
      %v1629 = vpop.permute.xlu0 %1628
      %1630 = vrot.lane.b32.xlu0 %v1535, 84
      %v1631 = vpop.permute.xlu0 %1630
      %1632 = vrot.lane.b32.xlu0 %v1537, 84
      %v1633 = vpop.permute.xlu0 %1632
      %v1682 = vrot.slane %v402, 2
      %v1683 = vsel %vm696, %v1239, %v1682
      %v1684 = vrot.slane %v403, 2
      %v1685 = vsel %vm696, %v1682, %v1684
      %v1686 = vrot.slane %v404, 2
      %v1687 = vsel %vm696, %v1684, %v1686
      %1688 = vrot.lane.b32.xlu0 %v711, 96
      %v1689 = vpop.permute.xlu0 %1688
      %1690 = vrot.lane.b32.xlu0 %v713, 96
      %v1691 = vpop.permute.xlu0 %1690
      %1692 = vrot.lane.b32.xlu0 %v715, 96
      %v1693 = vpop.permute.xlu0 %1692
      %1694 = vrot.lane.b32.xlu0 %v717, 96
      %v1695 = vpop.permute.xlu0 %1694
      %1696 = vrot.lane.b32.xlu0 %v719, 96
      %v1697 = vpop.permute.xlu0 %1696
      %1698 = vrot.lane.b32.xlu0 %v721, 96
      %v1699 = vpop.permute.xlu0 %1698
      %1700 = vrot.lane.b32.xlu0 %v723, 96
      %v1701 = vpop.permute.xlu0 %1700
      %1702 = vrot.lane.b32.xlu0 %v725, 96
      %v1703 = vpop.permute.xlu0 %1702
      %1704 = vrot.lane.b32.xlu0 %v727, 96
      %v1705 = vpop.permute.xlu0 %1704
      %1706 = vrot.lane.b32.xlu0 %v729, 96
      %v1707 = vpop.permute.xlu0 %1706
      %1708 = vrot.lane.b32.xlu0 %v731, 96
      %v1709 = vpop.permute.xlu0 %1708
      %1710 = vrot.lane.b32.xlu0 %v733, 96
      %v1711 = vpop.permute.xlu0 %1710
      %1712 = vrot.lane.b32.xlu0 %v735, 96
      %v1713 = vpop.permute.xlu0 %1712
      %1714 = vrot.lane.b32.xlu0 %v737, 96
      %v1715 = vpop.permute.xlu0 %1714
      %1716 = vrot.lane.b32.xlu0 %v739, 96
      %v1717 = vpop.permute.xlu0 %1716
      %1718 = vrot.lane.b32.xlu0 %v741, 96
      %v1719 = vpop.permute.xlu0 %1718
      %1720 = vrot.lane.b32.xlu0 %v743, 96
      %v1721 = vpop.permute.xlu0 %1720
      %1722 = vrot.lane.b32.xlu0 %v745, 96
      %v1723 = vpop.permute.xlu0 %1722
      %1724 = vrot.lane.b32.xlu0 %v747, 96
      %v1725 = vpop.permute.xlu0 %1724
      %1726 = vrot.lane.b32.xlu0 %v749, 96
      %v1727 = vpop.permute.xlu0 %1726
      %1728 = vrot.lane.b32.xlu0 %v751, 96
      %v1729 = vpop.permute.xlu0 %1728
      %1730 = vrot.lane.b32.xlu0 %v753, 96
      %v1731 = vpop.permute.xlu0 %1730
      %1732 = vrot.lane.b32.xlu0 %v755, 96
      %v1733 = vpop.permute.xlu0 %1732
      %1734 = vrot.lane.b32.xlu0 %v757, 96
      %v1735 = vpop.permute.xlu0 %1734
      %1736 = vrot.lane.b32.xlu0 %v759, 96
      %v1737 = vpop.permute.xlu0 %1736
      %1738 = vrot.lane.b32.xlu0 %v761, 96
      %v1739 = vpop.permute.xlu0 %1738
      %1740 = vrot.lane.b32.xlu0 %v763, 96
      %v1741 = vpop.permute.xlu0 %1740
      %1742 = vrot.lane.b32.xlu0 %v765, 96
      %v1743 = vpop.permute.xlu0 %1742
      %1744 = vrot.lane.b32.xlu0 %v767, 96
      %v1745 = vpop.permute.xlu0 %1744
      %1746 = vrot.lane.b32.xlu0 %v769, 96
      %v1747 = vpop.permute.xlu0 %1746
      %1748 = vrot.lane.b32.xlu0 %v771, 96
      %v1749 = vpop.permute.xlu0 %1748
      %1750 = vrot.lane.b32.xlu0 %v773, 96
      %v1751 = vpop.permute.xlu0 %1750
      %1752 = vrot.lane.b32.xlu0 %v775, 96
      %v1753 = vpop.permute.xlu0 %1752
      %1754 = vrot.lane.b32.xlu0 %v777, 96
      %v1755 = vpop.permute.xlu0 %1754
      %1756 = vrot.lane.b32.xlu0 %v779, 96
      %v1757 = vpop.permute.xlu0 %1756
      %1758 = vrot.lane.b32.xlu0 %v781, 96
      %v1759 = vpop.permute.xlu0 %1758
      %1760 = vrot.lane.b32.xlu0 %v783, 96
      %v1761 = vpop.permute.xlu0 %1760
      %1762 = vrot.lane.b32.xlu0 %v785, 96
      %v1763 = vpop.permute.xlu0 %1762
      %1764 = vrot.lane.b32.xlu0 %v787, 96
      %v1765 = vpop.permute.xlu0 %1764
      %1766 = vrot.lane.b32.xlu0 %v789, 96
      %v1767 = vpop.permute.xlu0 %1766
      %1768 = vrot.lane.b32.xlu0 %v791, 96
      %v1769 = vpop.permute.xlu0 %1768
      %1770 = vrot.lane.b32.xlu0 %v793, 96
      %v1771 = vpop.permute.xlu0 %1770
      %1772 = vrot.lane.b32.xlu0 %v1236, 96
      %v1773 = vpop.permute.xlu0 %1772
      %1774 = vrot.lane.b32.xlu0 %v1238, 96
      %v1775 = vpop.permute.xlu0 %1774
      %1776 = vrot.lane.b32.xlu0 %v1240, 96
      %v1777 = vpop.permute.xlu0 %1776
      %1778 = vrot.lane.b32.xlu0 %v1683, 96
      %v1779 = vpop.permute.xlu0 %1778
      %1780 = vrot.lane.b32.xlu0 %v1685, 96
      %v1781 = vpop.permute.xlu0 %1780
      %1782 = vrot.lane.b32.xlu0 %v1687, 96
      %v1783 = vpop.permute.xlu0 %1782
      %vm1832 = vcmask 97280
      %v1833 = vsel %vm1832, %v350, %v553
      %v1834 = vsel %vm1832, %v351, %v555
      %v1835 = vsel %vm1832, %v352, %v557
      %v1836 = vsel %vm1832, %v353, %v559
      %v1837 = vsel %vm1832, %v354, %v561
      %v1838 = vsel %vm1832, %v355, %v563
      %v1839 = vsel %vm1832, %v356, %v565
      %v1840 = vsel %vm1832, %v357, %v567
      %v1841 = vsel %vm1832, %v358, %v569
      %v1842 = vsel %vm1832, %v359, %v571
      %v1843 = vsel %vm1832, %v360, %v573
      %v1844 = vsel %vm1832, %v361, %v575
      %v1845 = vsel %vm1832, %v362, %v577
      %v1846 = vsel %vm1832, %v363, %v579
      %v1847 = vsel %vm1832, %v364, %v581
      %v1848 = vsel %vm1832, %v365, %v583
      %v1849 = vsel %vm1832, %v366, %v585
      %v1850 = vsel %vm1832, %v367, %v587
      %v1851 = vsel %vm1832, %v368, %v589
      %v1852 = vsel %vm1832, %v369, %v591
      %v1853 = vsel %vm1832, %v370, %v593
      %v1854 = vsel %vm1832, %v371, %v595
      %v1855 = vsel %vm1832, %v372, %v597
      %v1856 = vsel %vm1832, %v373, %v599
      %v1857 = vsel %vm1832, %v374, %v601
      %v1858 = vsel %vm1832, %v375, %v603
      %v1859 = vsel %vm1832, %v376, %v605
      %v1860 = vsel %vm1832, %v377, %v607
      %v1861 = vsel %vm1832, %v378, %v609
      %v1862 = vsel %vm1832, %v379, %v611
      %v1863 = vsel %vm1832, %v380, %v613
      %v1864 = vsel %vm1832, %v381, %v615
      %v1865 = vsel %vm1832, %v382, %v617
      %v1866 = vsel %vm1832, %v383, %v619
      %v1867 = vsel %vm1832, %v384, %v621
      %v1868 = vsel %vm1832, %v385, %v623
      %v1869 = vsel %vm1832, %v386, %v625
      %v1870 = vsel %vm1832, %v387, %v627
      %v1871 = vsel %vm1832, %v388, %v629
      %v1872 = vsel %vm1832, %v389, %v631
      %v1873 = vsel %vm1832, %v390, %v633
      %v1874 = vsel %vm1832, %v391, %v635
      %v1875 = vsel %vm1832, %v392, %v637
      %v1876 = vsel %vm1832, %v393, %v639
      %v1877 = vsel %vm1832, %v394, %v641
      %v1878 = vsel %vm1832, %v395, %v643
      %v1879 = vsel %vm1832, %v396, %v645
      %v1880 = vsel %vm1832, %v397, %v647
      %vm1881 = vcmask 195584
      %v1882 = vsel %vm1881, %v1833, %v795
      %v1883 = vsel %vm1881, %v1834, %v797
      %v1884 = vsel %vm1881, %v1835, %v799
      %v1885 = vsel %vm1881, %v1836, %v801
      %v1886 = vsel %vm1881, %v1837, %v803
      %v1887 = vsel %vm1881, %v1838, %v805
      %v1888 = vsel %vm1881, %v1839, %v807
      %v1889 = vsel %vm1881, %v1840, %v809
      %v1890 = vsel %vm1881, %v1841, %v811
      %v1891 = vsel %vm1881, %v1842, %v813
      %v1892 = vsel %vm1881, %v1843, %v815
      %v1893 = vsel %vm1881, %v1844, %v817
      %v1894 = vsel %vm1881, %v1845, %v819
      %v1895 = vsel %vm1881, %v1846, %v821
      %v1896 = vsel %vm1881, %v1847, %v823
      %v1897 = vsel %vm1881, %v1848, %v825
      %v1898 = vsel %vm1881, %v1849, %v827
      %v1899 = vsel %vm1881, %v1850, %v829
      %v1900 = vsel %vm1881, %v1851, %v831
      %v1901 = vsel %vm1881, %v1852, %v833
      %v1902 = vsel %vm1881, %v1853, %v835
      %v1903 = vsel %vm1881, %v1854, %v837
      %v1904 = vsel %vm1881, %v1855, %v839
      %v1905 = vsel %vm1881, %v1856, %v841
      %v1906 = vsel %vm1881, %v1857, %v843
      %v1907 = vsel %vm1881, %v1858, %v845
      %v1908 = vsel %vm1881, %v1859, %v847
      %v1909 = vsel %vm1881, %v1860, %v849
      %v1910 = vsel %vm1881, %v1861, %v851
      %v1911 = vsel %vm1881, %v1862, %v853
      %v1912 = vsel %vm1881, %v1863, %v855
      %v1913 = vsel %vm1881, %v1864, %v857
      %v1914 = vsel %vm1881, %v1865, %v859
      %v1915 = vsel %vm1881, %v1866, %v861
      %v1916 = vsel %vm1881, %v1867, %v863
      %v1917 = vsel %vm1881, %v1868, %v865
      %v1918 = vsel %vm1881, %v1869, %v867
      %v1919 = vsel %vm1881, %v1870, %v869
      %v1920 = vsel %vm1881, %v1871, %v871
      %v1921 = vsel %vm1881, %v1872, %v873
      %v1922 = vsel %vm1881, %v1873, %v875
      %v1923 = vsel %vm1881, %v1874, %v877
      %v1924 = vsel %vm1881, %v1875, %v879
      %v1925 = vsel %vm1881, %v1876, %v881
      %v1926 = vsel %vm1881, %v1877, %v883
      %v1927 = vsel %vm1881, %v1878, %v885
      %v1928 = vsel %vm1881, %v1879, %v887
      %v1929 = vsel %vm1881, %v1880, %v889
      %vm1930 = vcmask 293888
      %v1931 = vsel %vm1930, %v1882, %v941
      %v1932 = vsel %vm1930, %v1883, %v943
      %v1933 = vsel %vm1930, %v1884, %v945
      %v1934 = vsel %vm1930, %v1885, %v947
      %v1935 = vsel %vm1930, %v1886, %v949
      %v1936 = vsel %vm1930, %v1887, %v951
      %v1937 = vsel %vm1930, %v1888, %v953
      %v1938 = vsel %vm1930, %v1889, %v955
      %v1939 = vsel %vm1930, %v1890, %v957
      %v1940 = vsel %vm1930, %v1891, %v959
      %v1941 = vsel %vm1930, %v1892, %v961
      %v1942 = vsel %vm1930, %v1893, %v963
      %v1943 = vsel %vm1930, %v1894, %v965
      %v1944 = vsel %vm1930, %v1895, %v967
      %v1945 = vsel %vm1930, %v1896, %v969
      %v1946 = vsel %vm1930, %v1897, %v971
      %v1947 = vsel %vm1930, %v1898, %v973
      %v1948 = vsel %vm1930, %v1899, %v975
      %v1949 = vsel %vm1930, %v1900, %v977
      %v1950 = vsel %vm1930, %v1901, %v979
      %v1951 = vsel %vm1930, %v1902, %v981
      %v1952 = vsel %vm1930, %v1903, %v983
      %v1953 = vsel %vm1930, %v1904, %v985
      %v1954 = vsel %vm1930, %v1905, %v987
      %v1955 = vsel %vm1930, %v1906, %v989
      %v1956 = vsel %vm1930, %v1907, %v991
      %v1957 = vsel %vm1930, %v1908, %v993
      %v1958 = vsel %vm1930, %v1909, %v995
      %v1959 = vsel %vm1930, %v1910, %v997
      %v1960 = vsel %vm1930, %v1911, %v999
      %v1961 = vsel %vm1930, %v1912, %v1001
      %v1962 = vsel %vm1930, %v1913, %v1003
      %v1963 = vsel %vm1930, %v1914, %v1005
      %v1964 = vsel %vm1930, %v1915, %v1007
      %v1965 = vsel %vm1930, %v1916, %v1009
      %v1966 = vsel %vm1930, %v1917, %v1011
      %v1967 = vsel %vm1930, %v1918, %v1013
      %v1968 = vsel %vm1930, %v1919, %v1015
      %v1969 = vsel %vm1930, %v1920, %v1017
      %v1970 = vsel %vm1930, %v1921, %v1019
      %v1971 = vsel %vm1930, %v1922, %v1021
      %v1972 = vsel %vm1930, %v1923, %v1023
      %v1973 = vsel %vm1930, %v1924, %v1025
      %v1974 = vsel %vm1930, %v1925, %v1027
      %v1975 = vsel %vm1930, %v1926, %v1029
      %v1976 = vsel %vm1930, %v1927, %v1031
      %v1977 = vsel %vm1930, %v1928, %v1033
      %v1978 = vsel %vm1930, %v1929, %v1035
      %vm1979 = vcmask 392192
      %v1980 = vsel %vm1979, %v1931, %v1092
      %v1981 = vsel %vm1979, %v1932, %v1094
      %v1982 = vsel %vm1979, %v1933, %v1096
      %v1983 = vsel %vm1979, %v1934, %v1098
      %v1984 = vsel %vm1979, %v1935, %v1100
      %v1985 = vsel %vm1979, %v1936, %v1102
      %v1986 = vsel %vm1979, %v1937, %v1104
      %v1987 = vsel %vm1979, %v1938, %v1106
      %v1988 = vsel %vm1979, %v1939, %v1108
      %v1989 = vsel %vm1979, %v1940, %v1110
      %v1990 = vsel %vm1979, %v1941, %v1112
      %v1991 = vsel %vm1979, %v1942, %v1114
      %v1992 = vsel %vm1979, %v1943, %v1116
      %v1993 = vsel %vm1979, %v1944, %v1118
      %v1994 = vsel %vm1979, %v1945, %v1120
      %v1995 = vsel %vm1979, %v1946, %v1122
      %v1996 = vsel %vm1979, %v1947, %v1124
      %v1997 = vsel %vm1979, %v1948, %v1126
      %v1998 = vsel %vm1979, %v1949, %v1128
      %v1999 = vsel %vm1979, %v1950, %v1130
      %v2000 = vsel %vm1979, %v1951, %v1132
      %v2001 = vsel %vm1979, %v1952, %v1134
      %v2002 = vsel %vm1979, %v1953, %v1136
      %v2003 = vsel %vm1979, %v1954, %v1138
      %v2004 = vsel %vm1979, %v1955, %v1140
      %v2005 = vsel %vm1979, %v1956, %v1142
      %v2006 = vsel %vm1979, %v1957, %v1144
      %v2007 = vsel %vm1979, %v1958, %v1146
      %v2008 = vsel %vm1979, %v1959, %v1148
      %v2009 = vsel %vm1979, %v1960, %v1150
      %v2010 = vsel %vm1979, %v1961, %v1152
      %v2011 = vsel %vm1979, %v1962, %v1154
      %v2012 = vsel %vm1979, %v1963, %v1156
      %v2013 = vsel %vm1979, %v1964, %v1158
      %v2014 = vsel %vm1979, %v1965, %v1160
      %v2015 = vsel %vm1979, %v1966, %v1162
      %v2016 = vsel %vm1979, %v1967, %v1164
      %v2017 = vsel %vm1979, %v1968, %v1166
      %v2018 = vsel %vm1979, %v1969, %v1168
      %v2019 = vsel %vm1979, %v1970, %v1170
      %v2020 = vsel %vm1979, %v1971, %v1172
      %v2021 = vsel %vm1979, %v1972, %v1174
      %v2022 = vsel %vm1979, %v1973, %v1176
      %v2023 = vsel %vm1979, %v1974, %v1178
      %v2024 = vsel %vm1979, %v1975, %v1180
      %v2025 = vsel %vm1979, %v1976, %v1182
      %v2026 = vsel %vm1979, %v1977, %v1184
      %v2027 = vsel %vm1979, %v1978, %v1186
      %vm2028 = vcmask 490496
      %v2029 = vsel %vm2028, %v1980, %v1242
      %v2030 = vsel %vm2028, %v1981, %v1244
      %v2031 = vsel %vm2028, %v1982, %v1246
      %v2032 = vsel %vm2028, %v1983, %v1248
      %v2033 = vsel %vm2028, %v1984, %v1250
      %v2034 = vsel %vm2028, %v1985, %v1252
      %v2035 = vsel %vm2028, %v1986, %v1254
      %v2036 = vsel %vm2028, %v1987, %v1256
      %v2037 = vsel %vm2028, %v1988, %v1258
      %v2038 = vsel %vm2028, %v1989, %v1260
      %v2039 = vsel %vm2028, %v1990, %v1262
      %v2040 = vsel %vm2028, %v1991, %v1264
      %v2041 = vsel %vm2028, %v1992, %v1266
      %v2042 = vsel %vm2028, %v1993, %v1268
      %v2043 = vsel %vm2028, %v1994, %v1270
      %v2044 = vsel %vm2028, %v1995, %v1272
      %v2045 = vsel %vm2028, %v1996, %v1274
      %v2046 = vsel %vm2028, %v1997, %v1276
      %v2047 = vsel %vm2028, %v1998, %v1278
      %v2048 = vsel %vm2028, %v1999, %v1280
      %v2049 = vsel %vm2028, %v2000, %v1282
      %v2050 = vsel %vm2028, %v2001, %v1284
      %v2051 = vsel %vm2028, %v2002, %v1286
      %v2052 = vsel %vm2028, %v2003, %v1288
      %v2053 = vsel %vm2028, %v2004, %v1290
      %v2054 = vsel %vm2028, %v2005, %v1292
      %v2055 = vsel %vm2028, %v2006, %v1294
      %v2056 = vsel %vm2028, %v2007, %v1296
      %v2057 = vsel %vm2028, %v2008, %v1298
      %v2058 = vsel %vm2028, %v2009, %v1300
      %v2059 = vsel %vm2028, %v2010, %v1302
      %v2060 = vsel %vm2028, %v2011, %v1304
      %v2061 = vsel %vm2028, %v2012, %v1306
      %v2062 = vsel %vm2028, %v2013, %v1308
      %v2063 = vsel %vm2028, %v2014, %v1310
      %v2064 = vsel %vm2028, %v2015, %v1312
      %v2065 = vsel %vm2028, %v2016, %v1314
      %v2066 = vsel %vm2028, %v2017, %v1316
      %v2067 = vsel %vm2028, %v2018, %v1318
      %v2068 = vsel %vm2028, %v2019, %v1320
      %v2069 = vsel %vm2028, %v2020, %v1322
      %v2070 = vsel %vm2028, %v2021, %v1324
      %v2071 = vsel %vm2028, %v2022, %v1326
      %v2072 = vsel %vm2028, %v2023, %v1328
      %v2073 = vsel %vm2028, %v2024, %v1330
      %v2074 = vsel %vm2028, %v2025, %v1332
      %v2075 = vsel %vm2028, %v2026, %v1334
      %v2076 = vsel %vm2028, %v2027, %v1336
      %vm2077 = vcmask 588800
      %v2078 = vsel %vm2077, %v2029, %v1388
      %v2079 = vsel %vm2077, %v2030, %v1390
      %v2080 = vsel %vm2077, %v2031, %v1392
      %v2081 = vsel %vm2077, %v2032, %v1394
      %v2082 = vsel %vm2077, %v2033, %v1396
      %v2083 = vsel %vm2077, %v2034, %v1398
      %v2084 = vsel %vm2077, %v2035, %v1400
      %v2085 = vsel %vm2077, %v2036, %v1402
      %v2086 = vsel %vm2077, %v2037, %v1404
      %v2087 = vsel %vm2077, %v2038, %v1406
      %v2088 = vsel %vm2077, %v2039, %v1408
      %v2089 = vsel %vm2077, %v2040, %v1410
      %v2090 = vsel %vm2077, %v2041, %v1412
      %v2091 = vsel %vm2077, %v2042, %v1414
      %v2092 = vsel %vm2077, %v2043, %v1416
      %v2093 = vsel %vm2077, %v2044, %v1418
      %v2094 = vsel %vm2077, %v2045, %v1420
      %v2095 = vsel %vm2077, %v2046, %v1422
      %v2096 = vsel %vm2077, %v2047, %v1424
      %v2097 = vsel %vm2077, %v2048, %v1426
      %v2098 = vsel %vm2077, %v2049, %v1428
      %v2099 = vsel %vm2077, %v2050, %v1430
      %v2100 = vsel %vm2077, %v2051, %v1432
      %v2101 = vsel %vm2077, %v2052, %v1434
      %v2102 = vsel %vm2077, %v2053, %v1436
      %v2103 = vsel %vm2077, %v2054, %v1438
      %v2104 = vsel %vm2077, %v2055, %v1440
      %v2105 = vsel %vm2077, %v2056, %v1442
      %v2106 = vsel %vm2077, %v2057, %v1444
      %v2107 = vsel %vm2077, %v2058, %v1446
      %v2108 = vsel %vm2077, %v2059, %v1448
      %v2109 = vsel %vm2077, %v2060, %v1450
      %v2110 = vsel %vm2077, %v2061, %v1452
      %v2111 = vsel %vm2077, %v2062, %v1454
      %v2112 = vsel %vm2077, %v2063, %v1456
      %v2113 = vsel %vm2077, %v2064, %v1458
      %v2114 = vsel %vm2077, %v2065, %v1460
      %v2115 = vsel %vm2077, %v2066, %v1462
      %v2116 = vsel %vm2077, %v2067, %v1464
      %v2117 = vsel %vm2077, %v2068, %v1466
      %v2118 = vsel %vm2077, %v2069, %v1468
      %v2119 = vsel %vm2077, %v2070, %v1470
      %v2120 = vsel %vm2077, %v2071, %v1472
      %v2121 = vsel %vm2077, %v2072, %v1474
      %v2122 = vsel %vm2077, %v2073, %v1476
      %v2123 = vsel %vm2077, %v2074, %v1478
      %v2124 = vsel %vm2077, %v2075, %v1480
      %v2125 = vsel %vm2077, %v2076, %v1482
      %vm2126 = vcmask 687104
      %v2127 = vsel %vm2126, %v2078, %v1539
      %v2128 = vsel %vm2126, %v2079, %v1541
      %v2129 = vsel %vm2126, %v2080, %v1543
      %v2130 = vsel %vm2126, %v2081, %v1545
      %v2131 = vsel %vm2126, %v2082, %v1547
      %v2132 = vsel %vm2126, %v2083, %v1549
      %v2133 = vsel %vm2126, %v2084, %v1551
      %v2134 = vsel %vm2126, %v2085, %v1553
      %v2135 = vsel %vm2126, %v2086, %v1555
      %v2136 = vsel %vm2126, %v2087, %v1557
      %v2137 = vsel %vm2126, %v2088, %v1559
      %v2138 = vsel %vm2126, %v2089, %v1561
      %v2139 = vsel %vm2126, %v2090, %v1563
      %v2140 = vsel %vm2126, %v2091, %v1565
      %v2141 = vsel %vm2126, %v2092, %v1567
      %v2142 = vsel %vm2126, %v2093, %v1569
      %v2143 = vsel %vm2126, %v2094, %v1571
      %v2144 = vsel %vm2126, %v2095, %v1573
      %v2145 = vsel %vm2126, %v2096, %v1575
      %v2146 = vsel %vm2126, %v2097, %v1577
      %v2147 = vsel %vm2126, %v2098, %v1579
      %v2148 = vsel %vm2126, %v2099, %v1581
      %v2149 = vsel %vm2126, %v2100, %v1583
      %v2150 = vsel %vm2126, %v2101, %v1585
      %v2151 = vsel %vm2126, %v2102, %v1587
      %v2152 = vsel %vm2126, %v2103, %v1589
      %v2153 = vsel %vm2126, %v2104, %v1591
      %v2154 = vsel %vm2126, %v2105, %v1593
      %v2155 = vsel %vm2126, %v2106, %v1595
      %v2156 = vsel %vm2126, %v2107, %v1597
      %v2157 = vsel %vm2126, %v2108, %v1599
      %v2158 = vsel %vm2126, %v2109, %v1601
      %v2159 = vsel %vm2126, %v2110, %v1603
      %v2160 = vsel %vm2126, %v2111, %v1605
      %v2161 = vsel %vm2126, %v2112, %v1607
      %v2162 = vsel %vm2126, %v2113, %v1609
      %v2163 = vsel %vm2126, %v2114, %v1611
      %v2164 = vsel %vm2126, %v2115, %v1613
      %v2165 = vsel %vm2126, %v2116, %v1615
      %v2166 = vsel %vm2126, %v2117, %v1617
      %v2167 = vsel %vm2126, %v2118, %v1619
      %v2168 = vsel %vm2126, %v2119, %v1621
      %v2169 = vsel %vm2126, %v2120, %v1623
      %v2170 = vsel %vm2126, %v2121, %v1625
      %v2171 = vsel %vm2126, %v2122, %v1627
      %v2172 = vsel %vm2126, %v2123, %v1629
      %v2173 = vsel %vm2126, %v2124, %v1631
      %v2174 = vsel %vm2126, %v2125, %v1633
      %vm2175 = vcmask 785408
      %v2176 = vsel %vm2175, %v2127, %v1689
      %v2177 = vsel %vm2175, %v2128, %v1691
      %v2178 = vsel %vm2175, %v2129, %v1693
      %v2179 = vsel %vm2175, %v2130, %v1695
      %v2180 = vsel %vm2175, %v2131, %v1697
      %v2181 = vsel %vm2175, %v2132, %v1699
      %v2182 = vsel %vm2175, %v2133, %v1701
      %v2183 = vsel %vm2175, %v2134, %v1703
      %v2184 = vsel %vm2175, %v2135, %v1705
      %v2185 = vsel %vm2175, %v2136, %v1707
      %v2186 = vsel %vm2175, %v2137, %v1709
      %v2187 = vsel %vm2175, %v2138, %v1711
      %v2188 = vsel %vm2175, %v2139, %v1713
      %v2189 = vsel %vm2175, %v2140, %v1715
      %v2190 = vsel %vm2175, %v2141, %v1717
      %v2191 = vsel %vm2175, %v2142, %v1719
      %v2192 = vsel %vm2175, %v2143, %v1721
      %v2193 = vsel %vm2175, %v2144, %v1723
      %v2194 = vsel %vm2175, %v2145, %v1725
      %v2195 = vsel %vm2175, %v2146, %v1727
      %v2196 = vsel %vm2175, %v2147, %v1729
      %v2197 = vsel %vm2175, %v2148, %v1731
      %v2198 = vsel %vm2175, %v2149, %v1733
      %v2199 = vsel %vm2175, %v2150, %v1735
      %v2200 = vsel %vm2175, %v2151, %v1737
      %v2201 = vsel %vm2175, %v2152, %v1739
      %v2202 = vsel %vm2175, %v2153, %v1741
      %v2203 = vsel %vm2175, %v2154, %v1743
      %v2204 = vsel %vm2175, %v2155, %v1745
      %v2205 = vsel %vm2175, %v2156, %v1747
      %v2206 = vsel %vm2175, %v2157, %v1749
      %v2207 = vsel %vm2175, %v2158, %v1751
      %v2208 = vsel %vm2175, %v2159, %v1753
      %v2209 = vsel %vm2175, %v2160, %v1755
      %v2210 = vsel %vm2175, %v2161, %v1757
      %v2211 = vsel %vm2175, %v2162, %v1759
      %v2212 = vsel %vm2175, %v2163, %v1761
      %v2213 = vsel %vm2175, %v2164, %v1763
      %v2214 = vsel %vm2175, %v2165, %v1765
      %v2215 = vsel %vm2175, %v2166, %v1767
      %v2216 = vsel %vm2175, %v2167, %v1769
      %v2217 = vsel %vm2175, %v2168, %v1771
      %v2218 = vsel %vm2175, %v2169, %v1773
      %v2219 = vsel %vm2175, %v2170, %v1775
      %v2220 = vsel %vm2175, %v2171, %v1777
      %v2221 = vsel %vm2175, %v2172, %v1779
      %v2222 = vsel %vm2175, %v2173, %v1781
      %v2223 = vsel %vm2175, %v2174, %v1783
      %vm2224 = vcmask 883712
      %v2225 = vsel %vm2224, %v2176, 1.0
      %v2226 = vsel %vm2224, %v2177, 1.0
      %v2227 = vsel %vm2224, %v2178, 1.0
      %v2228 = vsel %vm2224, %v2179, 1.0
      %v2229 = vsel %vm2224, %v2180, 1.0
      %v2230 = vsel %vm2224, %v2181, 1.0
      %v2231 = vsel %vm2224, %v2182, 1.0
      %v2232 = vsel %vm2224, %v2183, 1.0
      %v2233 = vsel %vm2224, %v2184, 1.0
      %v2234 = vsel %vm2224, %v2185, 1.0
      %v2235 = vsel %vm2224, %v2186, 1.0
      %v2236 = vsel %vm2224, %v2187, 1.0
      %v2237 = vsel %vm2224, %v2188, 1.0
      %v2238 = vsel %vm2224, %v2189, 1.0
      %v2239 = vsel %vm2224, %v2190, 1.0
      %v2240 = vsel %vm2224, %v2191, 1.0
      %v2241 = vsel %vm2224, %v2192, 1.0
      %v2242 = vsel %vm2224, %v2193, 1.0
      %v2243 = vsel %vm2224, %v2194, 1.0
      %v2244 = vsel %vm2224, %v2195, 1.0
      %v2245 = vsel %vm2224, %v2196, 1.0
      %v2246 = vsel %vm2224, %v2197, 1.0
      %v2247 = vsel %vm2224, %v2198, 1.0
      %v2248 = vsel %vm2224, %v2199, 1.0
      %v2249 = vsel %vm2224, %v2200, 1.0
      %v2250 = vsel %vm2224, %v2201, 1.0
      %v2251 = vsel %vm2224, %v2202, 1.0
      %v2252 = vsel %vm2224, %v2203, 1.0
      %v2253 = vsel %vm2224, %v2204, 1.0
      %v2254 = vsel %vm2224, %v2205, 1.0
      %v2255 = vsel %vm2224, %v2206, 1.0
      %v2256 = vsel %vm2224, %v2207, 1.0
      %v2257 = vsel %vm2224, %v2208, 1.0
      %v2258 = vsel %vm2224, %v2209, 1.0
      %v2259 = vsel %vm2224, %v2210, 1.0
      %v2260 = vsel %vm2224, %v2211, 1.0
      %v2261 = vsel %vm2224, %v2212, 1.0
      %v2262 = vsel %vm2224, %v2213, 1.0
      %v2263 = vsel %vm2224, %v2214, 1.0
      %v2264 = vsel %vm2224, %v2215, 1.0
      %v2265 = vsel %vm2224, %v2216, 1.0
      %v2266 = vsel %vm2224, %v2217, 1.0
      %v2267 = vsel %vm2224, %v2218, 1.0
      %v2268 = vsel %vm2224, %v2219, 1.0
      %v2269 = vsel %vm2224, %v2220, 1.0
      %v2270 = vsel %vm2224, %v2221, 1.0
      %v2271 = vsel %vm2224, %v2222, 1.0
      %v2272 = vsel %vm2224, %v2223, 1.0
      %vm2273 = vcmask 891904
      %v2274 = vsel %vm2273, %v2225, 0.0
      %v2275 = vsel %vm2273, %v2226, 0.0
      %v2276 = vsel %vm2273, %v2227, 0.0
      %v2277 = vsel %vm2273, %v2228, 0.0
      %v2278 = vsel %vm2273, %v2229, 0.0
      %v2279 = vsel %vm2273, %v2230, 0.0
      %v2280 = vsel %vm2273, %v2231, 0.0
      %v2281 = vsel %vm2273, %v2232, 0.0
      %v2282 = vsel %vm2273, %v2233, 0.0
      %v2283 = vsel %vm2273, %v2234, 0.0
      %v2284 = vsel %vm2273, %v2235, 0.0
      %v2285 = vsel %vm2273, %v2236, 0.0
      %v2286 = vsel %vm2273, %v2237, 0.0
      %v2287 = vsel %vm2273, %v2238, 0.0
      %v2288 = vsel %vm2273, %v2239, 0.0
      %v2289 = vsel %vm2273, %v2240, 0.0
      %v2290 = vsel %vm2273, %v2241, 0.0
      %v2291 = vsel %vm2273, %v2242, 0.0
      %v2292 = vsel %vm2273, %v2243, 0.0
      %v2293 = vsel %vm2273, %v2244, 0.0
      %v2294 = vsel %vm2273, %v2245, 0.0
      %v2295 = vsel %vm2273, %v2246, 0.0
      %v2296 = vsel %vm2273, %v2247, 0.0
      %v2297 = vsel %vm2273, %v2248, 0.0
      %v2298 = vsel %vm2273, %v2249, 0.0
      %v2299 = vsel %vm2273, %v2250, 0.0
      %v2300 = vsel %vm2273, %v2251, 0.0
      %v2301 = vsel %vm2273, %v2252, 0.0
      %v2302 = vsel %vm2273, %v2253, 0.0
      %v2303 = vsel %vm2273, %v2254, 0.0
      %v2304 = vsel %vm2273, %v2255, 0.0
      %v2305 = vsel %vm2273, %v2256, 0.0
      %v2306 = vsel %vm2273, %v2257, 0.0
      %v2307 = vsel %vm2273, %v2258, 0.0
      %v2308 = vsel %vm2273, %v2259, 0.0
      %v2309 = vsel %vm2273, %v2260, 0.0
      %v2310 = vsel %vm2273, %v2261, 0.0
      %v2311 = vsel %vm2273, %v2262, 0.0
      %v2312 = vsel %vm2273, %v2263, 0.0
      %v2313 = vsel %vm2273, %v2264, 0.0
      %v2314 = vsel %vm2273, %v2265, 0.0
      %v2315 = vsel %vm2273, %v2266, 0.0
      %v2316 = vsel %vm2273, %v2267, 0.0
      %v2317 = vsel %vm2273, %v2268, 0.0
      %v2318 = vsel %vm2273, %v2269, 0.0
      %v2319 = vsel %vm2273, %v2270, 0.0
      %v2320 = vsel %vm2273, %v2271, 0.0
      %v2321 = vsel %vm2273, %v2272, 0.0
      %v2322 = vpack.c.bf16 %v2275, %v2274
      %v2323 = vpack.c.bf16 %v2277, %v2276
      %v2324 = vpack.c.bf16 %v2279, %v2278
      %v2325 = vpack.c.bf16 %v2281, %v2280
      %v2326 = vpack.c.bf16 %v2283, %v2282
      %v2327 = vpack.c.bf16 %v2285, %v2284
      %v2328 = vpack.c.bf16 %v2287, %v2286
      %v2329 = vpack.c.bf16 %v2289, %v2288
      %v2330 = vpack.c.bf16 %v2291, %v2290
      %v2331 = vpack.c.bf16 %v2293, %v2292
      %v2332 = vpack.c.bf16 %v2295, %v2294
      %v2333 = vpack.c.bf16 %v2297, %v2296
      %v2334 = vpack.c.bf16 %v2299, %v2298
      %v2335 = vpack.c.bf16 %v2301, %v2300
      %v2336 = vpack.c.bf16 %v2303, %v2302
      %v2337 = vpack.c.bf16 %v2305, %v2304
      %v2338 = vpack.c.bf16 %v2307, %v2306
      %v2339 = vpack.c.bf16 %v2309, %v2308
      %v2340 = vpack.c.bf16 %v2311, %v2310
      %v2341 = vpack.c.bf16 %v2313, %v2312
      %v2342 = vpack.c.bf16 %v2315, %v2314
      %v2343 = vpack.c.bf16 %v2317, %v2316
      %v2344 = vpack.c.bf16 %v2319, %v2318
      %v2345 = vpack.c.bf16 %v2321, %v2320
      %v2346 = vld [vmem:[%s2] sm:$0xf]
      %v2347 = vld [vmem:[%s2 + $0x4] sm:$0xf]
      %v2348 = vld [vmem:[%s2 + $0x8] sm:$0xf]
      %v2349 = vld [vmem:[%s2 + $0xc] sm:$0xf]
      %v2350 = vld [vmem:[%s2 + $0x10] sm:$0xf]
      %v2351 = vld [vmem:[%s2 + $0x14] sm:$0xf]
      %v2352 = vld [vmem:[%s2 + $0x18] sm:$0xf]
      %v2353 = vld [vmem:[%s2 + $0x1c] sm:$0xf]
      %v2354 = vld [vmem:[%s2 + $0x20] sm:$0xf]
      %v2355 = vld [vmem:[%s2 + $0x24] sm:$0xf]
      %v2356 = vld [vmem:[%s2 + $0x28] sm:$0xf]
      %v2357 = vld [vmem:[%s2 + $0x2c] sm:$0xf]
      %v2358 = vld [vmem:[%s2 + $0x30] sm:$0xf]
      %v2359 = vld [vmem:[%s2 + $0x34] sm:$0xf]
      %v2360 = vld [vmem:[%s2 + $0x38] sm:$0xf]
      %v2361 = vld [vmem:[%s2 + $0x3c] sm:$0xf]
      %v2378 = vunpack.c.l.b16 %v2346
      %v2379 = vunpack.c.l.b16 %v2347
      %v2380 = vunpack.c.l.b16 %v2348
      %v2381 = vunpack.c.l.b16 %v2349
      %v2382 = vunpack.c.l.b16 %v2350
      %v2383 = vunpack.c.l.b16 %v2351
      %v2384 = vunpack.c.l.b16 %v2352
      %v2385 = vunpack.c.l.b16 %v2353
      %v2386 = vunpack.c.l.b16 %v2354
      %v2387 = vunpack.c.l.b16 %v2355
      %v2388 = vunpack.c.l.b16 %v2356
      %v2389 = vunpack.c.l.b16 %v2357
      %v2390 = vunpack.c.l.b16 %v2358
      %v2391 = vunpack.c.l.b16 %v2359
      %v2392 = vunpack.c.l.b16 %v2360
      %v2393 = vunpack.c.l.b16 %v2361
      %v2394 = vpack.c.b16 %v2379, %v2378
      %v2395 = vpack.c.b16 %v2381, %v2380
      %v2396 = vpack.c.b16 %v2383, %v2382
      %v2397 = vpack.c.b16 %v2385, %v2384
      %v2398 = vpack.c.b16 %v2387, %v2386
      %v2399 = vpack.c.b16 %v2389, %v2388
      %v2400 = vpack.c.b16 %v2391, %v2390
      %v2401 = vpack.c.b16 %v2393, %v2392
      %2410 = vmatpush.bf16.msra.mxu0 %v2401
      %2411 = vmatpush.bf16.msra.mxu0 %v2400
      %2412 = vmatpush.bf16.msra.mxu0 %v2399
      %2413 = vmatpush.bf16.msra.mxu0 %v2398
      %2414 = vmatpush.bf16.msra.mxu0 %v2397
      %2415 = vmatpush.bf16.msra.mxu0 %v2396
      %2416 = vmatpush.bf16.msra.mxu0 %v2395
      %2417 = vmatpush.bf16.msra.mxu0 %v2394
      %2418 = vmatmul.bf16.gmra.mxu0 %v2322
      %v2419 = vpop.f32.mrf.mxu0
      %v2420 = vadd.f32 0.0, %v2419
      %v2421 = vpop.f32.mrf.mxu0
      %v2422 = vadd.f32 0.0, %v2421
      %2423 = vmatmul.bf16.gmra.mxu0 %v2323
      %v2424 = vpop.f32.mrf.mxu0
      %v2425 = vadd.f32 0.0, %v2424
      %v2426 = vpop.f32.mrf.mxu0
      %v2427 = vadd.f32 0.0, %v2426
      %2428 = vmatmul.bf16.gmra.mxu0 %v2324
      %v2429 = vpop.f32.mrf.mxu0
      %v2430 = vadd.f32 0.0, %v2429
      %v2431 = vpop.f32.mrf.mxu0
      %v2432 = vadd.f32 0.0, %v2431
      %2433 = vmatmul.bf16.gmra.mxu0 %v2325
      %v2434 = vpop.f32.mrf.mxu0
      %v2435 = vadd.f32 0.0, %v2434
      %v2436 = vpop.f32.mrf.mxu0
      %v2437 = vadd.f32 0.0, %v2436
      %2438 = vmatmul.bf16.gmra.mxu0 %v2326
      %v2439 = vpop.f32.mrf.mxu0
      %v2440 = vadd.f32 0.0, %v2439
      %v2441 = vpop.f32.mrf.mxu0
      %v2442 = vadd.f32 0.0, %v2441
      %2443 = vmatmul.bf16.gmra.mxu0 %v2327
      %v2444 = vpop.f32.mrf.mxu0
      %v2445 = vadd.f32 0.0, %v2444
      %v2446 = vpop.f32.mrf.mxu0
      %v2447 = vadd.f32 0.0, %v2446
      %2448 = vmatmul.bf16.gmra.mxu0 %v2328
      %v2449 = vpop.f32.mrf.mxu0
      %v2450 = vadd.f32 0.0, %v2449
      %v2451 = vpop.f32.mrf.mxu0
      %v2452 = vadd.f32 0.0, %v2451
      %2453 = vmatmul.bf16.gmra.mxu0 %v2329
      %v2454 = vpop.f32.mrf.mxu0
      %v2455 = vadd.f32 0.0, %v2454
      %v2456 = vpop.f32.mrf.mxu0
      %v2457 = vadd.f32 0.0, %v2456
      %2458 = vmatmul.bf16.gmra.mxu0 %v2330
      %v2459 = vpop.f32.mrf.mxu0
      %v2460 = vadd.f32 0.0, %v2459
      %v2461 = vpop.f32.mrf.mxu0
      %v2462 = vadd.f32 0.0, %v2461
      %2463 = vmatmul.bf16.gmra.mxu0 %v2331
      %v2464 = vpop.f32.mrf.mxu0
      %v2465 = vadd.f32 0.0, %v2464
      %v2466 = vpop.f32.mrf.mxu0
      %v2467 = vadd.f32 0.0, %v2466
      %2468 = vmatmul.bf16.gmra.mxu0 %v2332
      %v2469 = vpop.f32.mrf.mxu0
      %v2470 = vadd.f32 0.0, %v2469
      %v2471 = vpop.f32.mrf.mxu0
      %v2472 = vadd.f32 0.0, %v2471
      %2473 = vmatmul.bf16.gmra.mxu0 %v2333
      %v2474 = vpop.f32.mrf.mxu0
      %v2475 = vadd.f32 0.0, %v2474
      %v2476 = vpop.f32.mrf.mxu0
      %v2477 = vadd.f32 0.0, %v2476
      %2478 = vmatmul.bf16.gmra.mxu0 %v2334
      %v2479 = vpop.f32.mrf.mxu0
      %v2480 = vadd.f32 0.0, %v2479
      %v2481 = vpop.f32.mrf.mxu0
      %v2482 = vadd.f32 0.0, %v2481
      %2483 = vmatmul.bf16.gmra.mxu0 %v2335
      %v2484 = vpop.f32.mrf.mxu0
      %v2485 = vadd.f32 0.0, %v2484
      %v2486 = vpop.f32.mrf.mxu0
      %v2487 = vadd.f32 0.0, %v2486
      %2488 = vmatmul.bf16.gmra.mxu0 %v2336
      %v2489 = vpop.f32.mrf.mxu0
      %v2490 = vadd.f32 0.0, %v2489
      %v2491 = vpop.f32.mrf.mxu0
      %v2492 = vadd.f32 0.0, %v2491
      %2493 = vmatmul.bf16.gmra.mxu0 %v2337
      %v2494 = vpop.f32.mrf.mxu0
      %v2495 = vadd.f32 0.0, %v2494
      %v2496 = vpop.f32.mrf.mxu0
      %v2497 = vadd.f32 0.0, %v2496
      %2498 = vmatmul.bf16.gmra.mxu0 %v2338
      %v2499 = vpop.f32.mrf.mxu0
      %v2500 = vadd.f32 0.0, %v2499
      %v2501 = vpop.f32.mrf.mxu0
      %v2502 = vadd.f32 0.0, %v2501
      %2503 = vmatmul.bf16.gmra.mxu0 %v2339
      %v2504 = vpop.f32.mrf.mxu0
      %v2505 = vadd.f32 0.0, %v2504
      %v2506 = vpop.f32.mrf.mxu0
      %v2507 = vadd.f32 0.0, %v2506
      %2508 = vmatmul.bf16.gmra.mxu0 %v2340
      %v2509 = vpop.f32.mrf.mxu0
      %v2510 = vadd.f32 0.0, %v2509
      %v2511 = vpop.f32.mrf.mxu0
      %v2512 = vadd.f32 0.0, %v2511
      %2513 = vmatmul.bf16.gmra.mxu0 %v2341
      %v2514 = vpop.f32.mrf.mxu0
      %v2515 = vadd.f32 0.0, %v2514
      %v2516 = vpop.f32.mrf.mxu0
      %v2517 = vadd.f32 0.0, %v2516
      %2518 = vmatmul.bf16.gmra.mxu0 %v2342
      %v2519 = vpop.f32.mrf.mxu0
      %v2520 = vadd.f32 0.0, %v2519
      %v2521 = vpop.f32.mrf.mxu0
      %v2522 = vadd.f32 0.0, %v2521
      %2523 = vmatmul.bf16.gmra.mxu0 %v2343
      %v2524 = vpop.f32.mrf.mxu0
      %v2525 = vadd.f32 0.0, %v2524
      %v2526 = vpop.f32.mrf.mxu0
      %v2527 = vadd.f32 0.0, %v2526
      %2528 = vmatmul.bf16.gmra.mxu0 %v2344
      %v2529 = vpop.f32.mrf.mxu0
      %v2530 = vadd.f32 0.0, %v2529
      %v2531 = vpop.f32.mrf.mxu0
      %v2532 = vadd.f32 0.0, %v2531
      %2533 = vmatmul.bf16.gmra.mxu0 %v2345
      %v2534 = vpop.f32.mrf.mxu0
      %v2535 = vadd.f32 0.0, %v2534
      %v2536 = vpop.f32.mrf.mxu0
      %v2537 = vadd.f32 0.0, %v2536
      %2538 = vdwg.mxu0
      %v2539 = vxor.u32 %v2420, 2147483648
      %v2540 = vxor.u32 %v2422, 2147483648
      %v2541 = vxor.u32 %v2425, 2147483648
      %v2542 = vxor.u32 %v2427, 2147483648
      %v2543 = vxor.u32 %v2430, 2147483648
      %v2544 = vxor.u32 %v2432, 2147483648
      %v2545 = vxor.u32 %v2435, 2147483648
      %v2546 = vxor.u32 %v2437, 2147483648
      %v2547 = vxor.u32 %v2440, 2147483648
      %v2548 = vxor.u32 %v2442, 2147483648
      %v2549 = vxor.u32 %v2445, 2147483648
      %v2550 = vxor.u32 %v2447, 2147483648
      %v2551 = vxor.u32 %v2450, 2147483648
      %v2552 = vxor.u32 %v2452, 2147483648
      %v2553 = vxor.u32 %v2455, 2147483648
      %v2554 = vxor.u32 %v2457, 2147483648
      %v2555 = vxor.u32 %v2460, 2147483648
      %v2556 = vxor.u32 %v2462, 2147483648
      %v2557 = vxor.u32 %v2465, 2147483648
      %v2558 = vxor.u32 %v2467, 2147483648
      %v2559 = vxor.u32 %v2470, 2147483648
      %v2560 = vxor.u32 %v2472, 2147483648
      %v2561 = vxor.u32 %v2475, 2147483648
      %v2562 = vxor.u32 %v2477, 2147483648
      %v2563 = vxor.u32 %v2480, 2147483648
      %v2564 = vxor.u32 %v2482, 2147483648
      %v2565 = vxor.u32 %v2485, 2147483648
      %v2566 = vxor.u32 %v2487, 2147483648
      %v2567 = vxor.u32 %v2490, 2147483648
      %v2568 = vxor.u32 %v2492, 2147483648
      %v2569 = vxor.u32 %v2495, 2147483648
      %v2570 = vxor.u32 %v2497, 2147483648
      %v2571 = vxor.u32 %v2500, 2147483648
      %v2572 = vxor.u32 %v2502, 2147483648
      %v2573 = vxor.u32 %v2505, 2147483648
      %v2574 = vxor.u32 %v2507, 2147483648
      %v2575 = vxor.u32 %v2510, 2147483648
      %v2576 = vxor.u32 %v2512, 2147483648
      %v2577 = vxor.u32 %v2515, 2147483648
      %v2578 = vxor.u32 %v2517, 2147483648
      %v2579 = vxor.u32 %v2520, 2147483648
      %v2580 = vxor.u32 %v2522, 2147483648
      %v2581 = vxor.u32 %v2525, 2147483648
      %v2582 = vxor.u32 %v2527, 2147483648
      %v2583 = vxor.u32 %v2530, 2147483648
      %v2584 = vxor.u32 %v2532, 2147483648
      %v2585 = vxor.u32 %v2535, 2147483648
      %v2586 = vxor.u32 %v2537, 2147483648
      %v2587 = vmul.f32 %v2539, 1.442695
      %v2588 = vpow.pop %v2587
      %v2589 = vmul.f32 %v2540, 1.442695
      %v2590 = vpow.pop %v2589
      %v2591 = vmul.f32 %v2541, 1.442695
      %v2592 = vpow.pop %v2591
      %v2593 = vmul.f32 %v2542, 1.442695
      %v2594 = vpow.pop %v2593
      %v2595 = vmul.f32 %v2543, 1.442695
      %v2596 = vpow.pop %v2595
      %v2597 = vmul.f32 %v2544, 1.442695
      %v2598 = vpow.pop %v2597
      %v2599 = vmul.f32 %v2545, 1.442695
      %v2600 = vpow.pop %v2599
      %v2601 = vmul.f32 %v2546, 1.442695
      %v2602 = vpow.pop %v2601
      %v2603 = vmul.f32 %v2547, 1.442695
      %v2604 = vpow.pop %v2603
      %v2605 = vmul.f32 %v2548, 1.442695
      %v2606 = vpow.pop %v2605
      %v2607 = vmul.f32 %v2549, 1.442695
      %v2608 = vpow.pop %v2607
      %v2609 = vmul.f32 %v2550, 1.442695
      %v2610 = vpow.pop %v2609
      %v2611 = vmul.f32 %v2551, 1.442695
      %v2612 = vpow.pop %v2611
      %v2613 = vmul.f32 %v2552, 1.442695
      %v2614 = vpow.pop %v2613
      %v2615 = vmul.f32 %v2553, 1.442695
      %v2616 = vpow.pop %v2615
      %v2617 = vmul.f32 %v2554, 1.442695
      %v2618 = vpow.pop %v2617
      %v2619 = vmul.f32 %v2555, 1.442695
      %v2620 = vpow.pop %v2619
      %v2621 = vmul.f32 %v2556, 1.442695
      %v2622 = vpow.pop %v2621
      %v2623 = vmul.f32 %v2557, 1.442695
      %v2624 = vpow.pop %v2623
      %v2625 = vmul.f32 %v2558, 1.442695
      %v2626 = vpow.pop %v2625
      %v2627 = vmul.f32 %v2559, 1.442695
      %v2628 = vpow.pop %v2627
      %v2629 = vmul.f32 %v2560, 1.442695
      %v2630 = vpow.pop %v2629
      %v2631 = vmul.f32 %v2561, 1.442695
      %v2632 = vpow.pop %v2631
      %v2633 = vmul.f32 %v2562, 1.442695
      %v2634 = vpow.pop %v2633
      %v2635 = vmul.f32 %v2563, 1.442695
      %v2636 = vpow.pop %v2635
      %v2637 = vmul.f32 %v2564, 1.442695
      %v2638 = vpow.pop %v2637
      %v2639 = vmul.f32 %v2565, 1.442695
      %v2640 = vpow.pop %v2639
      %v2641 = vmul.f32 %v2566, 1.442695
      %v2642 = vpow.pop %v2641
      %v2643 = vmul.f32 %v2567, 1.442695
      %v2644 = vpow.pop %v2643
      %v2645 = vmul.f32 %v2568, 1.442695
      %v2646 = vpow.pop %v2645
      %v2647 = vmul.f32 %v2569, 1.442695
      %v2648 = vpow.pop %v2647
      %v2649 = vmul.f32 %v2570, 1.442695
      %v2650 = vpow.pop %v2649
      %v2651 = vmul.f32 %v2571, 1.442695
      %v2652 = vpow.pop %v2651
      %v2653 = vmul.f32 %v2572, 1.442695
      %v2654 = vpow.pop %v2653
      %v2655 = vmul.f32 %v2573, 1.442695
      %v2656 = vpow.pop %v2655
      %v2657 = vmul.f32 %v2574, 1.442695
      %v2658 = vpow.pop %v2657
      %v2659 = vmul.f32 %v2575, 1.442695
      %v2660 = vpow.pop %v2659
      %v2661 = vmul.f32 %v2576, 1.442695
      %v2662 = vpow.pop %v2661
      %v2663 = vmul.f32 %v2577, 1.442695
      %v2664 = vpow.pop %v2663
      %v2665 = vmul.f32 %v2578, 1.442695
      %v2666 = vpow.pop %v2665
      %v2667 = vmul.f32 %v2579, 1.442695
      %v2668 = vpow.pop %v2667
      %v2669 = vmul.f32 %v2580, 1.442695
      %v2670 = vpow.pop %v2669
      %v2671 = vmul.f32 %v2581, 1.442695
      %v2672 = vpow.pop %v2671
      %v2673 = vmul.f32 %v2582, 1.442695
      %v2674 = vpow.pop %v2673
      %v2675 = vmul.f32 %v2583, 1.442695
      %v2676 = vpow.pop %v2675
      %v2677 = vmul.f32 %v2584, 1.442695
      %v2678 = vpow.pop %v2677
      %v2679 = vmul.f32 %v2585, 1.442695
      %v2680 = vpow.pop %v2679
      %v2681 = vmul.f32 %v2586, 1.442695
      %v2682 = vpow.pop %v2681
      %v2683 = vadd.f32 %v2588, 1.0
      %v2684 = vadd.f32 %v2590, 1.0
      %v2685 = vadd.f32 %v2592, 1.0
      %v2686 = vadd.f32 %v2594, 1.0
      %v2687 = vadd.f32 %v2596, 1.0
      %v2688 = vadd.f32 %v2598, 1.0
      %v2689 = vadd.f32 %v2600, 1.0
      %v2690 = vadd.f32 %v2602, 1.0
      %v2691 = vadd.f32 %v2604, 1.0
      %v2692 = vadd.f32 %v2606, 1.0
      %v2693 = vadd.f32 %v2608, 1.0
      %v2694 = vadd.f32 %v2610, 1.0
      %v2695 = vadd.f32 %v2612, 1.0
      %v2696 = vadd.f32 %v2614, 1.0
      %v2697 = vadd.f32 %v2616, 1.0
      %v2698 = vadd.f32 %v2618, 1.0
      %v2699 = vadd.f32 %v2620, 1.0
      %v2700 = vadd.f32 %v2622, 1.0
      %v2701 = vadd.f32 %v2624, 1.0
      %v2702 = vadd.f32 %v2626, 1.0
      %v2703 = vadd.f32 %v2628, 1.0
      %v2704 = vadd.f32 %v2630, 1.0
      %v2705 = vadd.f32 %v2632, 1.0
      %v2706 = vadd.f32 %v2634, 1.0
      %v2707 = vadd.f32 %v2636, 1.0
      %v2708 = vadd.f32 %v2638, 1.0
      %v2709 = vadd.f32 %v2640, 1.0
      %v2710 = vadd.f32 %v2642, 1.0
      %v2711 = vadd.f32 %v2644, 1.0
      %v2712 = vadd.f32 %v2646, 1.0
      %v2713 = vadd.f32 %v2648, 1.0
      %v2714 = vadd.f32 %v2650, 1.0
      %v2715 = vadd.f32 %v2652, 1.0
      %v2716 = vadd.f32 %v2654, 1.0
      %v2717 = vadd.f32 %v2656, 1.0
      %v2718 = vadd.f32 %v2658, 1.0
      %v2719 = vadd.f32 %v2660, 1.0
      %v2720 = vadd.f32 %v2662, 1.0
      %v2721 = vadd.f32 %v2664, 1.0
      %v2722 = vadd.f32 %v2666, 1.0
      %v2723 = vadd.f32 %v2668, 1.0
      %v2724 = vadd.f32 %v2670, 1.0
      %v2725 = vadd.f32 %v2672, 1.0
      %v2726 = vadd.f32 %v2674, 1.0
      %v2727 = vadd.f32 %v2676, 1.0
      %v2728 = vadd.f32 %v2678, 1.0
      %v2729 = vadd.f32 %v2680, 1.0
      %v2730 = vadd.f32 %v2682, 1.0
      %v2731 = vrcp.pop %v2683
      %v2732 = vmul.f32 %v2683, %v2731
      %v2733 = vsub.f32 1.0, %v2732
      %v2734 = vmul.f32 %v2731, %v2733
      %v2735 = vadd.f32 %v2731, %v2734
      %vm2736 = vweird.f32 %v2683
      %vm2737 = vweird.f32 %v2731
      %vm2738 = vmor %vm2736, %vm2737
      %v2739 = vsel %vm2738, %v2731, %v2735
      %v2740 = vand.u32 2147483647, %v2683
      %vm2741 = vcmp.eq.f32.partialorder %v2740, 8.507059e+37
      %v2742 = vand.u32 %v2683, 2147483648
      %v2743 = vor.u32 1.1754944e-38, %v2742
      %v2744 = vsel %vm2741, %v2743, %v2739
      %v2745 = vmul.f32 1.0, %v2744
      %v2746 = vrcp.pop %v2684
      %v2747 = vmul.f32 %v2684, %v2746
      %v2748 = vsub.f32 1.0, %v2747
      %v2749 = vmul.f32 %v2746, %v2748
      %v2750 = vadd.f32 %v2746, %v2749
      %vm2751 = vweird.f32 %v2684
      %vm2752 = vweird.f32 %v2746
      %vm2753 = vmor %vm2751, %vm2752
      %v2754 = vsel %vm2753, %v2746, %v2750
      %v2755 = vand.u32 2147483647, %v2684
      %vm2756 = vcmp.eq.f32.partialorder %v2755, 8.507059e+37
      %v2757 = vand.u32 %v2684, 2147483648
      %v2758 = vor.u32 1.1754944e-38, %v2757
      %v2759 = vsel %vm2756, %v2758, %v2754
      %v2760 = vmul.f32 1.0, %v2759
      %v2761 = vrcp.pop %v2685
      %v2762 = vmul.f32 %v2685, %v2761
      %v2763 = vsub.f32 1.0, %v2762
      %v2764 = vmul.f32 %v2761, %v2763
      %v2765 = vadd.f32 %v2761, %v2764
      %vm2766 = vweird.f32 %v2685
      %vm2767 = vweird.f32 %v2761
      %vm2768 = vmor %vm2766, %vm2767
      %v2769 = vsel %vm2768, %v2761, %v2765
      %v2770 = vand.u32 2147483647, %v2685
      %vm2771 = vcmp.eq.f32.partialorder %v2770, 8.507059e+37
      %v2772 = vand.u32 %v2685, 2147483648
      %v2773 = vor.u32 1.1754944e-38, %v2772
      %v2774 = vsel %vm2771, %v2773, %v2769
      %v2775 = vmul.f32 1.0, %v2774
      %v2776 = vrcp.pop %v2686
      %v2777 = vmul.f32 %v2686, %v2776
      %v2778 = vsub.f32 1.0, %v2777
      %v2779 = vmul.f32 %v2776, %v2778
      %v2780 = vadd.f32 %v2776, %v2779
      %vm2781 = vweird.f32 %v2686
      %vm2782 = vweird.f32 %v2776
      %vm2783 = vmor %vm2781, %vm2782
      %v2784 = vsel %vm2783, %v2776, %v2780
      %v2785 = vand.u32 2147483647, %v2686
      %vm2786 = vcmp.eq.f32.partialorder %v2785, 8.507059e+37
      %v2787 = vand.u32 %v2686, 2147483648
      %v2788 = vor.u32 1.1754944e-38, %v2787
      %v2789 = vsel %vm2786, %v2788, %v2784
      %v2790 = vmul.f32 1.0, %v2789
      %v2791 = vrcp.pop %v2687
      %v2792 = vmul.f32 %v2687, %v2791
      %v2793 = vsub.f32 1.0, %v2792
      %v2794 = vmul.f32 %v2791, %v2793
      %v2795 = vadd.f32 %v2791, %v2794
      %vm2796 = vweird.f32 %v2687
      %vm2797 = vweird.f32 %v2791
      %vm2798 = vmor %vm2796, %vm2797
      %v2799 = vsel %vm2798, %v2791, %v2795
      %v2800 = vand.u32 2147483647, %v2687
      %vm2801 = vcmp.eq.f32.partialorder %v2800, 8.507059e+37
      %v2802 = vand.u32 %v2687, 2147483648
      %v2803 = vor.u32 1.1754944e-38, %v2802
      %v2804 = vsel %vm2801, %v2803, %v2799
      %v2805 = vmul.f32 1.0, %v2804
      %v2806 = vrcp.pop %v2688
      %v2807 = vmul.f32 %v2688, %v2806
      %v2808 = vsub.f32 1.0, %v2807
      %v2809 = vmul.f32 %v2806, %v2808
      %v2810 = vadd.f32 %v2806, %v2809
      %vm2811 = vweird.f32 %v2688
      %vm2812 = vweird.f32 %v2806
      %vm2813 = vmor %vm2811, %vm2812
      %v2814 = vsel %vm2813, %v2806, %v2810
      %v2815 = vand.u32 2147483647, %v2688
      %vm2816 = vcmp.eq.f32.partialorder %v2815, 8.507059e+37
      %v2817 = vand.u32 %v2688, 2147483648
      %v2818 = vor.u32 1.1754944e-38, %v2817
      %v2819 = vsel %vm2816, %v2818, %v2814
      %v2820 = vmul.f32 1.0, %v2819
      %v2821 = vrcp.pop %v2689
      %v2822 = vmul.f32 %v2689, %v2821
      %v2823 = vsub.f32 1.0, %v2822
      %v2824 = vmul.f32 %v2821, %v2823
      %v2825 = vadd.f32 %v2821, %v2824
      %vm2826 = vweird.f32 %v2689
      %vm2827 = vweird.f32 %v2821
      %vm2828 = vmor %vm2826, %vm2827
      %v2829 = vsel %vm2828, %v2821, %v2825
      %v2830 = vand.u32 2147483647, %v2689
      %vm2831 = vcmp.eq.f32.partialorder %v2830, 8.507059e+37
      %v2832 = vand.u32 %v2689, 2147483648
      %v2833 = vor.u32 1.1754944e-38, %v2832
      %v2834 = vsel %vm2831, %v2833, %v2829
      %v2835 = vmul.f32 1.0, %v2834
      %v2836 = vrcp.pop %v2690
      %v2837 = vmul.f32 %v2690, %v2836
      %v2838 = vsub.f32 1.0, %v2837
      %v2839 = vmul.f32 %v2836, %v2838
      %v2840 = vadd.f32 %v2836, %v2839
      %vm2841 = vweird.f32 %v2690
      %vm2842 = vweird.f32 %v2836
      %vm2843 = vmor %vm2841, %vm2842
      %v2844 = vsel %vm2843, %v2836, %v2840
      %v2845 = vand.u32 2147483647, %v2690
      %vm2846 = vcmp.eq.f32.partialorder %v2845, 8.507059e+37
      %v2847 = vand.u32 %v2690, 2147483648
      %v2848 = vor.u32 1.1754944e-38, %v2847
      %v2849 = vsel %vm2846, %v2848, %v2844
      %v2850 = vmul.f32 1.0, %v2849
      %v2851 = vrcp.pop %v2691
      %v2852 = vmul.f32 %v2691, %v2851
      %v2853 = vsub.f32 1.0, %v2852
      %v2854 = vmul.f32 %v2851, %v2853
      %v2855 = vadd.f32 %v2851, %v2854
      %vm2856 = vweird.f32 %v2691
      %vm2857 = vweird.f32 %v2851
      %vm2858 = vmor %vm2856, %vm2857
      %v2859 = vsel %vm2858, %v2851, %v2855
      %v2860 = vand.u32 2147483647, %v2691
      %vm2861 = vcmp.eq.f32.partialorder %v2860, 8.507059e+37
      %v2862 = vand.u32 %v2691, 2147483648
      %v2863 = vor.u32 1.1754944e-38, %v2862
      %v2864 = vsel %vm2861, %v2863, %v2859
      %v2865 = vmul.f32 1.0, %v2864
      %v2866 = vrcp.pop %v2692
      %v2867 = vmul.f32 %v2692, %v2866
      %v2868 = vsub.f32 1.0, %v2867
      %v2869 = vmul.f32 %v2866, %v2868
      %v2870 = vadd.f32 %v2866, %v2869
      %vm2871 = vweird.f32 %v2692
      %vm2872 = vweird.f32 %v2866
      %vm2873 = vmor %vm2871, %vm2872
      %v2874 = vsel %vm2873, %v2866, %v2870
      %v2875 = vand.u32 2147483647, %v2692
      %vm2876 = vcmp.eq.f32.partialorder %v2875, 8.507059e+37
      %v2877 = vand.u32 %v2692, 2147483648
      %v2878 = vor.u32 1.1754944e-38, %v2877
      %v2879 = vsel %vm2876, %v2878, %v2874
      %v2880 = vmul.f32 1.0, %v2879
      %v2881 = vrcp.pop %v2693
      %v2882 = vmul.f32 %v2693, %v2881
      %v2883 = vsub.f32 1.0, %v2882
      %v2884 = vmul.f32 %v2881, %v2883
      %v2885 = vadd.f32 %v2881, %v2884
      %vm2886 = vweird.f32 %v2693
      %vm2887 = vweird.f32 %v2881
      %vm2888 = vmor %vm2886, %vm2887
      %v2889 = vsel %vm2888, %v2881, %v2885
      %v2890 = vand.u32 2147483647, %v2693
      %vm2891 = vcmp.eq.f32.partialorder %v2890, 8.507059e+37
      %v2892 = vand.u32 %v2693, 2147483648
      %v2893 = vor.u32 1.1754944e-38, %v2892
      %v2894 = vsel %vm2891, %v2893, %v2889
      %v2895 = vmul.f32 1.0, %v2894
      %v2896 = vrcp.pop %v2694
      %v2897 = vmul.f32 %v2694, %v2896
      %v2898 = vsub.f32 1.0, %v2897
      %v2899 = vmul.f32 %v2896, %v2898
      %v2900 = vadd.f32 %v2896, %v2899
      %vm2901 = vweird.f32 %v2694
      %vm2902 = vweird.f32 %v2896
      %vm2903 = vmor %vm2901, %vm2902
      %v2904 = vsel %vm2903, %v2896, %v2900
      %v2905 = vand.u32 2147483647, %v2694
      %vm2906 = vcmp.eq.f32.partialorder %v2905, 8.507059e+37
      %v2907 = vand.u32 %v2694, 2147483648
      %v2908 = vor.u32 1.1754944e-38, %v2907
      %v2909 = vsel %vm2906, %v2908, %v2904
      %v2910 = vmul.f32 1.0, %v2909
      %v2911 = vrcp.pop %v2695
      %v2912 = vmul.f32 %v2695, %v2911
      %v2913 = vsub.f32 1.0, %v2912
      %v2914 = vmul.f32 %v2911, %v2913
      %v2915 = vadd.f32 %v2911, %v2914
      %vm2916 = vweird.f32 %v2695
      %vm2917 = vweird.f32 %v2911
      %vm2918 = vmor %vm2916, %vm2917
      %v2919 = vsel %vm2918, %v2911, %v2915
      %v2920 = vand.u32 2147483647, %v2695
      %vm2921 = vcmp.eq.f32.partialorder %v2920, 8.507059e+37
      %v2922 = vand.u32 %v2695, 2147483648
      %v2923 = vor.u32 1.1754944e-38, %v2922
      %v2924 = vsel %vm2921, %v2923, %v2919
      %v2925 = vmul.f32 1.0, %v2924
      %v2926 = vrcp.pop %v2696
      %v2927 = vmul.f32 %v2696, %v2926
      %v2928 = vsub.f32 1.0, %v2927
      %v2929 = vmul.f32 %v2926, %v2928
      %v2930 = vadd.f32 %v2926, %v2929
      %vm2931 = vweird.f32 %v2696
      %vm2932 = vweird.f32 %v2926
      %vm2933 = vmor %vm2931, %vm2932
      %v2934 = vsel %vm2933, %v2926, %v2930
      %v2935 = vand.u32 2147483647, %v2696
      %vm2936 = vcmp.eq.f32.partialorder %v2935, 8.507059e+37
      %v2937 = vand.u32 %v2696, 2147483648
      %v2938 = vor.u32 1.1754944e-38, %v2937
      %v2939 = vsel %vm2936, %v2938, %v2934
      %v2940 = vmul.f32 1.0, %v2939
      %v2941 = vrcp.pop %v2697
      %v2942 = vmul.f32 %v2697, %v2941
      %v2943 = vsub.f32 1.0, %v2942
      %v2944 = vmul.f32 %v2941, %v2943
      %v2945 = vadd.f32 %v2941, %v2944
      %vm2946 = vweird.f32 %v2697
      %vm2947 = vweird.f32 %v2941
      %vm2948 = vmor %vm2946, %vm2947
      %v2949 = vsel %vm2948, %v2941, %v2945
      %v2950 = vand.u32 2147483647, %v2697
      %vm2951 = vcmp.eq.f32.partialorder %v2950, 8.507059e+37
      %v2952 = vand.u32 %v2697, 2147483648
      %v2953 = vor.u32 1.1754944e-38, %v2952
      %v2954 = vsel %vm2951, %v2953, %v2949
      %v2955 = vmul.f32 1.0, %v2954
      %v2956 = vrcp.pop %v2698
      %v2957 = vmul.f32 %v2698, %v2956
      %v2958 = vsub.f32 1.0, %v2957
      %v2959 = vmul.f32 %v2956, %v2958
      %v2960 = vadd.f32 %v2956, %v2959
      %vm2961 = vweird.f32 %v2698
      %vm2962 = vweird.f32 %v2956
      %vm2963 = vmor %vm2961, %vm2962
      %v2964 = vsel %vm2963, %v2956, %v2960
      %v2965 = vand.u32 2147483647, %v2698
      %vm2966 = vcmp.eq.f32.partialorder %v2965, 8.507059e+37
      %v2967 = vand.u32 %v2698, 2147483648
      %v2968 = vor.u32 1.1754944e-38, %v2967
      %v2969 = vsel %vm2966, %v2968, %v2964
      %v2970 = vmul.f32 1.0, %v2969
      %v2971 = vrcp.pop %v2699
      %v2972 = vmul.f32 %v2699, %v2971
      %v2973 = vsub.f32 1.0, %v2972
      %v2974 = vmul.f32 %v2971, %v2973
      %v2975 = vadd.f32 %v2971, %v2974
      %vm2976 = vweird.f32 %v2699
      %vm2977 = vweird.f32 %v2971
      %vm2978 = vmor %vm2976, %vm2977
      %v2979 = vsel %vm2978, %v2971, %v2975
      %v2980 = vand.u32 2147483647, %v2699
      %vm2981 = vcmp.eq.f32.partialorder %v2980, 8.507059e+37
      %v2982 = vand.u32 %v2699, 2147483648
      %v2983 = vor.u32 1.1754944e-38, %v2982
      %v2984 = vsel %vm2981, %v2983, %v2979
      %v2985 = vmul.f32 1.0, %v2984
      %v2986 = vrcp.pop %v2700
      %v2987 = vmul.f32 %v2700, %v2986
      %v2988 = vsub.f32 1.0, %v2987
      %v2989 = vmul.f32 %v2986, %v2988
      %v2990 = vadd.f32 %v2986, %v2989
      %vm2991 = vweird.f32 %v2700
      %vm2992 = vweird.f32 %v2986
      %vm2993 = vmor %vm2991, %vm2992
      %v2994 = vsel %vm2993, %v2986, %v2990
      %v2995 = vand.u32 2147483647, %v2700
      %vm2996 = vcmp.eq.f32.partialorder %v2995, 8.507059e+37
      %v2997 = vand.u32 %v2700, 2147483648
      %v2998 = vor.u32 1.1754944e-38, %v2997
      %v2999 = vsel %vm2996, %v2998, %v2994
      %v3000 = vmul.f32 1.0, %v2999
      %v3001 = vrcp.pop %v2701
      %v3002 = vmul.f32 %v2701, %v3001
      %v3003 = vsub.f32 1.0, %v3002
      %v3004 = vmul.f32 %v3001, %v3003
      %v3005 = vadd.f32 %v3001, %v3004
      %vm3006 = vweird.f32 %v2701
      %vm3007 = vweird.f32 %v3001
      %vm3008 = vmor %vm3006, %vm3007
      %v3009 = vsel %vm3008, %v3001, %v3005
      %v3010 = vand.u32 2147483647, %v2701
      %vm3011 = vcmp.eq.f32.partialorder %v3010, 8.507059e+37
      %v3012 = vand.u32 %v2701, 2147483648
      %v3013 = vor.u32 1.1754944e-38, %v3012
      %v3014 = vsel %vm3011, %v3013, %v3009
      %v3015 = vmul.f32 1.0, %v3014
      %v3016 = vrcp.pop %v2702
      %v3017 = vmul.f32 %v2702, %v3016
      %v3018 = vsub.f32 1.0, %v3017
      %v3019 = vmul.f32 %v3016, %v3018
      %v3020 = vadd.f32 %v3016, %v3019
      %vm3021 = vweird.f32 %v2702
      %vm3022 = vweird.f32 %v3016
      %vm3023 = vmor %vm3021, %vm3022
      %v3024 = vsel %vm3023, %v3016, %v3020
      %v3025 = vand.u32 2147483647, %v2702
      %vm3026 = vcmp.eq.f32.partialorder %v3025, 8.507059e+37
      %v3027 = vand.u32 %v2702, 2147483648
      %v3028 = vor.u32 1.1754944e-38, %v3027
      %v3029 = vsel %vm3026, %v3028, %v3024
      %v3030 = vmul.f32 1.0, %v3029
      %v3031 = vrcp.pop %v2703
      %v3032 = vmul.f32 %v2703, %v3031
      %v3033 = vsub.f32 1.0, %v3032
      %v3034 = vmul.f32 %v3031, %v3033
      %v3035 = vadd.f32 %v3031, %v3034
      %vm3036 = vweird.f32 %v2703
      %vm3037 = vweird.f32 %v3031
      %vm3038 = vmor %vm3036, %vm3037
      %v3039 = vsel %vm3038, %v3031, %v3035
      %v3040 = vand.u32 2147483647, %v2703
      %vm3041 = vcmp.eq.f32.partialorder %v3040, 8.507059e+37
      %v3042 = vand.u32 %v2703, 2147483648
      %v3043 = vor.u32 1.1754944e-38, %v3042
      %v3044 = vsel %vm3041, %v3043, %v3039
      %v3045 = vmul.f32 1.0, %v3044
      %v3046 = vrcp.pop %v2704
      %v3047 = vmul.f32 %v2704, %v3046
      %v3048 = vsub.f32 1.0, %v3047
      %v3049 = vmul.f32 %v3046, %v3048
      %v3050 = vadd.f32 %v3046, %v3049
      %vm3051 = vweird.f32 %v2704
      %vm3052 = vweird.f32 %v3046
      %vm3053 = vmor %vm3051, %vm3052
      %v3054 = vsel %vm3053, %v3046, %v3050
      %v3055 = vand.u32 2147483647, %v2704
      %vm3056 = vcmp.eq.f32.partialorder %v3055, 8.507059e+37
      %v3057 = vand.u32 %v2704, 2147483648
      %v3058 = vor.u32 1.1754944e-38, %v3057
      %v3059 = vsel %vm3056, %v3058, %v3054
      %v3060 = vmul.f32 1.0, %v3059
      %v3061 = vrcp.pop %v2705
      %v3062 = vmul.f32 %v2705, %v3061
      %v3063 = vsub.f32 1.0, %v3062
      %v3064 = vmul.f32 %v3061, %v3063
      %v3065 = vadd.f32 %v3061, %v3064
      %vm3066 = vweird.f32 %v2705
      %vm3067 = vweird.f32 %v3061
      %vm3068 = vmor %vm3066, %vm3067
      %v3069 = vsel %vm3068, %v3061, %v3065
      %v3070 = vand.u32 2147483647, %v2705
      %vm3071 = vcmp.eq.f32.partialorder %v3070, 8.507059e+37
      %v3072 = vand.u32 %v2705, 2147483648
      %v3073 = vor.u32 1.1754944e-38, %v3072
      %v3074 = vsel %vm3071, %v3073, %v3069
      %v3075 = vmul.f32 1.0, %v3074
      %v3076 = vrcp.pop %v2706
      %v3077 = vmul.f32 %v2706, %v3076
      %v3078 = vsub.f32 1.0, %v3077
      %v3079 = vmul.f32 %v3076, %v3078
      %v3080 = vadd.f32 %v3076, %v3079
      %vm3081 = vweird.f32 %v2706
      %vm3082 = vweird.f32 %v3076
      %vm3083 = vmor %vm3081, %vm3082
      %v3084 = vsel %vm3083, %v3076, %v3080
      %v3085 = vand.u32 2147483647, %v2706
      %vm3086 = vcmp.eq.f32.partialorder %v3085, 8.507059e+37
      %v3087 = vand.u32 %v2706, 2147483648
      %v3088 = vor.u32 1.1754944e-38, %v3087
      %v3089 = vsel %vm3086, %v3088, %v3084
      %v3090 = vmul.f32 1.0, %v3089
      %v3091 = vrcp.pop %v2707
      %v3092 = vmul.f32 %v2707, %v3091
      %v3093 = vsub.f32 1.0, %v3092
      %v3094 = vmul.f32 %v3091, %v3093
      %v3095 = vadd.f32 %v3091, %v3094
      %vm3096 = vweird.f32 %v2707
      %vm3097 = vweird.f32 %v3091
      %vm3098 = vmor %vm3096, %vm3097
      %v3099 = vsel %vm3098, %v3091, %v3095
      %v3100 = vand.u32 2147483647, %v2707
      %vm3101 = vcmp.eq.f32.partialorder %v3100, 8.507059e+37
      %v3102 = vand.u32 %v2707, 2147483648
      %v3103 = vor.u32 1.1754944e-38, %v3102
      %v3104 = vsel %vm3101, %v3103, %v3099
      %v3105 = vmul.f32 1.0, %v3104
      %v3106 = vrcp.pop %v2708
      %v3107 = vmul.f32 %v2708, %v3106
      %v3108 = vsub.f32 1.0, %v3107
      %v3109 = vmul.f32 %v3106, %v3108
      %v3110 = vadd.f32 %v3106, %v3109
      %vm3111 = vweird.f32 %v2708
      %vm3112 = vweird.f32 %v3106
      %vm3113 = vmor %vm3111, %vm3112
      %v3114 = vsel %vm3113, %v3106, %v3110
      %v3115 = vand.u32 2147483647, %v2708
      %vm3116 = vcmp.eq.f32.partialorder %v3115, 8.507059e+37
      %v3117 = vand.u32 %v2708, 2147483648
      %v3118 = vor.u32 1.1754944e-38, %v3117
      %v3119 = vsel %vm3116, %v3118, %v3114
      %v3120 = vmul.f32 1.0, %v3119
      %v3121 = vrcp.pop %v2709
      %v3122 = vmul.f32 %v2709, %v3121
      %v3123 = vsub.f32 1.0, %v3122
      %v3124 = vmul.f32 %v3121, %v3123
      %v3125 = vadd.f32 %v3121, %v3124
      %vm3126 = vweird.f32 %v2709
      %vm3127 = vweird.f32 %v3121
      %vm3128 = vmor %vm3126, %vm3127
      %v3129 = vsel %vm3128, %v3121, %v3125
      %v3130 = vand.u32 2147483647, %v2709
      %vm3131 = vcmp.eq.f32.partialorder %v3130, 8.507059e+37
      %v3132 = vand.u32 %v2709, 2147483648
      %v3133 = vor.u32 1.1754944e-38, %v3132
      %v3134 = vsel %vm3131, %v3133, %v3129
      %v3135 = vmul.f32 1.0, %v3134
      %v3136 = vrcp.pop %v2710
      %v3137 = vmul.f32 %v2710, %v3136
      %v3138 = vsub.f32 1.0, %v3137
      %v3139 = vmul.f32 %v3136, %v3138
      %v3140 = vadd.f32 %v3136, %v3139
      %vm3141 = vweird.f32 %v2710
      %vm3142 = vweird.f32 %v3136
      %vm3143 = vmor %vm3141, %vm3142
      %v3144 = vsel %vm3143, %v3136, %v3140
      %v3145 = vand.u32 2147483647, %v2710
      %vm3146 = vcmp.eq.f32.partialorder %v3145, 8.507059e+37
      %v3147 = vand.u32 %v2710, 2147483648
      %v3148 = vor.u32 1.1754944e-38, %v3147
      %v3149 = vsel %vm3146, %v3148, %v3144
      %v3150 = vmul.f32 1.0, %v3149
      %v3151 = vrcp.pop %v2711
      %v3152 = vmul.f32 %v2711, %v3151
      %v3153 = vsub.f32 1.0, %v3152
      %v3154 = vmul.f32 %v3151, %v3153
      %v3155 = vadd.f32 %v3151, %v3154
      %vm3156 = vweird.f32 %v2711
      %vm3157 = vweird.f32 %v3151
      %vm3158 = vmor %vm3156, %vm3157
      %v3159 = vsel %vm3158, %v3151, %v3155
      %v3160 = vand.u32 2147483647, %v2711
      %vm3161 = vcmp.eq.f32.partialorder %v3160, 8.507059e+37
      %v3162 = vand.u32 %v2711, 2147483648
      %v3163 = vor.u32 1.1754944e-38, %v3162
      %v3164 = vsel %vm3161, %v3163, %v3159
      %v3165 = vmul.f32 1.0, %v3164
      %v3166 = vrcp.pop %v2712
      %v3167 = vmul.f32 %v2712, %v3166
      %v3168 = vsub.f32 1.0, %v3167
      %v3169 = vmul.f32 %v3166, %v3168
      %v3170 = vadd.f32 %v3166, %v3169
      %vm3171 = vweird.f32 %v2712
      %vm3172 = vweird.f32 %v3166
      %vm3173 = vmor %vm3171, %vm3172
      %v3174 = vsel %vm3173, %v3166, %v3170
      %v3175 = vand.u32 2147483647, %v2712
      %vm3176 = vcmp.eq.f32.partialorder %v3175, 8.507059e+37
      %v3177 = vand.u32 %v2712, 2147483648
      %v3178 = vor.u32 1.1754944e-38, %v3177
      %v3179 = vsel %vm3176, %v3178, %v3174
      %v3180 = vmul.f32 1.0, %v3179
      %v3181 = vrcp.pop %v2713
      %v3182 = vmul.f32 %v2713, %v3181
      %v3183 = vsub.f32 1.0, %v3182
      %v3184 = vmul.f32 %v3181, %v3183
      %v3185 = vadd.f32 %v3181, %v3184
      %vm3186 = vweird.f32 %v2713
      %vm3187 = vweird.f32 %v3181
      %vm3188 = vmor %vm3186, %vm3187
      %v3189 = vsel %vm3188, %v3181, %v3185
      %v3190 = vand.u32 2147483647, %v2713
      %vm3191 = vcmp.eq.f32.partialorder %v3190, 8.507059e+37
      %v3192 = vand.u32 %v2713, 2147483648
      %v3193 = vor.u32 1.1754944e-38, %v3192
      %v3194 = vsel %vm3191, %v3193, %v3189
      %v3195 = vmul.f32 1.0, %v3194
      %v3196 = vrcp.pop %v2714
      %v3197 = vmul.f32 %v2714, %v3196
      %v3198 = vsub.f32 1.0, %v3197
      %v3199 = vmul.f32 %v3196, %v3198
      %v3200 = vadd.f32 %v3196, %v3199
      %vm3201 = vweird.f32 %v2714
      %vm3202 = vweird.f32 %v3196
      %vm3203 = vmor %vm3201, %vm3202
      %v3204 = vsel %vm3203, %v3196, %v3200
      %v3205 = vand.u32 2147483647, %v2714
      %vm3206 = vcmp.eq.f32.partialorder %v3205, 8.507059e+37
      %v3207 = vand.u32 %v2714, 2147483648
      %v3208 = vor.u32 1.1754944e-38, %v3207
      %v3209 = vsel %vm3206, %v3208, %v3204
      %v3210 = vmul.f32 1.0, %v3209
      %v3211 = vrcp.pop %v2715
      %v3212 = vmul.f32 %v2715, %v3211
      %v3213 = vsub.f32 1.0, %v3212
      %v3214 = vmul.f32 %v3211, %v3213
      %v3215 = vadd.f32 %v3211, %v3214
      %vm3216 = vweird.f32 %v2715
      %vm3217 = vweird.f32 %v3211
      %vm3218 = vmor %vm3216, %vm3217
      %v3219 = vsel %vm3218, %v3211, %v3215
      %v3220 = vand.u32 2147483647, %v2715
      %vm3221 = vcmp.eq.f32.partialorder %v3220, 8.507059e+37
      %v3222 = vand.u32 %v2715, 2147483648
      %v3223 = vor.u32 1.1754944e-38, %v3222
      %v3224 = vsel %vm3221, %v3223, %v3219
      %v3225 = vmul.f32 1.0, %v3224
      %v3226 = vrcp.pop %v2716
      %v3227 = vmul.f32 %v2716, %v3226
      %v3228 = vsub.f32 1.0, %v3227
      %v3229 = vmul.f32 %v3226, %v3228
      %v3230 = vadd.f32 %v3226, %v3229
      %vm3231 = vweird.f32 %v2716
      %vm3232 = vweird.f32 %v3226
      %vm3233 = vmor %vm3231, %vm3232
      %v3234 = vsel %vm3233, %v3226, %v3230
      %v3235 = vand.u32 2147483647, %v2716
      %vm3236 = vcmp.eq.f32.partialorder %v3235, 8.507059e+37
      %v3237 = vand.u32 %v2716, 2147483648
      %v3238 = vor.u32 1.1754944e-38, %v3237
      %v3239 = vsel %vm3236, %v3238, %v3234
      %v3240 = vmul.f32 1.0, %v3239
      %v3241 = vrcp.pop %v2717
      %v3242 = vmul.f32 %v2717, %v3241
      %v3243 = vsub.f32 1.0, %v3242
      %v3244 = vmul.f32 %v3241, %v3243
      %v3245 = vadd.f32 %v3241, %v3244
      %vm3246 = vweird.f32 %v2717
      %vm3247 = vweird.f32 %v3241
      %vm3248 = vmor %vm3246, %vm3247
      %v3249 = vsel %vm3248, %v3241, %v3245
      %v3250 = vand.u32 2147483647, %v2717
      %vm3251 = vcmp.eq.f32.partialorder %v3250, 8.507059e+37
      %v3252 = vand.u32 %v2717, 2147483648
      %v3253 = vor.u32 1.1754944e-38, %v3252
      %v3254 = vsel %vm3251, %v3253, %v3249
      %v3255 = vmul.f32 1.0, %v3254
      %v3256 = vrcp.pop %v2718
      %v3257 = vmul.f32 %v2718, %v3256
      %v3258 = vsub.f32 1.0, %v3257
      %v3259 = vmul.f32 %v3256, %v3258
      %v3260 = vadd.f32 %v3256, %v3259
      %vm3261 = vweird.f32 %v2718
      %vm3262 = vweird.f32 %v3256
      %vm3263 = vmor %vm3261, %vm3262
      %v3264 = vsel %vm3263, %v3256, %v3260
      %v3265 = vand.u32 2147483647, %v2718
      %vm3266 = vcmp.eq.f32.partialorder %v3265, 8.507059e+37
      %v3267 = vand.u32 %v2718, 2147483648
      %v3268 = vor.u32 1.1754944e-38, %v3267
      %v3269 = vsel %vm3266, %v3268, %v3264
      %v3270 = vmul.f32 1.0, %v3269
      %v3271 = vrcp.pop %v2719
      %v3272 = vmul.f32 %v2719, %v3271
      %v3273 = vsub.f32 1.0, %v3272
      %v3274 = vmul.f32 %v3271, %v3273
      %v3275 = vadd.f32 %v3271, %v3274
      %vm3276 = vweird.f32 %v2719
      %vm3277 = vweird.f32 %v3271
      %vm3278 = vmor %vm3276, %vm3277
      %v3279 = vsel %vm3278, %v3271, %v3275
      %v3280 = vand.u32 2147483647, %v2719
      %vm3281 = vcmp.eq.f32.partialorder %v3280, 8.507059e+37
      %v3282 = vand.u32 %v2719, 2147483648
      %v3283 = vor.u32 1.1754944e-38, %v3282
      %v3284 = vsel %vm3281, %v3283, %v3279
      %v3285 = vmul.f32 1.0, %v3284
      %v3286 = vrcp.pop %v2720
      %v3287 = vmul.f32 %v2720, %v3286
      %v3288 = vsub.f32 1.0, %v3287
      %v3289 = vmul.f32 %v3286, %v3288
      %v3290 = vadd.f32 %v3286, %v3289
      %vm3291 = vweird.f32 %v2720
      %vm3292 = vweird.f32 %v3286
      %vm3293 = vmor %vm3291, %vm3292
      %v3294 = vsel %vm3293, %v3286, %v3290
      %v3295 = vand.u32 2147483647, %v2720
      %vm3296 = vcmp.eq.f32.partialorder %v3295, 8.507059e+37
      %v3297 = vand.u32 %v2720, 2147483648
      %v3298 = vor.u32 1.1754944e-38, %v3297
      %v3299 = vsel %vm3296, %v3298, %v3294
      %v3300 = vmul.f32 1.0, %v3299
      %v3301 = vrcp.pop %v2721
      %v3302 = vmul.f32 %v2721, %v3301
      %v3303 = vsub.f32 1.0, %v3302
      %v3304 = vmul.f32 %v3301, %v3303
      %v3305 = vadd.f32 %v3301, %v3304
      %vm3306 = vweird.f32 %v2721
      %vm3307 = vweird.f32 %v3301
      %vm3308 = vmor %vm3306, %vm3307
      %v3309 = vsel %vm3308, %v3301, %v3305
      %v3310 = vand.u32 2147483647, %v2721
      %vm3311 = vcmp.eq.f32.partialorder %v3310, 8.507059e+37
      %v3312 = vand.u32 %v2721, 2147483648
      %v3313 = vor.u32 1.1754944e-38, %v3312
      %v3314 = vsel %vm3311, %v3313, %v3309
      %v3315 = vmul.f32 1.0, %v3314
      %v3316 = vrcp.pop %v2722
      %v3317 = vmul.f32 %v2722, %v3316
      %v3318 = vsub.f32 1.0, %v3317
      %v3319 = vmul.f32 %v3316, %v3318
      %v3320 = vadd.f32 %v3316, %v3319
      %vm3321 = vweird.f32 %v2722
      %vm3322 = vweird.f32 %v3316
      %vm3323 = vmor %vm3321, %vm3322
      %v3324 = vsel %vm3323, %v3316, %v3320
      %v3325 = vand.u32 2147483647, %v2722
      %vm3326 = vcmp.eq.f32.partialorder %v3325, 8.507059e+37
      %v3327 = vand.u32 %v2722, 2147483648
      %v3328 = vor.u32 1.1754944e-38, %v3327
      %v3329 = vsel %vm3326, %v3328, %v3324
      %v3330 = vmul.f32 1.0, %v3329
      %v3331 = vrcp.pop %v2723
      %v3332 = vmul.f32 %v2723, %v3331
      %v3333 = vsub.f32 1.0, %v3332
      %v3334 = vmul.f32 %v3331, %v3333
      %v3335 = vadd.f32 %v3331, %v3334
      %vm3336 = vweird.f32 %v2723
      %vm3337 = vweird.f32 %v3331
      %vm3338 = vmor %vm3336, %vm3337
      %v3339 = vsel %vm3338, %v3331, %v3335
      %v3340 = vand.u32 2147483647, %v2723
      %vm3341 = vcmp.eq.f32.partialorder %v3340, 8.507059e+37
      %v3342 = vand.u32 %v2723, 2147483648
      %v3343 = vor.u32 1.1754944e-38, %v3342
      %v3344 = vsel %vm3341, %v3343, %v3339
      %v3345 = vmul.f32 1.0, %v3344
      %v3346 = vrcp.pop %v2724
      %v3347 = vmul.f32 %v2724, %v3346
      %v3348 = vsub.f32 1.0, %v3347
      %v3349 = vmul.f32 %v3346, %v3348
      %v3350 = vadd.f32 %v3346, %v3349
      %vm3351 = vweird.f32 %v2724
      %vm3352 = vweird.f32 %v3346
      %vm3353 = vmor %vm3351, %vm3352
      %v3354 = vsel %vm3353, %v3346, %v3350
      %v3355 = vand.u32 2147483647, %v2724
      %vm3356 = vcmp.eq.f32.partialorder %v3355, 8.507059e+37
      %v3357 = vand.u32 %v2724, 2147483648
      %v3358 = vor.u32 1.1754944e-38, %v3357
      %v3359 = vsel %vm3356, %v3358, %v3354
      %v3360 = vmul.f32 1.0, %v3359
      %v3361 = vrcp.pop %v2725
      %v3362 = vmul.f32 %v2725, %v3361
      %v3363 = vsub.f32 1.0, %v3362
      %v3364 = vmul.f32 %v3361, %v3363
      %v3365 = vadd.f32 %v3361, %v3364
      %vm3366 = vweird.f32 %v2725
      %vm3367 = vweird.f32 %v3361
      %vm3368 = vmor %vm3366, %vm3367
      %v3369 = vsel %vm3368, %v3361, %v3365
      %v3370 = vand.u32 2147483647, %v2725
      %vm3371 = vcmp.eq.f32.partialorder %v3370, 8.507059e+37
      %v3372 = vand.u32 %v2725, 2147483648
      %v3373 = vor.u32 1.1754944e-38, %v3372
      %v3374 = vsel %vm3371, %v3373, %v3369
      %v3375 = vmul.f32 1.0, %v3374
      %v3376 = vrcp.pop %v2726
      %v3377 = vmul.f32 %v2726, %v3376
      %v3378 = vsub.f32 1.0, %v3377
      %v3379 = vmul.f32 %v3376, %v3378
      %v3380 = vadd.f32 %v3376, %v3379
      %vm3381 = vweird.f32 %v2726
      %vm3382 = vweird.f32 %v3376
      %vm3383 = vmor %vm3381, %vm3382
      %v3384 = vsel %vm3383, %v3376, %v3380
      %v3385 = vand.u32 2147483647, %v2726
      %vm3386 = vcmp.eq.f32.partialorder %v3385, 8.507059e+37
      %v3387 = vand.u32 %v2726, 2147483648
      %v3388 = vor.u32 1.1754944e-38, %v3387
      %v3389 = vsel %vm3386, %v3388, %v3384
      %v3390 = vmul.f32 1.0, %v3389
      %v3391 = vrcp.pop %v2727
      %v3392 = vmul.f32 %v2727, %v3391
      %v3393 = vsub.f32 1.0, %v3392
      %v3394 = vmul.f32 %v3391, %v3393
      %v3395 = vadd.f32 %v3391, %v3394
      %vm3396 = vweird.f32 %v2727
      %vm3397 = vweird.f32 %v3391
      %vm3398 = vmor %vm3396, %vm3397
      %v3399 = vsel %vm3398, %v3391, %v3395
      %v3400 = vand.u32 2147483647, %v2727
      %vm3401 = vcmp.eq.f32.partialorder %v3400, 8.507059e+37
      %v3402 = vand.u32 %v2727, 2147483648
      %v3403 = vor.u32 1.1754944e-38, %v3402
      %v3404 = vsel %vm3401, %v3403, %v3399
      %v3405 = vmul.f32 1.0, %v3404
      %v3406 = vrcp.pop %v2728
      %v3407 = vmul.f32 %v2728, %v3406
      %v3408 = vsub.f32 1.0, %v3407
      %v3409 = vmul.f32 %v3406, %v3408
      %v3410 = vadd.f32 %v3406, %v3409
      %vm3411 = vweird.f32 %v2728
      %vm3412 = vweird.f32 %v3406
      %vm3413 = vmor %vm3411, %vm3412
      %v3414 = vsel %vm3413, %v3406, %v3410
      %v3415 = vand.u32 2147483647, %v2728
      %vm3416 = vcmp.eq.f32.partialorder %v3415, 8.507059e+37
      %v3417 = vand.u32 %v2728, 2147483648
      %v3418 = vor.u32 1.1754944e-38, %v3417
      %v3419 = vsel %vm3416, %v3418, %v3414
      %v3420 = vmul.f32 1.0, %v3419
      %v3421 = vrcp.pop %v2729
      %v3422 = vmul.f32 %v2729, %v3421
      %v3423 = vsub.f32 1.0, %v3422
      %v3424 = vmul.f32 %v3421, %v3423
      %v3425 = vadd.f32 %v3421, %v3424
      %vm3426 = vweird.f32 %v2729
      %vm3427 = vweird.f32 %v3421
      %vm3428 = vmor %vm3426, %vm3427
      %v3429 = vsel %vm3428, %v3421, %v3425
      %v3430 = vand.u32 2147483647, %v2729
      %vm3431 = vcmp.eq.f32.partialorder %v3430, 8.507059e+37
      %v3432 = vand.u32 %v2729, 2147483648
      %v3433 = vor.u32 1.1754944e-38, %v3432
      %v3434 = vsel %vm3431, %v3433, %v3429
      %v3435 = vmul.f32 1.0, %v3434
      %v3436 = vrcp.pop %v2730
      %v3437 = vmul.f32 %v2730, %v3436
      %v3438 = vsub.f32 1.0, %v3437
      %v3439 = vmul.f32 %v3436, %v3438
      %v3440 = vadd.f32 %v3436, %v3439
      %vm3441 = vweird.f32 %v2730
      %vm3442 = vweird.f32 %v3436
      %vm3443 = vmor %vm3441, %vm3442
      %v3444 = vsel %vm3443, %v3436, %v3440
      %v3445 = vand.u32 2147483647, %v2730
      %vm3446 = vcmp.eq.f32.partialorder %v3445, 8.507059e+37
      %v3447 = vand.u32 %v2730, 2147483648
      %v3448 = vor.u32 1.1754944e-38, %v3447
      %v3449 = vsel %vm3446, %v3448, %v3444
      %v3450 = vmul.f32 1.0, %v3449
      %v3451 = vtanh.pop %v2420
      %v3452 = vtanh.pop %v2422
      %v3453 = vtanh.pop %v2425
      %v3454 = vtanh.pop %v2427
      %v3455 = vtanh.pop %v2430
      %v3456 = vtanh.pop %v2432
      %v3457 = vtanh.pop %v2435
      %v3458 = vtanh.pop %v2437
      %v3459 = vtanh.pop %v2440
      %v3460 = vtanh.pop %v2442
      %v3461 = vtanh.pop %v2445
      %v3462 = vtanh.pop %v2447
      %v3463 = vtanh.pop %v2450
      %v3464 = vtanh.pop %v2452
      %v3465 = vtanh.pop %v2455
      %v3466 = vtanh.pop %v2457
      %v3467 = vtanh.pop %v2460
      %v3468 = vtanh.pop %v2462
      %v3469 = vtanh.pop %v2465
      %v3470 = vtanh.pop %v2467
      %v3471 = vtanh.pop %v2470
      %v3472 = vtanh.pop %v2472
      %v3473 = vtanh.pop %v2475
      %v3474 = vtanh.pop %v2477
      %v3475 = vtanh.pop %v2480
      %v3476 = vtanh.pop %v2482
      %v3477 = vtanh.pop %v2485
      %v3478 = vtanh.pop %v2487
      %v3479 = vtanh.pop %v2490
      %v3480 = vtanh.pop %v2492
      %v3481 = vtanh.pop %v2495
      %v3482 = vtanh.pop %v2497
      %v3483 = vtanh.pop %v2500
      %v3484 = vtanh.pop %v2502
      %v3485 = vtanh.pop %v2505
      %v3486 = vtanh.pop %v2507
      %v3487 = vtanh.pop %v2510
      %v3488 = vtanh.pop %v2512
      %v3489 = vtanh.pop %v2515
      %v3490 = vtanh.pop %v2517
      %v3491 = vtanh.pop %v2520
      %v3492 = vtanh.pop %v2522
      %v3493 = vtanh.pop %v2525
      %v3494 = vtanh.pop %v2527
      %v3495 = vtanh.pop %v2530
      %v3496 = vtanh.pop %v2532
      %v3497 = vtanh.pop %v2535
      %v3498 = vtanh.pop %v2537
      %v3499 = vld [vmem:[%s273] sm:$0xff]
      %v3500 = vld [vmem:[%s273 + $0x8] sm:$0xff]
      %v3501 = vld [vmem:[%s273 + $0x10] sm:$0xff]
      %v3502 = vld [vmem:[%s273 + $0x18] sm:$0xff]
      %v3503 = vld [vmem:[%s273 + $0x20] sm:$0xff]
      %v3504 = vld [vmem:[%s273 + $0x28] sm:$0xff]
      %v3505 = vld [vmem:[%s273 + $0x30] sm:$0xff]
      %v3506 = vld [vmem:[%s273 + $0x38] sm:$0xff]
      %v3507 = vld [vmem:[%s273 + $0x40] sm:$0xff]
      %v3508 = vld [vmem:[%s273 + $0x48] sm:$0xff]
      %v3509 = vld [vmem:[%s273 + $0x50] sm:$0xff]
      %v3510 = vld [vmem:[%s273 + $0x58] sm:$0xff]
      %v3511 = vld [vmem:[%s273 + $0x60] sm:$0xff]
      %v3512 = vld [vmem:[%s273 + $0x68] sm:$0xff]
      %v3513 = vld [vmem:[%s273 + $0x70] sm:$0xff]
      %v3514 = vld [vmem:[%s273 + $0x78] sm:$0xff]
      %v3515 = vld [vmem:[%s273 + $0x80] sm:$0xff]
      %v3516 = vld [vmem:[%s273 + $0x88] sm:$0xff]
      %v3517 = vld [vmem:[%s273 + $0x90] sm:$0xff]
      %v3518 = vld [vmem:[%s273 + $0x98] sm:$0xff]
      %v3519 = vld [vmem:[%s273 + $0xa0] sm:$0xff]
      %v3520 = vld [vmem:[%s273 + $0xa8] sm:$0xff]
      %v3521 = vld [vmem:[%s273 + $0xb0] sm:$0xff]
      %v3522 = vld [vmem:[%s273 + $0xb8] sm:$0xff]
      %v3523 = vld [vmem:[%s273 + $0xc0] sm:$0xff]
      %v3524 = vld [vmem:[%s273 + $0xc8] sm:$0xff]
      %v3525 = vld [vmem:[%s273 + $0xd0] sm:$0xff]
      %v3526 = vld [vmem:[%s273 + $0xd8] sm:$0xff]
      %v3527 = vld [vmem:[%s273 + $0xe0] sm:$0xff]
      %v3528 = vld [vmem:[%s273 + $0xe8] sm:$0xff]
      %v3529 = vld [vmem:[%s273 + $0xf0] sm:$0xff]
      %v3530 = vld [vmem:[%s273 + $0xf8] sm:$0xff]
      %v3531 = vld [vmem:[%s273 + $0x100] sm:$0xff]
      %v3532 = vld [vmem:[%s273 + $0x108] sm:$0xff]
      %v3533 = vld [vmem:[%s273 + $0x110] sm:$0xff]
      %v3534 = vld [vmem:[%s273 + $0x118] sm:$0xff]
      %v3535 = vld [vmem:[%s273 + $0x120] sm:$0xff]
      %v3536 = vld [vmem:[%s273 + $0x128] sm:$0xff]
      %v3537 = vld [vmem:[%s273 + $0x130] sm:$0xff]
      %v3538 = vld [vmem:[%s273 + $0x138] sm:$0xff]
      %v3539 = vld [vmem:[%s273 + $0x140] sm:$0xff]
      %v3540 = vld [vmem:[%s273 + $0x148] sm:$0xff]
      %v3541 = vld [vmem:[%s273 + $0x150] sm:$0xff]
      %v3542 = vld [vmem:[%s273 + $0x158] sm:$0xff]
      %v3543 = vld [vmem:[%s273 + $0x160] sm:$0xff]
      %v3544 = vld [vmem:[%s273 + $0x168] sm:$0xff]
      %v3545 = vld [vmem:[%s273 + $0x170] sm:$0xff]
      %v3546 = vld [vmem:[%s273 + $0x178] sm:$0xff]
      %3595 = vrot.lane.b32.xlu0 %v3499, 32
      %v3596 = vpop.permute.xlu0 %3595
      %3597 = vrot.lane.b32.xlu0 %v3500, 32
      %v3598 = vpop.permute.xlu0 %3597
      %3599 = vrot.lane.b32.xlu0 %v3501, 32
      %v3600 = vpop.permute.xlu0 %3599
      %3601 = vrot.lane.b32.xlu0 %v3502, 32
      %v3602 = vpop.permute.xlu0 %3601
      %3603 = vrot.lane.b32.xlu0 %v3503, 32
      %v3604 = vpop.permute.xlu0 %3603
      %3605 = vrot.lane.b32.xlu0 %v3504, 32
      %v3606 = vpop.permute.xlu0 %3605
      %3607 = vrot.lane.b32.xlu0 %v3505, 32
      %v3608 = vpop.permute.xlu0 %3607
      %3609 = vrot.lane.b32.xlu0 %v3506, 32
      %v3610 = vpop.permute.xlu0 %3609
      %3611 = vrot.lane.b32.xlu0 %v3507, 32
      %v3612 = vpop.permute.xlu0 %3611
      %3613 = vrot.lane.b32.xlu0 %v3508, 32
      %v3614 = vpop.permute.xlu0 %3613
      %3615 = vrot.lane.b32.xlu0 %v3509, 32
      %v3616 = vpop.permute.xlu0 %3615
      %3617 = vrot.lane.b32.xlu0 %v3510, 32
      %v3618 = vpop.permute.xlu0 %3617
      %3619 = vrot.lane.b32.xlu0 %v3511, 32
      %v3620 = vpop.permute.xlu0 %3619
      %3621 = vrot.lane.b32.xlu0 %v3512, 32
      %v3622 = vpop.permute.xlu0 %3621
      %3623 = vrot.lane.b32.xlu0 %v3513, 32
      %v3624 = vpop.permute.xlu0 %3623
      %3625 = vrot.lane.b32.xlu0 %v3514, 32
      %v3626 = vpop.permute.xlu0 %3625
      %3627 = vrot.lane.b32.xlu0 %v3515, 32
      %v3628 = vpop.permute.xlu0 %3627
      %3629 = vrot.lane.b32.xlu0 %v3516, 32
      %v3630 = vpop.permute.xlu0 %3629
      %3631 = vrot.lane.b32.xlu0 %v3517, 32
      %v3632 = vpop.permute.xlu0 %3631
      %3633 = vrot.lane.b32.xlu0 %v3518, 32
      %v3634 = vpop.permute.xlu0 %3633
      %3635 = vrot.lane.b32.xlu0 %v3519, 32
      %v3636 = vpop.permute.xlu0 %3635
      %3637 = vrot.lane.b32.xlu0 %v3520, 32
      %v3638 = vpop.permute.xlu0 %3637
      %3639 = vrot.lane.b32.xlu0 %v3521, 32
      %v3640 = vpop.permute.xlu0 %3639
      %3641 = vrot.lane.b32.xlu0 %v3522, 32
      %v3642 = vpop.permute.xlu0 %3641
      %3643 = vrot.lane.b32.xlu0 %v3523, 32
      %v3644 = vpop.permute.xlu0 %3643
      %3645 = vrot.lane.b32.xlu0 %v3524, 32
      %v3646 = vpop.permute.xlu0 %3645
      %3647 = vrot.lane.b32.xlu0 %v3525, 32
      %v3648 = vpop.permute.xlu0 %3647
      %3649 = vrot.lane.b32.xlu0 %v3526, 32
      %v3650 = vpop.permute.xlu0 %3649
      %3651 = vrot.lane.b32.xlu0 %v3527, 32
      %v3652 = vpop.permute.xlu0 %3651
      %3653 = vrot.lane.b32.xlu0 %v3528, 32
      %v3654 = vpop.permute.xlu0 %3653
      %3655 = vrot.lane.b32.xlu0 %v3529, 32
      %v3656 = vpop.permute.xlu0 %3655
      %3657 = vrot.lane.b32.xlu0 %v3530, 32
      %v3658 = vpop.permute.xlu0 %3657
      %3659 = vrot.lane.b32.xlu0 %v3531, 32
      %v3660 = vpop.permute.xlu0 %3659
      %3661 = vrot.lane.b32.xlu0 %v3532, 32
      %v3662 = vpop.permute.xlu0 %3661
      %3663 = vrot.lane.b32.xlu0 %v3533, 32
      %v3664 = vpop.permute.xlu0 %3663
      %3665 = vrot.lane.b32.xlu0 %v3534, 32
      %v3666 = vpop.permute.xlu0 %3665
      %3667 = vrot.lane.b32.xlu0 %v3535, 32
      %v3668 = vpop.permute.xlu0 %3667
      %3669 = vrot.lane.b32.xlu0 %v3536, 32
      %v3670 = vpop.permute.xlu0 %3669
      %3671 = vrot.lane.b32.xlu0 %v3537, 32
      %v3672 = vpop.permute.xlu0 %3671
      %3673 = vrot.lane.b32.xlu0 %v3538, 32
      %v3674 = vpop.permute.xlu0 %3673
      %3675 = vrot.lane.b32.xlu0 %v3539, 32
      %v3676 = vpop.permute.xlu0 %3675
      %3677 = vrot.lane.b32.xlu0 %v3540, 32
      %v3678 = vpop.permute.xlu0 %3677
      %3679 = vrot.lane.b32.xlu0 %v3541, 32
      %v3680 = vpop.permute.xlu0 %3679
      %3681 = vrot.lane.b32.xlu0 %v3542, 32
      %v3682 = vpop.permute.xlu0 %3681
      %3683 = vrot.lane.b32.xlu0 %v3543, 32
      %v3684 = vpop.permute.xlu0 %3683
      %3685 = vrot.lane.b32.xlu0 %v3544, 32
      %v3686 = vpop.permute.xlu0 %3685
      %3687 = vrot.lane.b32.xlu0 %v3545, 32
      %v3688 = vpop.permute.xlu0 %3687
      %3689 = vrot.lane.b32.xlu0 %v3546, 32
      %v3690 = vpop.permute.xlu0 %3689
      %v3739 = vmul.f32 %v2745, %v3596
      %v3740 = vmul.f32 %v2760, %v3598
      %v3741 = vmul.f32 %v2775, %v3600
      %v3742 = vmul.f32 %v2790, %v3602
      %v3743 = vmul.f32 %v2805, %v3604
      %v3744 = vmul.f32 %v2820, %v3606
      %v3745 = vmul.f32 %v2835, %v3608
      %v3746 = vmul.f32 %v2850, %v3610
      %v3747 = vmul.f32 %v2865, %v3612
      %v3748 = vmul.f32 %v2880, %v3614
      %v3749 = vmul.f32 %v2895, %v3616
      %v3750 = vmul.f32 %v2910, %v3618
      %v3751 = vmul.f32 %v2925, %v3620
      %v3752 = vmul.f32 %v2940, %v3622
      %v3753 = vmul.f32 %v2955, %v3624
      %v3754 = vmul.f32 %v2970, %v3626
      %v3755 = vmul.f32 %v2985, %v3628
      %v3756 = vmul.f32 %v3000, %v3630
      %v3757 = vmul.f32 %v3015, %v3632
      %v3758 = vmul.f32 %v3030, %v3634
      %v3759 = vmul.f32 %v3045, %v3636
      %v3760 = vmul.f32 %v3060, %v3638
      %v3761 = vmul.f32 %v3075, %v3640
      %v3762 = vmul.f32 %v3090, %v3642
      %v3763 = vmul.f32 %v3105, %v3644
      %v3764 = vmul.f32 %v3120, %v3646
      %v3765 = vmul.f32 %v3135, %v3648
      %v3766 = vmul.f32 %v3150, %v3650
      %v3767 = vmul.f32 %v3165, %v3652
      %v3768 = vmul.f32 %v3180, %v3654
      %v3769 = vmul.f32 %v3195, %v3656
      %v3770 = vmul.f32 %v3210, %v3658
      %v3771 = vmul.f32 %v3225, %v3660
      %v3772 = vmul.f32 %v3240, %v3662
      %v3773 = vmul.f32 %v3255, %v3664
      %v3774 = vmul.f32 %v3270, %v3666
      %v3775 = vmul.f32 %v3285, %v3668
      %v3776 = vmul.f32 %v3300, %v3670
      %v3777 = vmul.f32 %v3315, %v3672
      %v3778 = vmul.f32 %v3330, %v3674
      %v3779 = vmul.f32 %v3345, %v3676
      %v3780 = vmul.f32 %v3360, %v3678
      %v3781 = vmul.f32 %v3375, %v3680
      %v3782 = vmul.f32 %v3390, %v3682
      %v3783 = vmul.f32 %v3405, %v3684
      %v3784 = vmul.f32 %v3420, %v3686
      %v3785 = vmul.f32 %v3435, %v3688
      %v3786 = vmul.f32 %v3450, %v3690
      %3835 = vrot.lane.b32.xlu0 %v3451, 64
      %v3836 = vpop.permute.xlu0 %3835
      %3837 = vrot.lane.b32.xlu0 %v3452, 64
      %v3838 = vpop.permute.xlu0 %3837
      %3839 = vrot.lane.b32.xlu0 %v3453, 64
      %v3840 = vpop.permute.xlu0 %3839
      %3841 = vrot.lane.b32.xlu0 %v3454, 64
      %v3842 = vpop.permute.xlu0 %3841
      %3843 = vrot.lane.b32.xlu0 %v3455, 64
      %v3844 = vpop.permute.xlu0 %3843
      %3845 = vrot.lane.b32.xlu0 %v3456, 64
      %v3846 = vpop.permute.xlu0 %3845
      %3847 = vrot.lane.b32.xlu0 %v3457, 64
      %v3848 = vpop.permute.xlu0 %3847
      %3849 = vrot.lane.b32.xlu0 %v3458, 64
      %v3850 = vpop.permute.xlu0 %3849
      %3851 = vrot.lane.b32.xlu0 %v3459, 64
      %v3852 = vpop.permute.xlu0 %3851
      %3853 = vrot.lane.b32.xlu0 %v3460, 64
      %v3854 = vpop.permute.xlu0 %3853
      %3855 = vrot.lane.b32.xlu0 %v3461, 64
      %v3856 = vpop.permute.xlu0 %3855
      %3857 = vrot.lane.b32.xlu0 %v3462, 64
      %v3858 = vpop.permute.xlu0 %3857
      %3859 = vrot.lane.b32.xlu0 %v3463, 64
      %v3860 = vpop.permute.xlu0 %3859
      %3861 = vrot.lane.b32.xlu0 %v3464, 64
      %v3862 = vpop.permute.xlu0 %3861
      %3863 = vrot.lane.b32.xlu0 %v3465, 64
      %v3864 = vpop.permute.xlu0 %3863
      %3865 = vrot.lane.b32.xlu0 %v3466, 64
      %v3866 = vpop.permute.xlu0 %3865
      %3867 = vrot.lane.b32.xlu0 %v3467, 64
      %v3868 = vpop.permute.xlu0 %3867
      %3869 = vrot.lane.b32.xlu0 %v3468, 64
      %v3870 = vpop.permute.xlu0 %3869
      %3871 = vrot.lane.b32.xlu0 %v3469, 64
      %v3872 = vpop.permute.xlu0 %3871
      %3873 = vrot.lane.b32.xlu0 %v3470, 64
      %v3874 = vpop.permute.xlu0 %3873
      %3875 = vrot.lane.b32.xlu0 %v3471, 64
      %v3876 = vpop.permute.xlu0 %3875
      %3877 = vrot.lane.b32.xlu0 %v3472, 64
      %v3878 = vpop.permute.xlu0 %3877
      %3879 = vrot.lane.b32.xlu0 %v3473, 64
      %v3880 = vpop.permute.xlu0 %3879
      %3881 = vrot.lane.b32.xlu0 %v3474, 64
      %v3882 = vpop.permute.xlu0 %3881
      %3883 = vrot.lane.b32.xlu0 %v3475, 64
      %v3884 = vpop.permute.xlu0 %3883
      %3885 = vrot.lane.b32.xlu0 %v3476, 64
      %v3886 = vpop.permute.xlu0 %3885
      %3887 = vrot.lane.b32.xlu0 %v3477, 64
      %v3888 = vpop.permute.xlu0 %3887
      %3889 = vrot.lane.b32.xlu0 %v3478, 64
      %v3890 = vpop.permute.xlu0 %3889
      %3891 = vrot.lane.b32.xlu0 %v3479, 64
      %v3892 = vpop.permute.xlu0 %3891
      %3893 = vrot.lane.b32.xlu0 %v3480, 64
      %v3894 = vpop.permute.xlu0 %3893
      %3895 = vrot.lane.b32.xlu0 %v3481, 64
      %v3896 = vpop.permute.xlu0 %3895
      %3897 = vrot.lane.b32.xlu0 %v3482, 64
      %v3898 = vpop.permute.xlu0 %3897
      %3899 = vrot.lane.b32.xlu0 %v3483, 64
      %v3900 = vpop.permute.xlu0 %3899
      %3901 = vrot.lane.b32.xlu0 %v3484, 64
      %v3902 = vpop.permute.xlu0 %3901
      %3903 = vrot.lane.b32.xlu0 %v3485, 64
      %v3904 = vpop.permute.xlu0 %3903
      %3905 = vrot.lane.b32.xlu0 %v3486, 64
      %v3906 = vpop.permute.xlu0 %3905
      %3907 = vrot.lane.b32.xlu0 %v3487, 64
      %v3908 = vpop.permute.xlu0 %3907
      %3909 = vrot.lane.b32.xlu0 %v3488, 64
      %v3910 = vpop.permute.xlu0 %3909
      %3911 = vrot.lane.b32.xlu0 %v3489, 64
      %v3912 = vpop.permute.xlu0 %3911
      %3913 = vrot.lane.b32.xlu0 %v3490, 64
      %v3914 = vpop.permute.xlu0 %3913
      %3915 = vrot.lane.b32.xlu0 %v3491, 64
      %v3916 = vpop.permute.xlu0 %3915
      %3917 = vrot.lane.b32.xlu0 %v3492, 64
      %v3918 = vpop.permute.xlu0 %3917
      %3919 = vrot.lane.b32.xlu0 %v3493, 64
      %v3920 = vpop.permute.xlu0 %3919
      %3921 = vrot.lane.b32.xlu0 %v3494, 64
      %v3922 = vpop.permute.xlu0 %3921
      %3923 = vrot.lane.b32.xlu0 %v3495, 64
      %v3924 = vpop.permute.xlu0 %3923
      %3925 = vrot.lane.b32.xlu0 %v3496, 64
      %v3926 = vpop.permute.xlu0 %3925
      %3927 = vrot.lane.b32.xlu0 %v3497, 64
      %v3928 = vpop.permute.xlu0 %3927
      %3929 = vrot.lane.b32.xlu0 %v3498, 64
      %v3930 = vpop.permute.xlu0 %3929
      %v3979 = vmul.f32 %v2745, %v3836
      %v3980 = vmul.f32 %v2760, %v3838
      %v3981 = vmul.f32 %v2775, %v3840
      %v3982 = vmul.f32 %v2790, %v3842
      %v3983 = vmul.f32 %v2805, %v3844
      %v3984 = vmul.f32 %v2820, %v3846
      %v3985 = vmul.f32 %v2835, %v3848
      %v3986 = vmul.f32 %v2850, %v3850
      %v3987 = vmul.f32 %v2865, %v3852
      %v3988 = vmul.f32 %v2880, %v3854
      %v3989 = vmul.f32 %v2895, %v3856
      %v3990 = vmul.f32 %v2910, %v3858
      %v3991 = vmul.f32 %v2925, %v3860
      %v3992 = vmul.f32 %v2940, %v3862
      %v3993 = vmul.f32 %v2955, %v3864
      %v3994 = vmul.f32 %v2970, %v3866
      %v3995 = vmul.f32 %v2985, %v3868
      %v3996 = vmul.f32 %v3000, %v3870
      %v3997 = vmul.f32 %v3015, %v3872
      %v3998 = vmul.f32 %v3030, %v3874
      %v3999 = vmul.f32 %v3045, %v3876
      %v4000 = vmul.f32 %v3060, %v3878
      %v4001 = vmul.f32 %v3075, %v3880
      %v4002 = vmul.f32 %v3090, %v3882
      %v4003 = vmul.f32 %v3105, %v3884
      %v4004 = vmul.f32 %v3120, %v3886
      %v4005 = vmul.f32 %v3135, %v3888
      %v4006 = vmul.f32 %v3150, %v3890
      %v4007 = vmul.f32 %v3165, %v3892
      %v4008 = vmul.f32 %v3180, %v3894
      %v4009 = vmul.f32 %v3195, %v3896
      %v4010 = vmul.f32 %v3210, %v3898
      %v4011 = vmul.f32 %v3225, %v3900
      %v4012 = vmul.f32 %v3240, %v3902
      %v4013 = vmul.f32 %v3255, %v3904
      %v4014 = vmul.f32 %v3270, %v3906
      %v4015 = vmul.f32 %v3285, %v3908
      %v4016 = vmul.f32 %v3300, %v3910
      %v4017 = vmul.f32 %v3315, %v3912
      %v4018 = vmul.f32 %v3330, %v3914
      %v4019 = vmul.f32 %v3345, %v3916
      %v4020 = vmul.f32 %v3360, %v3918
      %v4021 = vmul.f32 %v3375, %v3920
      %v4022 = vmul.f32 %v3390, %v3922
      %v4023 = vmul.f32 %v3405, %v3924
      %v4024 = vmul.f32 %v3420, %v3926
      %v4025 = vmul.f32 %v3435, %v3928
      %v4026 = vmul.f32 %v3450, %v3930
      %4075 = vrot.lane.b32.xlu0 %v3979, 32
      %v4076 = vpop.permute.xlu0 %4075
      %4077 = vrot.lane.b32.xlu0 %v3980, 32
      %v4078 = vpop.permute.xlu0 %4077
      %4079 = vrot.lane.b32.xlu0 %v3981, 32
      %v4080 = vpop.permute.xlu0 %4079
      %4081 = vrot.lane.b32.xlu0 %v3982, 32
      %v4082 = vpop.permute.xlu0 %4081
      %4083 = vrot.lane.b32.xlu0 %v3983, 32
      %v4084 = vpop.permute.xlu0 %4083
      %4085 = vrot.lane.b32.xlu0 %v3984, 32
      %v4086 = vpop.permute.xlu0 %4085
      %4087 = vrot.lane.b32.xlu0 %v3985, 32
      %v4088 = vpop.permute.xlu0 %4087
      %4089 = vrot.lane.b32.xlu0 %v3986, 32
      %v4090 = vpop.permute.xlu0 %4089
      %4091 = vrot.lane.b32.xlu0 %v3987, 32
      %v4092 = vpop.permute.xlu0 %4091
      %4093 = vrot.lane.b32.xlu0 %v3988, 32
      %v4094 = vpop.permute.xlu0 %4093
      %4095 = vrot.lane.b32.xlu0 %v3989, 32
      %v4096 = vpop.permute.xlu0 %4095
      %4097 = vrot.lane.b32.xlu0 %v3990, 32
      %v4098 = vpop.permute.xlu0 %4097
      %4099 = vrot.lane.b32.xlu0 %v3991, 32
      %v4100 = vpop.permute.xlu0 %4099
      %4101 = vrot.lane.b32.xlu0 %v3992, 32
      %v4102 = vpop.permute.xlu0 %4101
      %4103 = vrot.lane.b32.xlu0 %v3993, 32
      %v4104 = vpop.permute.xlu0 %4103
      %4105 = vrot.lane.b32.xlu0 %v3994, 32
      %v4106 = vpop.permute.xlu0 %4105
      %4107 = vrot.lane.b32.xlu0 %v3995, 32
      %v4108 = vpop.permute.xlu0 %4107
      %4109 = vrot.lane.b32.xlu0 %v3996, 32
      %v4110 = vpop.permute.xlu0 %4109
      %4111 = vrot.lane.b32.xlu0 %v3997, 32
      %v4112 = vpop.permute.xlu0 %4111
      %4113 = vrot.lane.b32.xlu0 %v3998, 32
      %v4114 = vpop.permute.xlu0 %4113
      %4115 = vrot.lane.b32.xlu0 %v3999, 32
      %v4116 = vpop.permute.xlu0 %4115
      %4117 = vrot.lane.b32.xlu0 %v4000, 32
      %v4118 = vpop.permute.xlu0 %4117
      %4119 = vrot.lane.b32.xlu0 %v4001, 32
      %v4120 = vpop.permute.xlu0 %4119
      %4121 = vrot.lane.b32.xlu0 %v4002, 32
      %v4122 = vpop.permute.xlu0 %4121
      %4123 = vrot.lane.b32.xlu0 %v4003, 32
      %v4124 = vpop.permute.xlu0 %4123
      %4125 = vrot.lane.b32.xlu0 %v4004, 32
      %v4126 = vpop.permute.xlu0 %4125
      %4127 = vrot.lane.b32.xlu0 %v4005, 32
      %v4128 = vpop.permute.xlu0 %4127
      %4129 = vrot.lane.b32.xlu0 %v4006, 32
      %v4130 = vpop.permute.xlu0 %4129
      %4131 = vrot.lane.b32.xlu0 %v4007, 32
      %v4132 = vpop.permute.xlu0 %4131
      %4133 = vrot.lane.b32.xlu0 %v4008, 32
      %v4134 = vpop.permute.xlu0 %4133
      %4135 = vrot.lane.b32.xlu0 %v4009, 32
      %v4136 = vpop.permute.xlu0 %4135
      %4137 = vrot.lane.b32.xlu0 %v4010, 32
      %v4138 = vpop.permute.xlu0 %4137
      %4139 = vrot.lane.b32.xlu0 %v4011, 32
      %v4140 = vpop.permute.xlu0 %4139
      %4141 = vrot.lane.b32.xlu0 %v4012, 32
      %v4142 = vpop.permute.xlu0 %4141
      %4143 = vrot.lane.b32.xlu0 %v4013, 32
      %v4144 = vpop.permute.xlu0 %4143
      %4145 = vrot.lane.b32.xlu0 %v4014, 32
      %v4146 = vpop.permute.xlu0 %4145
      %4147 = vrot.lane.b32.xlu0 %v4015, 32
      %v4148 = vpop.permute.xlu0 %4147
      %4149 = vrot.lane.b32.xlu0 %v4016, 32
      %v4150 = vpop.permute.xlu0 %4149
      %4151 = vrot.lane.b32.xlu0 %v4017, 32
      %v4152 = vpop.permute.xlu0 %4151
      %4153 = vrot.lane.b32.xlu0 %v4018, 32
      %v4154 = vpop.permute.xlu0 %4153
      %4155 = vrot.lane.b32.xlu0 %v4019, 32
      %v4156 = vpop.permute.xlu0 %4155
      %4157 = vrot.lane.b32.xlu0 %v4020, 32
      %v4158 = vpop.permute.xlu0 %4157
      %4159 = vrot.lane.b32.xlu0 %v4021, 32
      %v4160 = vpop.permute.xlu0 %4159
      %4161 = vrot.lane.b32.xlu0 %v4022, 32
      %v4162 = vpop.permute.xlu0 %4161
      %4163 = vrot.lane.b32.xlu0 %v4023, 32
      %v4164 = vpop.permute.xlu0 %4163
      %4165 = vrot.lane.b32.xlu0 %v4024, 32
      %v4166 = vpop.permute.xlu0 %4165
      %4167 = vrot.lane.b32.xlu0 %v4025, 32
      %v4168 = vpop.permute.xlu0 %4167
      %4169 = vrot.lane.b32.xlu0 %v4026, 32
      %v4170 = vpop.permute.xlu0 %4169
      %v4219 = vadd.f32 %v3739, %v4076
      %v4220 = vadd.f32 %v3740, %v4078
      %v4221 = vadd.f32 %v3741, %v4080
      %v4222 = vadd.f32 %v3742, %v4082
      %v4223 = vadd.f32 %v3743, %v4084
      %v4224 = vadd.f32 %v3744, %v4086
      %v4225 = vadd.f32 %v3745, %v4088
      %v4226 = vadd.f32 %v3746, %v4090
      %v4227 = vadd.f32 %v3747, %v4092
      %v4228 = vadd.f32 %v3748, %v4094
      %v4229 = vadd.f32 %v3749, %v4096
      %v4230 = vadd.f32 %v3750, %v4098
      %v4231 = vadd.f32 %v3751, %v4100
      %v4232 = vadd.f32 %v3752, %v4102
      %v4233 = vadd.f32 %v3753, %v4104
      %v4234 = vadd.f32 %v3754, %v4106
      %v4235 = vadd.f32 %v3755, %v4108
      %v4236 = vadd.f32 %v3756, %v4110
      %v4237 = vadd.f32 %v3757, %v4112
      %v4238 = vadd.f32 %v3758, %v4114
      %v4239 = vadd.f32 %v3759, %v4116
      %v4240 = vadd.f32 %v3760, %v4118
      %v4241 = vadd.f32 %v3761, %v4120
      %v4242 = vadd.f32 %v3762, %v4122
      %v4243 = vadd.f32 %v3763, %v4124
      %v4244 = vadd.f32 %v3764, %v4126
      %v4245 = vadd.f32 %v3765, %v4128
      %v4246 = vadd.f32 %v3766, %v4130
      %v4247 = vadd.f32 %v3767, %v4132
      %v4248 = vadd.f32 %v3768, %v4134
      %v4249 = vadd.f32 %v3769, %v4136
      %v4250 = vadd.f32 %v3770, %v4138
      %v4251 = vadd.f32 %v3771, %v4140
      %v4252 = vadd.f32 %v3772, %v4142
      %v4253 = vadd.f32 %v3773, %v4144
      %v4254 = vadd.f32 %v3774, %v4146
      %v4255 = vadd.f32 %v3775, %v4148
      %v4256 = vadd.f32 %v3776, %v4150
      %v4257 = vadd.f32 %v3777, %v4152
      %v4258 = vadd.f32 %v3778, %v4154
      %v4259 = vadd.f32 %v3779, %v4156
      %v4260 = vadd.f32 %v3780, %v4158
      %v4261 = vadd.f32 %v3781, %v4160
      %v4262 = vadd.f32 %v3782, %v4162
      %v4263 = vadd.f32 %v3783, %v4164
      %v4264 = vadd.f32 %v3784, %v4166
      %v4265 = vadd.f32 %v3785, %v4168
      %v4266 = vadd.f32 %v3786, %v4170
      %v4267 = vtanh.pop %v4219
      %v4268 = vtanh.pop %v4220
      %v4269 = vtanh.pop %v4221
      %v4270 = vtanh.pop %v4222
      %v4271 = vtanh.pop %v4223
      %v4272 = vtanh.pop %v4224
      %v4273 = vtanh.pop %v4225
      %v4274 = vtanh.pop %v4226
      %v4275 = vtanh.pop %v4227
      %v4276 = vtanh.pop %v4228
      %v4277 = vtanh.pop %v4229
      %v4278 = vtanh.pop %v4230
      %v4279 = vtanh.pop %v4231
      %v4280 = vtanh.pop %v4232
      %v4281 = vtanh.pop %v4233
      %v4282 = vtanh.pop %v4234
      %v4283 = vtanh.pop %v4235
      %v4284 = vtanh.pop %v4236
      %v4285 = vtanh.pop %v4237
      %v4286 = vtanh.pop %v4238
      %v4287 = vtanh.pop %v4239
      %v4288 = vtanh.pop %v4240
      %v4289 = vtanh.pop %v4241
      %v4290 = vtanh.pop %v4242
      %v4291 = vtanh.pop %v4243
      %v4292 = vtanh.pop %v4244
      %v4293 = vtanh.pop %v4245
      %v4294 = vtanh.pop %v4246
      %v4295 = vtanh.pop %v4247
      %v4296 = vtanh.pop %v4248
      %v4297 = vtanh.pop %v4249
      %v4298 = vtanh.pop %v4250
      %v4299 = vtanh.pop %v4251
      %v4300 = vtanh.pop %v4252
      %v4301 = vtanh.pop %v4253
      %v4302 = vtanh.pop %v4254
      %v4303 = vtanh.pop %v4255
      %v4304 = vtanh.pop %v4256
      %v4305 = vtanh.pop %v4257
      %v4306 = vtanh.pop %v4258
      %v4307 = vtanh.pop %v4259
      %v4308 = vtanh.pop %v4260
      %v4309 = vtanh.pop %v4261
      %v4310 = vtanh.pop %v4262
      %v4311 = vtanh.pop %v4263
      %v4312 = vtanh.pop %v4264
      %v4313 = vtanh.pop %v4265
      %v4314 = vtanh.pop %v4266
      %4363 = vrot.lane.b32.xlu0 %v4267, 64
      %v4364 = vpop.permute.xlu0 %4363
      %4365 = vrot.lane.b32.xlu0 %v4268, 64
      %v4366 = vpop.permute.xlu0 %4365
      %4367 = vrot.lane.b32.xlu0 %v4269, 64
      %v4368 = vpop.permute.xlu0 %4367
      %4369 = vrot.lane.b32.xlu0 %v4270, 64
      %v4370 = vpop.permute.xlu0 %4369
      %4371 = vrot.lane.b32.xlu0 %v4271, 64
      %v4372 = vpop.permute.xlu0 %4371
      %4373 = vrot.lane.b32.xlu0 %v4272, 64
      %v4374 = vpop.permute.xlu0 %4373
      %4375 = vrot.lane.b32.xlu0 %v4273, 64
      %v4376 = vpop.permute.xlu0 %4375
      %4377 = vrot.lane.b32.xlu0 %v4274, 64
      %v4378 = vpop.permute.xlu0 %4377
      %4379 = vrot.lane.b32.xlu0 %v4275, 64
      %v4380 = vpop.permute.xlu0 %4379
      %4381 = vrot.lane.b32.xlu0 %v4276, 64
      %v4382 = vpop.permute.xlu0 %4381
      %4383 = vrot.lane.b32.xlu0 %v4277, 64
      %v4384 = vpop.permute.xlu0 %4383
      %4385 = vrot.lane.b32.xlu0 %v4278, 64
      %v4386 = vpop.permute.xlu0 %4385
      %4387 = vrot.lane.b32.xlu0 %v4279, 64
      %v4388 = vpop.permute.xlu0 %4387
      %4389 = vrot.lane.b32.xlu0 %v4280, 64
      %v4390 = vpop.permute.xlu0 %4389
      %4391 = vrot.lane.b32.xlu0 %v4281, 64
      %v4392 = vpop.permute.xlu0 %4391
      %4393 = vrot.lane.b32.xlu0 %v4282, 64
      %v4394 = vpop.permute.xlu0 %4393
      %4395 = vrot.lane.b32.xlu0 %v4283, 64
      %v4396 = vpop.permute.xlu0 %4395
      %4397 = vrot.lane.b32.xlu0 %v4284, 64
      %v4398 = vpop.permute.xlu0 %4397
      %4399 = vrot.lane.b32.xlu0 %v4285, 64
      %v4400 = vpop.permute.xlu0 %4399
      %4401 = vrot.lane.b32.xlu0 %v4286, 64
      %v4402 = vpop.permute.xlu0 %4401
      %4403 = vrot.lane.b32.xlu0 %v4287, 64
      %v4404 = vpop.permute.xlu0 %4403
      %4405 = vrot.lane.b32.xlu0 %v4288, 64
      %v4406 = vpop.permute.xlu0 %4405
      %4407 = vrot.lane.b32.xlu0 %v4289, 64
      %v4408 = vpop.permute.xlu0 %4407
      %4409 = vrot.lane.b32.xlu0 %v4290, 64
      %v4410 = vpop.permute.xlu0 %4409
      %4411 = vrot.lane.b32.xlu0 %v4291, 64
      %v4412 = vpop.permute.xlu0 %4411
      %4413 = vrot.lane.b32.xlu0 %v4292, 64
      %v4414 = vpop.permute.xlu0 %4413
      %4415 = vrot.lane.b32.xlu0 %v4293, 64
      %v4416 = vpop.permute.xlu0 %4415
      %4417 = vrot.lane.b32.xlu0 %v4294, 64
      %v4418 = vpop.permute.xlu0 %4417
      %4419 = vrot.lane.b32.xlu0 %v4295, 64
      %v4420 = vpop.permute.xlu0 %4419
      %4421 = vrot.lane.b32.xlu0 %v4296, 64
      %v4422 = vpop.permute.xlu0 %4421
      %4423 = vrot.lane.b32.xlu0 %v4297, 64
      %v4424 = vpop.permute.xlu0 %4423
      %4425 = vrot.lane.b32.xlu0 %v4298, 64
      %v4426 = vpop.permute.xlu0 %4425
      %4427 = vrot.lane.b32.xlu0 %v4299, 64
      %v4428 = vpop.permute.xlu0 %4427
      %4429 = vrot.lane.b32.xlu0 %v4300, 64
      %v4430 = vpop.permute.xlu0 %4429
      %4431 = vrot.lane.b32.xlu0 %v4301, 64
      %v4432 = vpop.permute.xlu0 %4431
      %4433 = vrot.lane.b32.xlu0 %v4302, 64
      %v4434 = vpop.permute.xlu0 %4433
      %4435 = vrot.lane.b32.xlu0 %v4303, 64
      %v4436 = vpop.permute.xlu0 %4435
      %4437 = vrot.lane.b32.xlu0 %v4304, 64
      %v4438 = vpop.permute.xlu0 %4437
      %4439 = vrot.lane.b32.xlu0 %v4305, 64
      %v4440 = vpop.permute.xlu0 %4439
      %4441 = vrot.lane.b32.xlu0 %v4306, 64
      %v4442 = vpop.permute.xlu0 %4441
      %4443 = vrot.lane.b32.xlu0 %v4307, 64
      %v4444 = vpop.permute.xlu0 %4443
      %4445 = vrot.lane.b32.xlu0 %v4308, 64
      %v4446 = vpop.permute.xlu0 %4445
      %4447 = vrot.lane.b32.xlu0 %v4309, 64
      %v4448 = vpop.permute.xlu0 %4447
      %4449 = vrot.lane.b32.xlu0 %v4310, 64
      %v4450 = vpop.permute.xlu0 %4449
      %4451 = vrot.lane.b32.xlu0 %v4311, 64
      %v4452 = vpop.permute.xlu0 %4451
      %4453 = vrot.lane.b32.xlu0 %v4312, 64
      %v4454 = vpop.permute.xlu0 %4453
      %4455 = vrot.lane.b32.xlu0 %v4313, 64
      %v4456 = vpop.permute.xlu0 %4455
      %4457 = vrot.lane.b32.xlu0 %v4314, 64
      %v4458 = vpop.permute.xlu0 %4457
      %v4507 = vmul.f32 %v2745, %v4364
      %v4508 = vmul.f32 %v2760, %v4366
      %v4509 = vmul.f32 %v2775, %v4368
      %v4510 = vmul.f32 %v2790, %v4370
      %v4511 = vmul.f32 %v2805, %v4372
      %v4512 = vmul.f32 %v2820, %v4374
      %v4513 = vmul.f32 %v2835, %v4376
      %v4514 = vmul.f32 %v2850, %v4378
      %v4515 = vmul.f32 %v2865, %v4380
      %v4516 = vmul.f32 %v2880, %v4382
      %v4517 = vmul.f32 %v2895, %v4384
      %v4518 = vmul.f32 %v2910, %v4386
      %v4519 = vmul.f32 %v2925, %v4388
      %v4520 = vmul.f32 %v2940, %v4390
      %v4521 = vmul.f32 %v2955, %v4392
      %v4522 = vmul.f32 %v2970, %v4394
      %v4523 = vmul.f32 %v2985, %v4396
      %v4524 = vmul.f32 %v3000, %v4398
      %v4525 = vmul.f32 %v3015, %v4400
      %v4526 = vmul.f32 %v3030, %v4402
      %v4527 = vmul.f32 %v3045, %v4404
      %v4528 = vmul.f32 %v3060, %v4406
      %v4529 = vmul.f32 %v3075, %v4408
      %v4530 = vmul.f32 %v3090, %v4410
      %v4531 = vmul.f32 %v3105, %v4412
      %v4532 = vmul.f32 %v3120, %v4414
      %v4533 = vmul.f32 %v3135, %v4416
      %v4534 = vmul.f32 %v3150, %v4418
      %v4535 = vmul.f32 %v3165, %v4420
      %v4536 = vmul.f32 %v3180, %v4422
      %v4537 = vmul.f32 %v3195, %v4424
      %v4538 = vmul.f32 %v3210, %v4426
      %v4539 = vmul.f32 %v3225, %v4428
      %v4540 = vmul.f32 %v3240, %v4430
      %v4541 = vmul.f32 %v3255, %v4432
      %v4542 = vmul.f32 %v3270, %v4434
      %v4543 = vmul.f32 %v3285, %v4436
      %v4544 = vmul.f32 %v3300, %v4438
      %v4545 = vmul.f32 %v3315, %v4440
      %v4546 = vmul.f32 %v3330, %v4442
      %v4547 = vmul.f32 %v3345, %v4444
      %v4548 = vmul.f32 %v3360, %v4446
      %v4549 = vmul.f32 %v3375, %v4448
      %v4550 = vmul.f32 %v3390, %v4450
      %v4551 = vmul.f32 %v3405, %v4452
      %v4552 = vmul.f32 %v3420, %v4454
      %v4553 = vmul.f32 %v3435, %v4456
      %v4554 = vmul.f32 %v3450, %v4458
      %4603 = vrot.lane.b32.xlu0 %v4507, 32
      %v4604 = vpop.permute.xlu0 %4603
      %4605 = vrot.lane.b32.xlu0 %v4508, 32
      %v4606 = vpop.permute.xlu0 %4605
      %4607 = vrot.lane.b32.xlu0 %v4509, 32
      %v4608 = vpop.permute.xlu0 %4607
      %4609 = vrot.lane.b32.xlu0 %v4510, 32
      %v4610 = vpop.permute.xlu0 %4609
      %4611 = vrot.lane.b32.xlu0 %v4511, 32
      %v4612 = vpop.permute.xlu0 %4611
      %4613 = vrot.lane.b32.xlu0 %v4512, 32
      %v4614 = vpop.permute.xlu0 %4613
      %4615 = vrot.lane.b32.xlu0 %v4513, 32
      %v4616 = vpop.permute.xlu0 %4615
      %4617 = vrot.lane.b32.xlu0 %v4514, 32
      %v4618 = vpop.permute.xlu0 %4617
      %4619 = vrot.lane.b32.xlu0 %v4515, 32
      %v4620 = vpop.permute.xlu0 %4619
      %4621 = vrot.lane.b32.xlu0 %v4516, 32
      %v4622 = vpop.permute.xlu0 %4621
      %4623 = vrot.lane.b32.xlu0 %v4517, 32
      %v4624 = vpop.permute.xlu0 %4623
      %4625 = vrot.lane.b32.xlu0 %v4518, 32
      %v4626 = vpop.permute.xlu0 %4625
      %4627 = vrot.lane.b32.xlu0 %v4519, 32
      %v4628 = vpop.permute.xlu0 %4627
      %4629 = vrot.lane.b32.xlu0 %v4520, 32
      %v4630 = vpop.permute.xlu0 %4629
      %4631 = vrot.lane.b32.xlu0 %v4521, 32
      %v4632 = vpop.permute.xlu0 %4631
      %4633 = vrot.lane.b32.xlu0 %v4522, 32
      %v4634 = vpop.permute.xlu0 %4633
      %4635 = vrot.lane.b32.xlu0 %v4523, 32
      %v4636 = vpop.permute.xlu0 %4635
      %4637 = vrot.lane.b32.xlu0 %v4524, 32
      %v4638 = vpop.permute.xlu0 %4637
      %4639 = vrot.lane.b32.xlu0 %v4525, 32
      %v4640 = vpop.permute.xlu0 %4639
      %4641 = vrot.lane.b32.xlu0 %v4526, 32
      %v4642 = vpop.permute.xlu0 %4641
      %4643 = vrot.lane.b32.xlu0 %v4527, 32
      %v4644 = vpop.permute.xlu0 %4643
      %4645 = vrot.lane.b32.xlu0 %v4528, 32
      %v4646 = vpop.permute.xlu0 %4645
      %4647 = vrot.lane.b32.xlu0 %v4529, 32
      %v4648 = vpop.permute.xlu0 %4647
      %4649 = vrot.lane.b32.xlu0 %v4530, 32
      %v4650 = vpop.permute.xlu0 %4649
      %4651 = vrot.lane.b32.xlu0 %v4531, 32
      %v4652 = vpop.permute.xlu0 %4651
      %4653 = vrot.lane.b32.xlu0 %v4532, 32
      %v4654 = vpop.permute.xlu0 %4653
      %4655 = vrot.lane.b32.xlu0 %v4533, 32
      %v4656 = vpop.permute.xlu0 %4655
      %4657 = vrot.lane.b32.xlu0 %v4534, 32
      %v4658 = vpop.permute.xlu0 %4657
      %4659 = vrot.lane.b32.xlu0 %v4535, 32
      %v4660 = vpop.permute.xlu0 %4659
      %4661 = vrot.lane.b32.xlu0 %v4536, 32
      %v4662 = vpop.permute.xlu0 %4661
      %4663 = vrot.lane.b32.xlu0 %v4537, 32
      %v4664 = vpop.permute.xlu0 %4663
      %4665 = vrot.lane.b32.xlu0 %v4538, 32
      %v4666 = vpop.permute.xlu0 %4665
      %4667 = vrot.lane.b32.xlu0 %v4539, 32
      %v4668 = vpop.permute.xlu0 %4667
      %4669 = vrot.lane.b32.xlu0 %v4540, 32
      %v4670 = vpop.permute.xlu0 %4669
      %4671 = vrot.lane.b32.xlu0 %v4541, 32
      %v4672 = vpop.permute.xlu0 %4671
      %4673 = vrot.lane.b32.xlu0 %v4542, 32
      %v4674 = vpop.permute.xlu0 %4673
      %4675 = vrot.lane.b32.xlu0 %v4543, 32
      %v4676 = vpop.permute.xlu0 %4675
      %4677 = vrot.lane.b32.xlu0 %v4544, 32
      %v4678 = vpop.permute.xlu0 %4677
      %4679 = vrot.lane.b32.xlu0 %v4545, 32
      %v4680 = vpop.permute.xlu0 %4679
      %4681 = vrot.lane.b32.xlu0 %v4546, 32
      %v4682 = vpop.permute.xlu0 %4681
      %4683 = vrot.lane.b32.xlu0 %v4547, 32
      %v4684 = vpop.permute.xlu0 %4683
      %4685 = vrot.lane.b32.xlu0 %v4548, 32
      %v4686 = vpop.permute.xlu0 %4685
      %4687 = vrot.lane.b32.xlu0 %v4549, 32
      %v4688 = vpop.permute.xlu0 %4687
      %4689 = vrot.lane.b32.xlu0 %v4550, 32
      %v4690 = vpop.permute.xlu0 %4689
      %4691 = vrot.lane.b32.xlu0 %v4551, 32
      %v4692 = vpop.permute.xlu0 %4691
      %4693 = vrot.lane.b32.xlu0 %v4552, 32
      %v4694 = vpop.permute.xlu0 %4693
      %4695 = vrot.lane.b32.xlu0 %v4553, 32
      %v4696 = vpop.permute.xlu0 %4695
      %4697 = vrot.lane.b32.xlu0 %v4554, 32
      %v4698 = vpop.permute.xlu0 %4697
      %vm4747 = vcmask 261120
      %4748 = vst.msk [vmem:[%s283] sm:$0xff] %vm4747, %v4604
      %4749 = vst.msk [vmem:[%s283 + $0x8] sm:$0xff] %vm4747, %v4606
      %4750 = vst.msk [vmem:[%s283 + $0x10] sm:$0xff] %vm4747, %v4608
      %4751 = vst.msk [vmem:[%s283 + $0x18] sm:$0xff] %vm4747, %v4610
      %4752 = vst.msk [vmem:[%s283 + $0x20] sm:$0xff] %vm4747, %v4612
      %4753 = vst.msk [vmem:[%s283 + $0x28] sm:$0xff] %vm4747, %v4614
      %4754 = vst.msk [vmem:[%s283 + $0x30] sm:$0xff] %vm4747, %v4616
      %4755 = vst.msk [vmem:[%s283 + $0x38] sm:$0xff] %vm4747, %v4618
      %4756 = vst.msk [vmem:[%s283 + $0x40] sm:$0xff] %vm4747, %v4620
      %4757 = vst.msk [vmem:[%s283 + $0x48] sm:$0xff] %vm4747, %v4622
      %4758 = vst.msk [vmem:[%s283 + $0x50] sm:$0xff] %vm4747, %v4624
      %4759 = vst.msk [vmem:[%s283 + $0x58] sm:$0xff] %vm4747, %v4626
      %4760 = vst.msk [vmem:[%s283 + $0x60] sm:$0xff] %vm4747, %v4628
      %4761 = vst.msk [vmem:[%s283 + $0x68] sm:$0xff] %vm4747, %v4630
      %4762 = vst.msk [vmem:[%s283 + $0x70] sm:$0xff] %vm4747, %v4632
      %4763 = vst.msk [vmem:[%s283 + $0x78] sm:$0xff] %vm4747, %v4634
      %4764 = vst.msk [vmem:[%s283 + $0x80] sm:$0xff] %vm4747, %v4636
      %4765 = vst.msk [vmem:[%s283 + $0x88] sm:$0xff] %vm4747, %v4638
      %4766 = vst.msk [vmem:[%s283 + $0x90] sm:$0xff] %vm4747, %v4640
      %4767 = vst.msk [vmem:[%s283 + $0x98] sm:$0xff] %vm4747, %v4642
      %4768 = vst.msk [vmem:[%s283 + $0xa0] sm:$0xff] %vm4747, %v4644
      %4769 = vst.msk [vmem:[%s283 + $0xa8] sm:$0xff] %vm4747, %v4646
      %4770 = vst.msk [vmem:[%s283 + $0xb0] sm:$0xff] %vm4747, %v4648
      %4771 = vst.msk [vmem:[%s283 + $0xb8] sm:$0xff] %vm4747, %v4650
      %4772 = vst.msk [vmem:[%s283 + $0xc0] sm:$0xff] %vm4747, %v4652
      %4773 = vst.msk [vmem:[%s283 + $0xc8] sm:$0xff] %vm4747, %v4654
      %4774 = vst.msk [vmem:[%s283 + $0xd0] sm:$0xff] %vm4747, %v4656
      %4775 = vst.msk [vmem:[%s283 + $0xd8] sm:$0xff] %vm4747, %v4658
      %4776 = vst.msk [vmem:[%s283 + $0xe0] sm:$0xff] %vm4747, %v4660
      %4777 = vst.msk [vmem:[%s283 + $0xe8] sm:$0xff] %vm4747, %v4662
      %4778 = vst.msk [vmem:[%s283 + $0xf0] sm:$0xff] %vm4747, %v4664
      %4779 = vst.msk [vmem:[%s283 + $0xf8] sm:$0xff] %vm4747, %v4666
      %4780 = vst.msk [vmem:[%s283 + $0x100] sm:$0xff] %vm4747, %v4668
      %4781 = vst.msk [vmem:[%s283 + $0x108] sm:$0xff] %vm4747, %v4670
      %4782 = vst.msk [vmem:[%s283 + $0x110] sm:$0xff] %vm4747, %v4672
      %4783 = vst.msk [vmem:[%s283 + $0x118] sm:$0xff] %vm4747, %v4674
      %4784 = vst.msk [vmem:[%s283 + $0x120] sm:$0xff] %vm4747, %v4676
      %4785 = vst.msk [vmem:[%s283 + $0x128] sm:$0xff] %vm4747, %v4678
      %4786 = vst.msk [vmem:[%s283 + $0x130] sm:$0xff] %vm4747, %v4680
      %4787 = vst.msk [vmem:[%s283 + $0x138] sm:$0xff] %vm4747, %v4682
      %4788 = vst.msk [vmem:[%s283 + $0x140] sm:$0xff] %vm4747, %v4684
      %4789 = vst.msk [vmem:[%s283 + $0x148] sm:$0xff] %vm4747, %v4686
      %4790 = vst.msk [vmem:[%s283 + $0x150] sm:$0xff] %vm4747, %v4688
      %4791 = vst.msk [vmem:[%s283 + $0x158] sm:$0xff] %vm4747, %v4690
      %4792 = vst.msk [vmem:[%s283 + $0x160] sm:$0xff] %vm4747, %v4692
      %4793 = vst.msk [vmem:[%s283 + $0x168] sm:$0xff] %vm4747, %v4694
      %4794 = vst.msk [vmem:[%s283 + $0x170] sm:$0xff] %vm4747, %v4696
      %4795 = vst.msk [vmem:[%s283 + $0x178] sm:$0xff] %vm4747, %v4698
      %4844 = vrot.lane.b32.xlu0 %v4219, 96
      %v4845 = vpop.permute.xlu0 %4844
      %4846 = vrot.lane.b32.xlu0 %v4220, 96
      %v4847 = vpop.permute.xlu0 %4846
      %4848 = vrot.lane.b32.xlu0 %v4221, 96
      %v4849 = vpop.permute.xlu0 %4848
      %4850 = vrot.lane.b32.xlu0 %v4222, 96
      %v4851 = vpop.permute.xlu0 %4850
      %4852 = vrot.lane.b32.xlu0 %v4223, 96
      %v4853 = vpop.permute.xlu0 %4852
      %4854 = vrot.lane.b32.xlu0 %v4224, 96
      %v4855 = vpop.permute.xlu0 %4854
      %4856 = vrot.lane.b32.xlu0 %v4225, 96
      %v4857 = vpop.permute.xlu0 %4856
      %4858 = vrot.lane.b32.xlu0 %v4226, 96
      %v4859 = vpop.permute.xlu0 %4858
      %4860 = vrot.lane.b32.xlu0 %v4227, 96
      %v4861 = vpop.permute.xlu0 %4860
      %4862 = vrot.lane.b32.xlu0 %v4228, 96
      %v4863 = vpop.permute.xlu0 %4862
      %4864 = vrot.lane.b32.xlu0 %v4229, 96
      %v4865 = vpop.permute.xlu0 %4864
      %4866 = vrot.lane.b32.xlu0 %v4230, 96
      %v4867 = vpop.permute.xlu0 %4866
      %4868 = vrot.lane.b32.xlu0 %v4231, 96
      %v4869 = vpop.permute.xlu0 %4868
      %4870 = vrot.lane.b32.xlu0 %v4232, 96
      %v4871 = vpop.permute.xlu0 %4870
      %4872 = vrot.lane.b32.xlu0 %v4233, 96
      %v4873 = vpop.permute.xlu0 %4872
      %4874 = vrot.lane.b32.xlu0 %v4234, 96
      %v4875 = vpop.permute.xlu0 %4874
      %4876 = vrot.lane.b32.xlu0 %v4235, 96
      %v4877 = vpop.permute.xlu0 %4876
      %4878 = vrot.lane.b32.xlu0 %v4236, 96
      %v4879 = vpop.permute.xlu0 %4878
      %4880 = vrot.lane.b32.xlu0 %v4237, 96
      %v4881 = vpop.permute.xlu0 %4880
      %4882 = vrot.lane.b32.xlu0 %v4238, 96
      %v4883 = vpop.permute.xlu0 %4882
      %4884 = vrot.lane.b32.xlu0 %v4239, 96
      %v4885 = vpop.permute.xlu0 %4884
      %4886 = vrot.lane.b32.xlu0 %v4240, 96
      %v4887 = vpop.permute.xlu0 %4886
      %4888 = vrot.lane.b32.xlu0 %v4241, 96
      %v4889 = vpop.permute.xlu0 %4888
      %4890 = vrot.lane.b32.xlu0 %v4242, 96
      %v4891 = vpop.permute.xlu0 %4890
      %4892 = vrot.lane.b32.xlu0 %v4243, 96
      %v4893 = vpop.permute.xlu0 %4892
      %4894 = vrot.lane.b32.xlu0 %v4244, 96
      %v4895 = vpop.permute.xlu0 %4894
      %4896 = vrot.lane.b32.xlu0 %v4245, 96
      %v4897 = vpop.permute.xlu0 %4896
      %4898 = vrot.lane.b32.xlu0 %v4246, 96
      %v4899 = vpop.permute.xlu0 %4898
      %4900 = vrot.lane.b32.xlu0 %v4247, 96
      %v4901 = vpop.permute.xlu0 %4900
      %4902 = vrot.lane.b32.xlu0 %v4248, 96
      %v4903 = vpop.permute.xlu0 %4902
      %4904 = vrot.lane.b32.xlu0 %v4249, 96
      %v4905 = vpop.permute.xlu0 %4904
      %4906 = vrot.lane.b32.xlu0 %v4250, 96
      %v4907 = vpop.permute.xlu0 %4906
      %4908 = vrot.lane.b32.xlu0 %v4251, 96
      %v4909 = vpop.permute.xlu0 %4908
      %4910 = vrot.lane.b32.xlu0 %v4252, 96
      %v4911 = vpop.permute.xlu0 %4910
      %4912 = vrot.lane.b32.xlu0 %v4253, 96
      %v4913 = vpop.permute.xlu0 %4912
      %4914 = vrot.lane.b32.xlu0 %v4254, 96
      %v4915 = vpop.permute.xlu0 %4914
      %4916 = vrot.lane.b32.xlu0 %v4255, 96
      %v4917 = vpop.permute.xlu0 %4916
      %4918 = vrot.lane.b32.xlu0 %v4256, 96
      %v4919 = vpop.permute.xlu0 %4918
      %4920 = vrot.lane.b32.xlu0 %v4257, 96
      %v4921 = vpop.permute.xlu0 %4920
      %4922 = vrot.lane.b32.xlu0 %v4258, 96
      %v4923 = vpop.permute.xlu0 %4922
      %4924 = vrot.lane.b32.xlu0 %v4259, 96
      %v4925 = vpop.permute.xlu0 %4924
      %4926 = vrot.lane.b32.xlu0 %v4260, 96
      %v4927 = vpop.permute.xlu0 %4926
      %4928 = vrot.lane.b32.xlu0 %v4261, 96
      %v4929 = vpop.permute.xlu0 %4928
      %4930 = vrot.lane.b32.xlu0 %v4262, 96
      %v4931 = vpop.permute.xlu0 %4930
      %4932 = vrot.lane.b32.xlu0 %v4263, 96
      %v4933 = vpop.permute.xlu0 %4932
      %4934 = vrot.lane.b32.xlu0 %v4264, 96
      %v4935 = vpop.permute.xlu0 %4934
      %4936 = vrot.lane.b32.xlu0 %v4265, 96
      %v4937 = vpop.permute.xlu0 %4936
      %4938 = vrot.lane.b32.xlu0 %v4266, 96
      %v4939 = vpop.permute.xlu0 %4938
      %4988 = vst.msk [vmem:[%s293] sm:$0xff] %vm4747, %v4845
      %4989 = vst.msk [vmem:[%s293 + $0x8] sm:$0xff] %vm4747, %v4847
      %4990 = vst.msk [vmem:[%s293 + $0x10] sm:$0xff] %vm4747, %v4849
      %4991 = vst.msk [vmem:[%s293 + $0x18] sm:$0xff] %vm4747, %v4851
      %4992 = vst.msk [vmem:[%s293 + $0x20] sm:$0xff] %vm4747, %v4853
      %4993 = vst.msk [vmem:[%s293 + $0x28] sm:$0xff] %vm4747, %v4855
      %4994 = vst.msk [vmem:[%s293 + $0x30] sm:$0xff] %vm4747, %v4857
      %4995 = vst.msk [vmem:[%s293 + $0x38] sm:$0xff] %vm4747, %v4859
      %4996 = vst.msk [vmem:[%s293 + $0x40] sm:$0xff] %vm4747, %v4861
      %4997 = vst.msk [vmem:[%s293 + $0x48] sm:$0xff] %vm4747, %v4863
      %4998 = vst.msk [vmem:[%s293 + $0x50] sm:$0xff] %vm4747, %v4865
      %4999 = vst.msk [vmem:[%s293 + $0x58] sm:$0xff] %vm4747, %v4867
      %5000 = vst.msk [vmem:[%s293 + $0x60] sm:$0xff] %vm4747, %v4869
      %5001 = vst.msk [vmem:[%s293 + $0x68] sm:$0xff] %vm4747, %v4871
      %5002 = vst.msk [vmem:[%s293 + $0x70] sm:$0xff] %vm4747, %v4873
      %5003 = vst.msk [vmem:[%s293 + $0x78] sm:$0xff] %vm4747, %v4875
      %5004 = vst.msk [vmem:[%s293 + $0x80] sm:$0xff] %vm4747, %v4877
      %5005 = vst.msk [vmem:[%s293 + $0x88] sm:$0xff] %vm4747, %v4879
      %5006 = vst.msk [vmem:[%s293 + $0x90] sm:$0xff] %vm4747, %v4881
      %5007 = vst.msk [vmem:[%s293 + $0x98] sm:$0xff] %vm4747, %v4883
      %5008 = vst.msk [vmem:[%s293 + $0xa0] sm:$0xff] %vm4747, %v4885
      %5009 = vst.msk [vmem:[%s293 + $0xa8] sm:$0xff] %vm4747, %v4887
      %5010 = vst.msk [vmem:[%s293 + $0xb0] sm:$0xff] %vm4747, %v4889
      %5011 = vst.msk [vmem:[%s293 + $0xb8] sm:$0xff] %vm4747, %v4891
      %5012 = vst.msk [vmem:[%s293 + $0xc0] sm:$0xff] %vm4747, %v4893
      %5013 = vst.msk [vmem:[%s293 + $0xc8] sm:$0xff] %vm4747, %v4895
      %5014 = vst.msk [vmem:[%s293 + $0xd0] sm:$0xff] %vm4747, %v4897
      %5015 = vst.msk [vmem:[%s293 + $0xd8] sm:$0xff] %vm4747, %v4899
      %5016 = vst.msk [vmem:[%s293 + $0xe0] sm:$0xff] %vm4747, %v4901
      %5017 = vst.msk [vmem:[%s293 + $0xe8] sm:$0xff] %vm4747, %v4903
      %5018 = vst.msk [vmem:[%s293 + $0xf0] sm:$0xff] %vm4747, %v4905
      %5019 = vst.msk [vmem:[%s293 + $0xf8] sm:$0xff] %vm4747, %v4907
      %5020 = vst.msk [vmem:[%s293 + $0x100] sm:$0xff] %vm4747, %v4909
      %5021 = vst.msk [vmem:[%s293 + $0x108] sm:$0xff] %vm4747, %v4911
      %5022 = vst.msk [vmem:[%s293 + $0x110] sm:$0xff] %vm4747, %v4913
      %5023 = vst.msk [vmem:[%s293 + $0x118] sm:$0xff] %vm4747, %v4915
      %5024 = vst.msk [vmem:[%s293 + $0x120] sm:$0xff] %vm4747, %v4917
      %5025 = vst.msk [vmem:[%s293 + $0x128] sm:$0xff] %vm4747, %v4919
      %5026 = vst.msk [vmem:[%s293 + $0x130] sm:$0xff] %vm4747, %v4921
      %5027 = vst.msk [vmem:[%s293 + $0x138] sm:$0xff] %vm4747, %v4923
      %5028 = vst.msk [vmem:[%s293 + $0x140] sm:$0xff] %vm4747, %v4925
      %5029 = vst.msk [vmem:[%s293 + $0x148] sm:$0xff] %vm4747, %v4927
      %5030 = vst.msk [vmem:[%s293 + $0x150] sm:$0xff] %vm4747, %v4929
      %5031 = vst.msk [vmem:[%s293 + $0x158] sm:$0xff] %vm4747, %v4931
      %5032 = vst.msk [vmem:[%s293 + $0x160] sm:$0xff] %vm4747, %v4933
      %5033 = vst.msk [vmem:[%s293 + $0x168] sm:$0xff] %vm4747, %v4935
      %5034 = vst.msk [vmem:[%s293 + $0x170] sm:$0xff] %vm4747, %v4937
      %5035 = vst.msk [vmem:[%s293 + $0x178] sm:$0xff] %vm4747, %v4939
      %s5036 = smul.u32 48, %s21
      %p5037 = scmp.lt.s32.totalorder %s20, 1
      %s5038 = scalar_select %p5037, %s20, 1
      %p5039 = scmp.lt.s32.totalorder %s5036, 47
      %s5040 = scalar_select %p5039, %s5036, 47
      %s5041 = smul.addr %s5038, 48
      %s5042 = sadd.s32 %s5040, %s5041
      %s5043 = smul.addr %s5042, 8
      %s5044 = scalar_lea.vmem %s3, %s5043
      %s5045 = smul.u32 48, %s21
      %p5046 = scmp.lt.s32.totalorder %s20, 1
      %s5047 = scalar_select %p5046, %s20, 1
      %p5048 = scmp.lt.s32.totalorder %s5045, 47
      %s5049 = scalar_select %p5048, %s5045, 47
      %s5050 = smul.addr %s5047, 48
      %s5051 = sadd.s32 %s5049, %s5050
      %s5052 = smul.addr %s5051, 8
      %s5053 = scalar_lea.vmem %s4, %s5052
      // Predicated region
      $region33: #{conv_lstm_cell_forward.1} parent=31 // pred_check
        %p5054 = pneg %p125
      $region34: #{conv_lstm_cell_forward.1} parent=31 // pred_check_branch
        %5056 = sbr.rel (%p5054) target = $region36
      $region35: #{conv_lstm_cell_forward.1} parent=31 // pred_region
        %s5057 = smul.u32 48, %s21
      $region36: #{conv_lstm_cell_forward.1} parent=31 // pred_fallthru
        _
      // Predicated region
      $region37: #{conv_lstm_cell_forward.1} parent=31 // pred_check
        %p5058 = pneg %p153
      $region38: #{conv_lstm_cell_forward.1} parent=31 // pred_check_branch
        %5060 = sbr.rel (%p5058) target = $region40
      $region39: #{conv_lstm_cell_forward.1} parent=31 // pred_region
        %s5061 = smul.u32 48, %s21
      $region40: #{conv_lstm_cell_forward.1} parent=31 // pred_fallthru
        _
    $region32: #{conv_lstm_cell_forward.1} parent=5 // pred_fallthru
      _
    %p5062 = scmp.le.s32.totalorder 2, %s11
    // Predicated region
    $region41: #{conv_lstm_cell_forward.1} parent=5 // pred_check
      %p5063 = pneg %p5062
    $region42: #{conv_lstm_cell_forward.1} parent=5 // pred_check_branch
      %5065 = sbr.rel (%p5063) target = $region44
    $region43: #{conv_lstm_cell_forward.1} parent=5 // pred_region
      %s5066 = ssub.s32 %s11, 2
      // Predicated region
      $region45: #{conv_lstm_cell_forward.1} parent=43 // pred_check
        %p5067 = pneg %p131
      $region46: #{conv_lstm_cell_forward.1} parent=43 // pred_check_branch
        %5069 = sbr.rel (%p5067) target = $region48
      $region47: #{conv_lstm_cell_forward.1} parent=43 // pred_region
        %s5070 = smul.u32 48, %s23
        %p5071 = scmp.lt.s32.totalorder %s22, 1
        %s5072 = scalar_select %p5071, %s22, 1
        %p5073 = scmp.lt.s32.totalorder %s5070, 47
        %s5074 = scalar_select %p5073, %s5070, 47
        %s5075 = smul.addr %s5072, 48
        %s5076 = sadd.s32 %s5074, %s5075
        %s5077 = smul.addr %s5076, 8
        %s5078 = scalar_lea.vmem %s3, %s5077
      $region48: #{conv_lstm_cell_forward.1} parent=43 // pred_fallthru
        _
      // Predicated region
      $region49: #{conv_lstm_cell_forward.1} parent=43 // pred_check
        %p5079 = pneg %p159
      $region50: #{conv_lstm_cell_forward.1} parent=43 // pred_check_branch
        %5081 = sbr.rel (%p5079) target = $region52
      $region51: #{conv_lstm_cell_forward.1} parent=43 // pred_region
        %s5082 = smul.u32 48, %s23
        %p5083 = scmp.lt.s32.totalorder %s22, 1
        %s5084 = scalar_select %p5083, %s22, 1
        %p5085 = scmp.lt.s32.totalorder %s5082, 47
        %s5086 = scalar_select %p5085, %s5082, 47
        %s5087 = smul.addr %s5084, 48
        %s5088 = sadd.s32 %s5086, %s5087
        %s5089 = smul.addr %s5088, 8
        %s5090 = scalar_lea.vmem %s4, %s5089
      $region52: #{conv_lstm_cell_forward.1} parent=43 // pred_fallthru
        _
    $region44: #{conv_lstm_cell_forward.1} parent=5 // pred_fallthru
      _
  $region6: #{conv_lstm_cell_forward.1} parent=0 // loop_footer
    %s15 = sadd.s32 1, %s11
  $region7: #{conv_lstm_cell_forward.1} parent=0 // loop_footer_branch
    %10 = sbr.rel target = $region3
  $region8: #{conv_lstm_cell_forward.1} parent=0 // loop_exit
    _

</llo_original>
